<compile_context>
chip_gen: v7x
topology: tpu7x:2x2x1
jax: 0.10.0
libtpu: 0.0.40
codegen_flags: <defaults>
</compile_context>

<pallas_src>
import jax
import jax.numpy as jnp
from jax.experimental import pallas as pl
from jax.experimental.pallas import tpu as pltpu

INPUT_SIZE = 8
LAYER_DIM = 128            # trees per ODST layer (T)
NUM_LAYERS = 2             # densely-connected ODST layers per block
TREE_DIM = 2               # response channels per tree (C)
DEPTH = 6                  # splits per tree (D)
NUM_LEAVES = 2 ** DEPTH    # leaves per tree (L = 64)
NUM_BLOCKS = 5             # dlle, dllk, dllmu, dllp, dllbt

X_PAD = 16                       # x columns padded to one bf16 sublane tile
TREE_FEATS = TREE_DIM * LAYER_DIM   # 256 dense-connection features (ch0 trees | ch1 trees)
DT = DEPTH * LAYER_DIM           # 768 selector output columns (depth-major)
LEAF_CHUNK = 16                  # leaves per chunk = low 4 bits of the leaf index
LO_BITS = 4
B_TILE = 16                      # batch rows per grid step (keeps [B,16,128] f32 in vregs)


# --------------------- plain-JAX glue: exact entmax15 (parameter setup) ---------------------

def entmax15(x, axis):
    """Exact 1.5-entmax (same algorithm as NODE's Entmax15Function). Used only on the
    data-independent feature-selection logits, i.e. parameter preprocessing."""
    x = x - jnp.max(x, axis=axis, keepdims=True)
    x = x / 2.0
    n = x.shape[axis]
    xsrt = -jnp.sort(-x, axis=axis)                             # descending sort
    shape = [1] * x.ndim
    shape[axis] = n
    rho = jnp.arange(1, n + 1, dtype=x.dtype).reshape(shape)
    mean = jnp.cumsum(xsrt, axis=axis) / rho
    mean_sq = jnp.cumsum(xsrt * xsrt, axis=axis) / rho
    ss = rho * (mean_sq - mean * mean)
    delta = jnp.clip((1.0 - ss) / rho, 0.0, None)
    tau = mean - jnp.sqrt(delta)
    support = jnp.sum((tau <= xsrt).astype(jnp.int32), axis=axis, keepdims=True)
    tau_star = jnp.take_along_axis(tau, support - 1, axis=axis)
    return jnp.clip(x - tau_star, 0.0, None) ** 2


# ------------------------------- fused Pallas kernel -------------------------------

def _fused_tree_kernel(x_ref, selx_ref, selt_ref, thr_ref, resp_ref, out_ref, feats_ref):
    #   x_ref     : [B, 16]        raw input features (bf16, zero-padded to 16 cols)
    #   selx_ref  : [16, D*T]      temperature-scaled x-rows of the selector (bf16)
    #   selt_ref  : [256, D*T]     temperature-scaled tree-feature selector rows, layer 1 (bf16)
    #   thr_ref   : [D, T]         temperature-scaled thresholds (f32)
    #   resp_ref  : [C, L, T]      leaf responses, lane-dense (bf16)
    #   out_ref   : [1, B, T]      channel-0 per-tree response, accumulated over layers (f32)
    #   feats_ref : [B, 256] bf16  densely-connected layer output (VMEM scratch)
    ly = pl.program_id(2)
    last_ly = pl.num_programs(2) - 1
    B = x_ref.shape[0]
    D, T = thr_ref.shape

    # ---- layer 0: previous-layer tree features are zero ----
    @pl.when(ly == 0)
    def _():
        feats_ref[...] = jnp.zeros_like(feats_ref)

    # ---- feature selection on the MXU, K split as trees(256) + x(16) ----
    # temperature is folded into sel/thr; at ly==0 feats is zero so the tree dot is exactly 0.
    fv = jnp.dot(x_ref[...], selx_ref[...], preferred_element_type=jnp.float32)      # [B, D*T]
    fv = fv + jnp.dot(feats_ref[...], selt_ref[...], preferred_element_type=jnp.float32)

    # ---- per-depth split probabilities: exact 2-class entmax15 of [-u, u] ----
    thr = thr_ref[...]
    b1s, b0s = [], []
    for d in range(DEPTH):                                     # static unroll, D = 6
        u = fv[:, d * T:(d + 1) * T] - thr[d][None, :]         # [B, T]
        uc = jnp.clip(u, -1.0, 1.0)
        b1 = ((jnp.sqrt(2.0 - uc * uc) + uc) * 0.5) ** 2       # prob of "+u" branch (bit 0)
        b1s.append(b1)
        b0s.append(1.0 - b1)                                   # prob of "-u" branch (bit 1)

    # ---- leaf-weight product over the LOW 4 bits, shared by all leaf chunks: [B, 16, T] ----
    # leaf bit masks are generated in-kernel (no codes input, no lane-1 constant stream).
    leaf_lo = jax.lax.broadcasted_iota(jnp.int32, (1, LEAF_CHUNK, T), 1)
    lo_rw = None
    for d in range(LO_BITS):
        mask = ((leaf_lo >> d) & 1) == 1                                        # [1, 16, T]
        gate = jnp.where(mask, b0s[d][:, None, :], b1s[d][:, None, :])          # [B, 16, T]
        lo_rw = gate if lo_rw is None else lo_rw * gate

    # ---- HIGH-bit (4,5) gates are leaf-uniform within a chunk: cheap [B, T] factors ----
    n_chunks = NUM_LEAVES // LEAF_CHUNK
    his = []
    for k in range(n_chunks):                                  # static unroll, 4 chunks
        g4 = b0s[4] if (k & 1) else b1s[4]
        g5 = b0s[5] if ((k >> 1) & 1) else b1s[5]
        his.append(g4 * g5)                                    # [B, T]

    def channel_response(c):
        acc = jnp.zeros((B, T), jnp.float32)
        for k in range(n_chunks):
            r = resp_ref[c, k * LEAF_CHUNK:(k + 1) * LEAF_CHUNK, :].astype(jnp.float32)  # [16,T]
            part = jnp.sum(lo_rw * r[None, :, :], axis=1)                                # [B, T]
            acc = acc + his[k] * part
        return acc

    out0 = channel_response(0)

    # ---- head: accumulate channel-0 per-tree responses across layers ----
    @pl.when(ly == 0)
    def _():
        out_ref[0] = out0

    @pl.when(ly > 0)
    def _():
        out_ref[0] = out_ref[0] + out0

    # ---- dense connection: channel-1 responses only matter when another layer follows ----
    @pl.when(ly < last_ly)
    def _():
        out1 = channel_response(1)
        feats_ref[:, 0:T] = out0.astype(feats_ref.dtype)
        feats_ref[:, T:2 * T] = out1.astype(feats_ref.dtype)


def _fused_tree_call(x_pad, sel_x, sel_t, thr, resp):
    b_pad = x_pad.shape[0]
    n_bt = b_pad // B_TILE
    return pl.pallas_call(
        _fused_tree_kernel,
        out_shape=jax.ShapeDtypeStruct((NUM_BLOCKS, b_pad, LAYER_DIM), jnp.float32),
        grid=(NUM_BLOCKS, n_bt, NUM_LAYERS),
        in_specs=[
            pl.BlockSpec((B_TILE, X_PAD), lambda bk, bt, ly: (bt, 0)),
            pl.BlockSpec((None, None, X_PAD, DT), lambda bk, bt, ly: (bk, ly, 0, 0)),
            # big tree-feature selector: fetched once per block (index does not move with bt/ly)
            pl.BlockSpec((None, TREE_FEATS, DT), lambda bk, bt, ly: (bk, 0, 0)),
            pl.BlockSpec((None, None, DEPTH, LAYER_DIM), lambda bk, bt, ly: (bk, ly, 0, 0)),
            pl.BlockSpec((None, None, TREE_DIM, NUM_LEAVES, LAYER_DIM),
                         lambda bk, bt, ly: (bk, ly, 0, 0, 0)),
        ],
        out_specs=pl.BlockSpec((1, B_TILE, LAYER_DIM), lambda bk, bt, ly: (bk, bt, 0)),
        scratch_shapes=[pltpu.VMEM((B_TILE, TREE_FEATS), jnp.bfloat16)],
        compiler_params=pltpu.CompilerParams(
            dimension_semantics=("parallel", "parallel", "arbitrary")),
    )(x_pad, sel_x, sel_t, thr, resp)


# ------------------------------- parameters & forward -------------------------------

def init_odst_raw(key, in_features):
    """Raw ODST parameters in the PyTorch layout."""
    k_resp, k_sel, k_thr = jax.random.split(key, 3)
    response = jax.random.normal(k_resp, (LAYER_DIM, TREE_DIM, NUM_LEAVES), jnp.float32)
    sel_logits = jax.random.uniform(k_sel, (in_features, LAYER_DIM, DEPTH), jnp.float32)
    # TODO(synk): ODST initializes thresholds/log_temperatures data-aware (beta-quantile of
    # the first batch); replaced with deterministic synthetic values here.
    thresholds = 0.1 * jax.random.normal(k_thr, (LAYER_DIM, DEPTH), jnp.float32)
    log_temps = jnp.zeros((LAYER_DIM, DEPTH), jnp.float32)
    return dict(response=response, sel_logits=sel_logits,
                thresholds=thresholds, log_temps=log_temps)


def pack_layer(raw):
    """PyTorch-layout ODST params -> fused kernel layout.
    Tree-feature rows (layer 1 only): [0:128) ch-0 trees | [128:256) ch-1 trees (de-interleaved).
    x rows live in a separate [16, D*T] selector (rows 8..15 zero-padded)."""
    f_in = raw['sel_logits'].shape[0]
    selectors = entmax15(raw['sel_logits'], axis=0)                      # [F_in, T, D]
    inv_temp = jnp.exp(-raw['log_temps'])                                # [T, D]
    sel = selectors * inv_temp[None, :, :]                               # fold 1/temperature
    sel = jnp.transpose(sel, (0, 2, 1)).reshape(f_in, DT)                # depth-major columns

    sel_x = jnp.zeros((X_PAD, DT), jnp.float32).at[:INPUT_SIZE].set(sel[:INPUT_SIZE])
    sel_t = None
    if f_in > INPUT_SIZE:
        prev = sel[INPUT_SIZE:].reshape(LAYER_DIM, TREE_DIM, DT)         # (tree, channel) rows
        sel_t = jnp.concatenate([prev[:, 0], prev[:, 1]], axis=0)        # [256, D*T]

    thr_k = jnp.transpose(raw['thresholds'] * inv_temp, (1, 0))          # [D, T], scaled
    resp_k = jnp.transpose(raw['response'], (1, 2, 0))                   # [C, L, T] lane-dense
    return (sel_x.astype(jnp.bfloat16),
            None if sel_t is None else sel_t.astype(jnp.bfloat16),
            thr_k,
            resp_k.astype(jnp.bfloat16))


def build_params(key):
    in_feats = [INPUT_SIZE, INPUT_SIZE + LAYER_DIM * TREE_DIM]           # 8, then 264
    keys = jax.random.split(key, NUM_BLOCKS * NUM_LAYERS)
    sxs, sts, thrs, resps = [], [], [], []
    idx = 0
    for _ in range(NUM_BLOCKS):
        bsx, bth, brs = [], [], []
        bst = None
        for ly in range(NUM_LAYERS):
            sx, st, th, rs = pack_layer(init_odst_raw(keys[idx], in_feats[ly]))
            idx += 1
            bsx.append(sx); bth.append(th); brs.append(rs)
            if st is not None:
                bst = st
        sxs.append(jnp.stack(bsx)); sts.append(bst)
        thrs.append(jnp.stack(bth)); resps.append(jnp.stack(brs))
    return dict(sel_x=jnp.stack(sxs),    # [5, 2, 16, 768]    bf16
                sel_t=jnp.stack(sts),    # [5, 256, 768]      bf16 (layer-1 tree rows)
                thr=jnp.stack(thrs),     # [5, 2, 6, 128]     f32
                resp=jnp.stack(resps))   # [5, 2, 2, 64, 128] bf16


def regression_differential_tree_forward(x, params):
    """x: [B, input_size] -> [B, 5] (one scalar head per tree block)."""
    B = x.shape[0]
    b_pad = ((B + B_TILE - 1) // B_TILE) * B_TILE         # pad batch to a bf16 sublane tile
    xp = jnp.zeros((b_pad, X_PAD), jnp.bfloat16)
    xp = xp.at[:B, :INPUT_SIZE].set(x.astype(jnp.bfloat16))
    acc = _fused_tree_call(xp, params['sel_x'], params['sel_t'],
                           params['thr'], params['resp'])               # [5, b_pad, T]
    # Lambda(x[..., 0].mean(dim=-1)): mean of channel 0 over num_layers * layer_dim trees
    head = jnp.sum(acc, axis=-1) / float(NUM_LAYERS * LAYER_DIM)        # [5, b_pad]
    return jnp.transpose(head)[:B]                                      # [B, 5]


# ------------------------- pure-JAX reference (for tolerance check) -------------------------

def reference_forward(x, params):
    """Direct (unfactored) forward built from the same packed parameters, mirroring the
    kernel's bf16 roundings of x / selectors / responses / dense-connection features."""
    B = x.shape[0]
    xq = jnp.zeros((B, X_PAD), jnp.float32).at[:, :INPUT_SIZE].set(x)
    xq = xq.astype(jnp.bfloat16).astype(jnp.float32)
    sel_x = params['sel_x'].astype(jnp.float32)
    sel_t = params['sel_t'].astype(jnp.float32)
    thr = params['thr']
    resp = params['resp'].astype(jnp.float32)
    bits = ((jnp.arange(NUM_LEAVES)[None, :] // (2 ** jnp.arange(DEPTH))[:, None]) % 2
            ).astype(jnp.float32)                                        # [D, L]
    heads = []
    for bk in range(NUM_BLOCKS):
        feats = jnp.zeros((B, TREE_FEATS), jnp.float32)
        total = jnp.zeros((B, LAYER_DIM), jnp.float32)
        for ly in range(NUM_LAYERS):
            fv = xq @ sel_x[bk, ly] + feats @ sel_t[bk]
            fv = fv.reshape(B, DEPTH, LAYER_DIM)
            uc = jnp.clip(fv - thr[bk, ly][None], -1.0, 1.0)
            b1 = ((jnp.sqrt(2.0 - uc * uc) + uc) * 0.5) ** 2             # [B, D, T]
            gates = (b1[:, :, None, :] * (1.0 - bits)[None, :, :, None]
                     + (1.0 - b1)[:, :, None, :] * bits[None, :, :, None])  # [B, D, L, T]
            rw = jnp.prod(gates, axis=1)                                 # [B, L, T]
            out = jnp.sum(rw[:, None, :, :] * resp[bk, ly][None, :, :, :], axis=2)  # [B, C, T]
            total = total + out[:, 0]
            feats = jnp.concatenate([out[:, 0], out[:, 1]], axis=-1
                                    ).astype(jnp.bfloat16).astype(jnp.float32)
        heads.append(jnp.sum(total, axis=-1) / float(NUM_LAYERS * LAYER_DIM))
    return jnp.stack(heads, axis=1)                                      # [B, 5]


if __name__ == "__main__":
    key = jax.random.PRNGKey(0)
    k_x, k_p = jax.random.split(key)

    batch = 2
    x = jax.random.normal(k_x, (batch, INPUT_SIZE), jnp.float32)
    params = build_params(k_p)

    fwd = jax.jit(regression_differential_tree_forward)
    out = jax.block_until_ready(fwd(x, params))

    assert out.shape == (batch, NUM_BLOCKS), out.shape
    assert bool(jnp.all(jnp.isfinite(out)))

    ref = reference_forward(x, params)
    err = float(jnp.max(jnp.abs(out - ref)))
    assert err < 5e-3, f"max abs diff vs reference: {err}"
    print("KERNEL_OK")
</pallas_src>

<mosaic_0001>
module attributes {stable_mosaic.version = 11 : i64} {
  func.func @_fused_tree_kernel(%arg0: i32, %arg1: i32, %arg2: i32, %arg3: memref<16x16xbf16, #tpu.memory_space<vmem>>, %arg4: memref<1x1x16x768xbf16, #tpu.memory_space<vmem>>, %arg5: memref<1x256x768xbf16, #tpu.memory_space<vmem>>, %arg6: memref<1x1x6x128xf32, #tpu.memory_space<vmem>>, %arg7: memref<1x1x2x64x128xbf16, #tpu.memory_space<vmem>>, %arg8: memref<1x16x128xf32, #tpu.memory_space<vmem>>, %arg9: memref<16x256xbf16, #tpu.memory_space<vmem>>) attributes {dimension_semantics = [#tpu.dimension_semantics<parallel>, #tpu.dimension_semantics<parallel>, #tpu.dimension_semantics<arbitrary>], iteration_bounds = array<i64: 5, 1, 2>, scalar_prefetch = 0 : i64, scratch_operands = 1 : i64, tpu.core_type = #tpu.core_type<tc>, window_params = [{transform_indices = @transform_0, window_bounds = array<i64: 16, 16>}, {transform_indices = @transform_1, window_bounds = array<i64: 1, 1, 16, 768>}, {transform_indices = @transform_2, window_bounds = array<i64: 1, 256, 768>}, {transform_indices = @transform_3, window_bounds = array<i64: 1, 1, 6, 128>}, {transform_indices = @transform_4, window_bounds = array<i64: 1, 1, 2, 64, 128>}, {transform_indices = @transform_5, window_bounds = array<i64: 1, 16, 128>}]} {
    %c0_i32 = arith.constant 0 : i32
    %0 = arith.cmpi eq, %arg2, %c0_i32 : i32
    %1 = arith.extui %0 : i1 to i32
    %c0_i32_0 = arith.constant 0 : i32
    %2 = arith.cmpi ne, %1, %c0_i32_0 : i32
    scf.if %2 {
      %cst_83 = arith.constant 0.000000e+00 : bf16
      %248 = vector.broadcast %cst_83 : bf16 to vector<16x256xbf16>
      %c0_84 = arith.constant 0 : index
      %c0_85 = arith.constant 0 : index
      %249 = vector.load %arg9[%c0_84, %c0_85] : memref<16x256xbf16, #tpu.memory_space<vmem>>, vector<16x256xbf16>
      tpu.vector_store %arg9[%c0_84, %c0_85], %248 {strides = array<i32>} : memref<16x256xbf16, #tpu.memory_space<vmem>>, vector<16x256xbf16>,
    } else {
    }
    %c0 = arith.constant 0 : index
    %c0_1 = arith.constant 0 : index
    %3 = vector.load %arg3[%c0, %c0_1] : memref<16x16xbf16, #tpu.memory_space<vmem>>, vector<16x16xbf16>
    %c0_2 = arith.constant 0 : index
    %c0_3 = arith.constant 0 : index
    %c0_4 = arith.constant 0 : index
    %c0_5 = arith.constant 0 : index
    %4 = vector.load %arg4[%c0_2, %c0_3, %c0_4, %c0_5] : memref<1x1x16x768xbf16, #tpu.memory_space<vmem>>, vector<1x1x16x768xbf16>
    %5 = vector.shape_cast %4 : vector<1x1x16x768xbf16> to vector<16x768xbf16>
    %cst = arith.constant dense<0.000000e+00> : vector<16x768xf32>
    %6 = tpu.matmul %3, %5, %cst {dimension_numbers = #tpu.dot_dimension_numbers<[1], [0], [0], [1], [0, 0, 1, 1], [], []>} : vector<16x16xbf16>, vector<16x768xbf16>, vector<16x768xf32> -> vector<16x768xf32>
    %c0_6 = arith.constant 0 : index
    %c0_7 = arith.constant 0 : index
    %7 = vector.load %arg9[%c0_6, %c0_7] : memref<16x256xbf16, #tpu.memory_space<vmem>>, vector<16x256xbf16>
    %c0_8 = arith.constant 0 : index
    %c0_9 = arith.constant 0 : index
    %c0_10 = arith.constant 0 : index
    %8 = vector.load %arg5[%c0_8, %c0_9, %c0_10] : memref<1x256x768xbf16, #tpu.memory_space<vmem>>, vector<1x256x768xbf16>
    %9 = vector.shape_cast %8 : vector<1x256x768xbf16> to vector<256x768xbf16>
    %cst_11 = arith.constant dense<0.000000e+00> : vector<16x768xf32>
    %10 = tpu.matmul %7, %9, %cst_11 {dimension_numbers = #tpu.dot_dimension_numbers<[1], [0], [0], [1], [0, 0, 1, 1], [], []>} : vector<16x256xbf16>, vector<256x768xbf16>, vector<16x768xf32> -> vector<16x768xf32>
    %11 = arith.addf %6, %10 : vector<16x768xf32>
    %c0_12 = arith.constant 0 : index
    %c0_13 = arith.constant 0 : index
    %c0_14 = arith.constant 0 : index
    %c0_15 = arith.constant 0 : index
    %12 = vector.load %arg6[%c0_12, %c0_13, %c0_14, %c0_15] : memref<1x1x6x128xf32, #tpu.memory_space<vmem>>, vector<1x1x6x128xf32>
    %13 = vector.shape_cast %12 : vector<1x1x6x128xf32> to vector<6x128xf32>
    %14 = vector.extract_strided_slice %11 {offsets = [0, 0], sizes = [16, 128], strides = [1, 1]} : vector<16x768xf32> to vector<16x128xf32>
    %15 = vector.extract_strided_slice %13 {offsets = [0, 0], sizes = [1, 128], strides = [1, 1]} : vector<6x128xf32> to vector<1x128xf32>
    %16 = vector.shape_cast %15 : vector<1x128xf32> to vector<128xf32>
    %17 = vector.shape_cast %16 : vector<128xf32> to vector<1x128xf32>
    %18 = vector.broadcast %17 : vector<1x128xf32> to vector<16x128xf32>
    %19 = arith.subf %14, %18 : vector<16x128xf32>
    %cst_16 = arith.constant -1.000000e+00 : f32
    %cst_17 = arith.constant 1.000000e+00 : f32
    %20 = vector.broadcast %cst_16 : f32 to vector<16x128xf32>
    %21 = arith.maximumf %20, %19 : vector<16x128xf32>
    %22 = vector.broadcast %cst_17 : f32 to vector<16x128xf32>
    %23 = arith.minimumf %22, %21 : vector<16x128xf32>
    %24 = arith.mulf %23, %23 : vector<16x128xf32>
    %cst_18 = arith.constant 2.000000e+00 : f32
    %25 = vector.broadcast %cst_18 : f32 to vector<16x128xf32>
    %26 = arith.subf %25, %24 : vector<16x128xf32>
    %27 = math.sqrt %26 : vector<16x128xf32>
    %28 = arith.addf %27, %23 : vector<16x128xf32>
    %cst_19 = arith.constant 5.000000e-01 : f32
    %29 = vector.broadcast %cst_19 : f32 to vector<16x128xf32>
    %30 = arith.mulf %28, %29 : vector<16x128xf32>
    %31 = arith.mulf %30, %30 : vector<16x128xf32>
    %cst_20 = arith.constant 1.000000e+00 : f32
    %32 = vector.broadcast %cst_20 : f32 to vector<16x128xf32>
    %33 = arith.subf %32, %31 : vector<16x128xf32>
    %34 = vector.extract_strided_slice %11 {offsets = [0, 128], sizes = [16, 128], strides = [1, 1]} : vector<16x768xf32> to vector<16x128xf32>
    %35 = vector.extract_strided_slice %13 {offsets = [1, 0], sizes = [1, 128], strides = [1, 1]} : vector<6x128xf32> to vector<1x128xf32>
    %36 = vector.shape_cast %35 : vector<1x128xf32> to vector<128xf32>
    %37 = vector.shape_cast %36 : vector<128xf32> to vector<1x128xf32>
    %38 = vector.broadcast %37 : vector<1x128xf32> to vector<16x128xf32>
    %39 = arith.subf %34, %38 : vector<16x128xf32>
    %cst_21 = arith.constant -1.000000e+00 : f32
    %cst_22 = arith.constant 1.000000e+00 : f32
    %40 = vector.broadcast %cst_21 : f32 to vector<16x128xf32>
    %41 = arith.maximumf %40, %39 : vector<16x128xf32>
    %42 = vector.broadcast %cst_22 : f32 to vector<16x128xf32>
    %43 = arith.minimumf %42, %41 : vector<16x128xf32>
    %44 = arith.mulf %43, %43 : vector<16x128xf32>
    %cst_23 = arith.constant 2.000000e+00 : f32
    %45 = vector.broadcast %cst_23 : f32 to vector<16x128xf32>
    %46 = arith.subf %45, %44 : vector<16x128xf32>
    %47 = math.sqrt %46 : vector<16x128xf32>
    %48 = arith.addf %47, %43 : vector<16x128xf32>
    %cst_24 = arith.constant 5.000000e-01 : f32
    %49 = vector.broadcast %cst_24 : f32 to vector<16x128xf32>
    %50 = arith.mulf %48, %49 : vector<16x128xf32>
    %51 = arith.mulf %50, %50 : vector<16x128xf32>
    %cst_25 = arith.constant 1.000000e+00 : f32
    %52 = vector.broadcast %cst_25 : f32 to vector<16x128xf32>
    %53 = arith.subf %52, %51 : vector<16x128xf32>
    %54 = vector.extract_strided_slice %11 {offsets = [0, 256], sizes = [16, 128], strides = [1, 1]} : vector<16x768xf32> to vector<16x128xf32>
    %55 = vector.extract_strided_slice %13 {offsets = [2, 0], sizes = [1, 128], strides = [1, 1]} : vector<6x128xf32> to vector<1x128xf32>
    %56 = vector.shape_cast %55 : vector<1x128xf32> to vector<128xf32>
    %57 = vector.shape_cast %56 : vector<128xf32> to vector<1x128xf32>
    %58 = vector.broadcast %57 : vector<1x128xf32> to vector<16x128xf32>
    %59 = arith.subf %54, %58 : vector<16x128xf32>
    %cst_26 = arith.constant -1.000000e+00 : f32
    %cst_27 = arith.constant 1.000000e+00 : f32
    %60 = vector.broadcast %cst_26 : f32 to vector<16x128xf32>
    %61 = arith.maximumf %60, %59 : vector<16x128xf32>
    %62 = vector.broadcast %cst_27 : f32 to vector<16x128xf32>
    %63 = arith.minimumf %62, %61 : vector<16x128xf32>
    %64 = arith.mulf %63, %63 : vector<16x128xf32>
    %cst_28 = arith.constant 2.000000e+00 : f32
    %65 = vector.broadcast %cst_28 : f32 to vector<16x128xf32>
    %66 = arith.subf %65, %64 : vector<16x128xf32>
    %67 = math.sqrt %66 : vector<16x128xf32>
    %68 = arith.addf %67, %63 : vector<16x128xf32>
    %cst_29 = arith.constant 5.000000e-01 : f32
    %69 = vector.broadcast %cst_29 : f32 to vector<16x128xf32>
    %70 = arith.mulf %68, %69 : vector<16x128xf32>
    %71 = arith.mulf %70, %70 : vector<16x128xf32>
    %cst_30 = arith.constant 1.000000e+00 : f32
    %72 = vector.broadcast %cst_30 : f32 to vector<16x128xf32>
    %73 = arith.subf %72, %71 : vector<16x128xf32>
    %74 = vector.extract_strided_slice %11 {offsets = [0, 384], sizes = [16, 128], strides = [1, 1]} : vector<16x768xf32> to vector<16x128xf32>
    %75 = vector.extract_strided_slice %13 {offsets = [3, 0], sizes = [1, 128], strides = [1, 1]} : vector<6x128xf32> to vector<1x128xf32>
    %76 = vector.shape_cast %75 : vector<1x128xf32> to vector<128xf32>
    %77 = vector.shape_cast %76 : vector<128xf32> to vector<1x128xf32>
    %78 = vector.broadcast %77 : vector<1x128xf32> to vector<16x128xf32>
    %79 = arith.subf %74, %78 : vector<16x128xf32>
    %cst_31 = arith.constant -1.000000e+00 : f32
    %cst_32 = arith.constant 1.000000e+00 : f32
    %80 = vector.broadcast %cst_31 : f32 to vector<16x128xf32>
    %81 = arith.maximumf %80, %79 : vector<16x128xf32>
    %82 = vector.broadcast %cst_32 : f32 to vector<16x128xf32>
    %83 = arith.minimumf %82, %81 : vector<16x128xf32>
    %84 = arith.mulf %83, %83 : vector<16x128xf32>
    %cst_33 = arith.constant 2.000000e+00 : f32
    %85 = vector.broadcast %cst_33 : f32 to vector<16x128xf32>
    %86 = arith.subf %85, %84 : vector<16x128xf32>
    %87 = math.sqrt %86 : vector<16x128xf32>
    %88 = arith.addf %87, %83 : vector<16x128xf32>
    %cst_34 = arith.constant 5.000000e-01 : f32
    %89 = vector.broadcast %cst_34 : f32 to vector<16x128xf32>
    %90 = arith.mulf %88, %89 : vector<16x128xf32>
    %91 = arith.mulf %90, %90 : vector<16x128xf32>
    %cst_35 = arith.constant 1.000000e+00 : f32
    %92 = vector.broadcast %cst_35 : f32 to vector<16x128xf32>
    %93 = arith.subf %92, %91 : vector<16x128xf32>
    %94 = vector.extract_strided_slice %11 {offsets = [0, 512], sizes = [16, 128], strides = [1, 1]} : vector<16x768xf32> to vector<16x128xf32>
    %95 = vector.extract_strided_slice %13 {offsets = [4, 0], sizes = [1, 128], strides = [1, 1]} : vector<6x128xf32> to vector<1x128xf32>
    %96 = vector.shape_cast %95 : vector<1x128xf32> to vector<128xf32>
    %97 = vector.shape_cast %96 : vector<128xf32> to vector<1x128xf32>
    %98 = vector.broadcast %97 : vector<1x128xf32> to vector<16x128xf32>
    %99 = arith.subf %94, %98 : vector<16x128xf32>
    %cst_36 = arith.constant -1.000000e+00 : f32
    %cst_37 = arith.constant 1.000000e+00 : f32
    %100 = vector.broadcast %cst_36 : f32 to vector<16x128xf32>
    %101 = arith.maximumf %100, %99 : vector<16x128xf32>
    %102 = vector.broadcast %cst_37 : f32 to vector<16x128xf32>
    %103 = arith.minimumf %102, %101 : vector<16x128xf32>
    %104 = arith.mulf %103, %103 : vector<16x128xf32>
    %cst_38 = arith.constant 2.000000e+00 : f32
    %105 = vector.broadcast %cst_38 : f32 to vector<16x128xf32>
    %106 = arith.subf %105, %104 : vector<16x128xf32>
    %107 = math.sqrt %106 : vector<16x128xf32>
    %108 = arith.addf %107, %103 : vector<16x128xf32>
    %cst_39 = arith.constant 5.000000e-01 : f32
    %109 = vector.broadcast %cst_39 : f32 to vector<16x128xf32>
    %110 = arith.mulf %108, %109 : vector<16x128xf32>
    %111 = arith.mulf %110, %110 : vector<16x128xf32>
    %cst_40 = arith.constant 1.000000e+00 : f32
    %112 = vector.broadcast %cst_40 : f32 to vector<16x128xf32>
    %113 = arith.subf %112, %111 : vector<16x128xf32>
    %114 = vector.extract_strided_slice %11 {offsets = [0, 640], sizes = [16, 128], strides = [1, 1]} : vector<16x768xf32> to vector<16x128xf32>
    %115 = vector.extract_strided_slice %13 {offsets = [5, 0], sizes = [1, 128], strides = [1, 1]} : vector<6x128xf32> to vector<1x128xf32>
    %116 = vector.shape_cast %115 : vector<1x128xf32> to vector<128xf32>
    %117 = vector.shape_cast %116 : vector<128xf32> to vector<1x128xf32>
    %118 = vector.broadcast %117 : vector<1x128xf32> to vector<16x128xf32>
    %119 = arith.subf %114, %118 : vector<16x128xf32>
    %cst_41 = arith.constant -1.000000e+00 : f32
    %cst_42 = arith.constant 1.000000e+00 : f32
    %120 = vector.broadcast %cst_41 : f32 to vector<16x128xf32>
    %121 = arith.maximumf %120, %119 : vector<16x128xf32>
    %122 = vector.broadcast %cst_42 : f32 to vector<16x128xf32>
    %123 = arith.minimumf %122, %121 : vector<16x128xf32>
    %124 = arith.mulf %123, %123 : vector<16x128xf32>
    %cst_43 = arith.constant 2.000000e+00 : f32
    %125 = vector.broadcast %cst_43 : f32 to vector<16x128xf32>
    %126 = arith.subf %125, %124 : vector<16x128xf32>
    %127 = math.sqrt %126 : vector<16x128xf32>
    %128 = arith.addf %127, %123 : vector<16x128xf32>
    %cst_44 = arith.constant 5.000000e-01 : f32
    %129 = vector.broadcast %cst_44 : f32 to vector<16x128xf32>
    %130 = arith.mulf %128, %129 : vector<16x128xf32>
    %131 = arith.mulf %130, %130 : vector<16x128xf32>
    %cst_45 = arith.constant 1.000000e+00 : f32
    %132 = vector.broadcast %cst_45 : f32 to vector<16x128xf32>
    %133 = arith.subf %132, %131 : vector<16x128xf32>
    %134 = tpu.iota {dimensions = array<i32: 1>} : vector<1x16x128xi32>
    %c0_i32_46 = arith.constant 0 : i32
    %135 = vector.broadcast %c0_i32_46 : i32 to vector<1x16x128xi32>
    %136 = arith.shrsi %134, %135 : vector<1x16x128xi32>
    %c1_i32 = arith.constant 1 : i32
    %137 = vector.broadcast %c1_i32 : i32 to vector<1x16x128xi32>
    %138 = arith.andi %136, %137 : vector<1x16x128xi32>
    %c1_i32_47 = arith.constant 1 : i32
    %139 = vector.broadcast %c1_i32_47 : i32 to vector<1x16x128xi32>
    %140 = arith.cmpi eq, %138, %139 : vector<1x16x128xi32>
    %141 = vector.shape_cast %33 : vector<16x128xf32> to vector<16x1x128xf32>
    %142 = vector.shape_cast %31 : vector<16x128xf32> to vector<16x1x128xf32>
    %143 = vector.shape_cast %140 : vector<1x16x128xi1> to vector<1x16x128xi1>
    %144 = vector.broadcast %143 : vector<1x16x128xi1> to vector<16x16x128xi1>
    %145 = vector.shape_cast %141 : vector<16x1x128xf32> to vector<16x1x128xf32>
    %146 = vector.broadcast %145 : vector<16x1x128xf32> to vector<16x16x128xf32>
    %147 = vector.shape_cast %142 : vector<16x1x128xf32> to vector<16x1x128xf32>
    %148 = vector.broadcast %147 : vector<16x1x128xf32> to vector<16x16x128xf32>
    %149 = arith.select %144, %146, %148 : vector<16x16x128xi1>, vector<16x16x128xf32>
    %c1_i32_48 = arith.constant 1 : i32
    %150 = vector.broadcast %c1_i32_48 : i32 to vector<1x16x128xi32>
    %151 = arith.shrsi %134, %150 : vector<1x16x128xi32>
    %c1_i32_49 = arith.constant 1 : i32
    %152 = vector.broadcast %c1_i32_49 : i32 to vector<1x16x128xi32>
    %153 = arith.andi %151, %152 : vector<1x16x128xi32>
    %c1_i32_50 = arith.constant 1 : i32
    %154 = vector.broadcast %c1_i32_50 : i32 to vector<1x16x128xi32>
    %155 = arith.cmpi eq, %153, %154 : vector<1x16x128xi32>
    %156 = vector.shape_cast %53 : vector<16x128xf32> to vector<16x1x128xf32>
    %157 = vector.shape_cast %51 : vector<16x128xf32> to vector<16x1x128xf32>
    %158 = vector.shape_cast %155 : vector<1x16x128xi1> to vector<1x16x128xi1>
    %159 = vector.broadcast %158 : vector<1x16x128xi1> to vector<16x16x128xi1>
    %160 = vector.shape_cast %156 : vector<16x1x128xf32> to vector<16x1x128xf32>
    %161 = vector.broadcast %160 : vector<16x1x128xf32> to vector<16x16x128xf32>
    %162 = vector.shape_cast %157 : vector<16x1x128xf32> to vector<16x1x128xf32>
    %163 = vector.broadcast %162 : vector<16x1x128xf32> to vector<16x16x128xf32>
    %164 = arith.select %159, %161, %163 : vector<16x16x128xi1>, vector<16x16x128xf32>
    %165 = arith.mulf %149, %164 : vector<16x16x128xf32>
    %c2_i32 = arith.constant 2 : i32
    %166 = vector.broadcast %c2_i32 : i32 to vector<1x16x128xi32>
    %167 = arith.shrsi %134, %166 : vector<1x16x128xi32>
    %c1_i32_51 = arith.constant 1 : i32
    %168 = vector.broadcast %c1_i32_51 : i32 to vector<1x16x128xi32>
    %169 = arith.andi %167, %168 : vector<1x16x128xi32>
    %c1_i32_52 = arith.constant 1 : i32
    %170 = vector.broadcast %c1_i32_52 : i32 to vector<1x16x128xi32>
    %171 = arith.cmpi eq, %169, %170 : vector<1x16x128xi32>
    %172 = vector.shape_cast %73 : vector<16x128xf32> to vector<16x1x128xf32>
    %173 = vector.shape_cast %71 : vector<16x128xf32> to vector<16x1x128xf32>
    %174 = vector.shape_cast %171 : vector<1x16x128xi1> to vector<1x16x128xi1>
    %175 = vector.broadcast %174 : vector<1x16x128xi1> to vector<16x16x128xi1>
    %176 = vector.shape_cast %172 : vector<16x1x128xf32> to vector<16x1x128xf32>
    %177 = vector.broadcast %176 : vector<16x1x128xf32> to vector<16x16x128xf32>
    %178 = vector.shape_cast %173 : vector<16x1x128xf32> to vector<16x1x128xf32>
    %179 = vector.broadcast %178 : vector<16x1x128xf32> to vector<16x16x128xf32>
    %180 = arith.select %175, %177, %179 : vector<16x16x128xi1>, vector<16x16x128xf32>
    %181 = arith.mulf %165, %180 : vector<16x16x128xf32>
    %c3_i32 = arith.constant 3 : i32
    %182 = vector.broadcast %c3_i32 : i32 to vector<1x16x128xi32>
    %183 = arith.shrsi %134, %182 : vector<1x16x128xi32>
    %c1_i32_53 = arith.constant 1 : i32
    %184 = vector.broadcast %c1_i32_53 : i32 to vector<1x16x128xi32>
    %185 = arith.andi %183, %184 : vector<1x16x128xi32>
    %c1_i32_54 = arith.constant 1 : i32
    %186 = vector.broadcast %c1_i32_54 : i32 to vector<1x16x128xi32>
    %187 = arith.cmpi eq, %185, %186 : vector<1x16x128xi32>
    %188 = vector.shape_cast %93 : vector<16x128xf32> to vector<16x1x128xf32>
    %189 = vector.shape_cast %91 : vector<16x128xf32> to vector<16x1x128xf32>
    %190 = vector.shape_cast %187 : vector<1x16x128xi1> to vector<1x16x128xi1>
    %191 = vector.broadcast %190 : vector<1x16x128xi1> to vector<16x16x128xi1>
    %192 = vector.shape_cast %188 : vector<16x1x128xf32> to vector<16x1x128xf32>
    %193 = vector.broadcast %192 : vector<16x1x128xf32> to vector<16x16x128xf32>
    %194 = vector.shape_cast %189 : vector<16x1x128xf32> to vector<16x1x128xf32>
    %195 = vector.broadcast %194 : vector<16x1x128xf32> to vector<16x16x128xf32>
    %196 = arith.select %191, %193, %195 : vector<16x16x128xi1>, vector<16x16x128xf32>
    %197 = arith.mulf %181, %196 : vector<16x16x128xf32>
    %198 = arith.mulf %111, %131 : vector<16x128xf32>
    %199 = arith.mulf %113, %131 : vector<16x128xf32>
    %200 = arith.mulf %111, %133 : vector<16x128xf32>
    %201 = arith.mulf %113, %133 : vector<16x128xf32>
    %cst_55 = arith.constant 0.000000e+00 : f32
    %202 = vector.broadcast %cst_55 : f32 to vector<16x128xf32>
    %c0_56 = arith.constant 0 : index
    %c0_57 = arith.constant 0 : index
    %c0_58 = arith.constant 0 : index
    %c0_59 = arith.constant 0 : index
    %c0_60 = arith.constant 0 : index
    %203 = vector.load %arg7[%c0_56, %c0_57, %c0_58, %c0_59, %c0_60] : memref<1x1x2x64x128xbf16, #tpu.memory_space<vmem>>, vector<1x1x1x16x128xbf16>
    %204 = vector.shape_cast %203 : vector<1x1x1x16x128xbf16> to vector<16x128xbf16>
    %205 = arith.extf %204 : vector<16x128xbf16> to vector<16x128xf32>
    %206 = vector.shape_cast %205 : vector<16x128xf32> to vector<1x16x128xf32>
    %207 = vector.broadcast %206 : vector<1x16x128xf32> to vector<16x16x128xf32>
    %208 = arith.mulf %197, %207 : vector<16x16x128xf32>
    %cst_61 = arith.constant dense<0.000000e+00> : vector<16x128xf32>
    %209 = vector.multi_reduction <add>, %208, %cst_61 [1] : vector<16x16x128xf32> to vector<16x128xf32>
    %210 = arith.mulf %198, %209 : vector<16x128xf32>
    %211 = arith.addf %202, %210 : vector<16x128xf32>
    %c0_62 = arith.constant 0 : index
    %c0_63 = arith.constant 0 : index
    %c0_64 = arith.constant 0 : index
    %c16 = arith.constant 16 : index
    %c0_65 = arith.constant 0 : index
    %212 = vector.load %arg7[%c0_62, %c0_63, %c0_64, %c16, %c0_65] : memref<1x1x2x64x128xbf16, #tpu.memory_space<vmem>>, vector<1x1x1x16x128xbf16>
    %213 = vector.shape_cast %212 : vector<1x1x1x16x128xbf16> to vector<16x128xbf16>
    %214 = arith.extf %213 : vector<16x128xbf16> to vector<16x128xf32>
    %215 = vector.shape_cast %214 : vector<16x128xf32> to vector<1x16x128xf32>
    %216 = vector.broadcast %215 : vector<1x16x128xf32> to vector<16x16x128xf32>
    %217 = arith.mulf %197, %216 : vector<16x16x128xf32>
    %cst_66 = arith.constant dense<0.000000e+00> : vector<16x128xf32>
    %218 = vector.multi_reduction <add>, %217, %cst_66 [1] : vector<16x16x128xf32> to vector<16x128xf32>
    %219 = arith.mulf %199, %218 : vector<16x128xf32>
    %220 = arith.addf %211, %219 : vector<16x128xf32>
    %c0_67 = arith.constant 0 : index
    %c0_68 = arith.constant 0 : index
    %c0_69 = arith.constant 0 : index
    %c32 = arith.constant 32 : index
    %c0_70 = arith.constant 0 : index
    %221 = vector.load %arg7[%c0_67, %c0_68, %c0_69, %c32, %c0_70] : memref<1x1x2x64x128xbf16, #tpu.memory_space<vmem>>, vector<1x1x1x16x128xbf16>
    %222 = vector.shape_cast %221 : vector<1x1x1x16x128xbf16> to vector<16x128xbf16>
    %223 = arith.extf %222 : vector<16x128xbf16> to vector<16x128xf32>
    %224 = vector.shape_cast %223 : vector<16x128xf32> to vector<1x16x128xf32>
    %225 = vector.broadcast %224 : vector<1x16x128xf32> to vector<16x16x128xf32>
    %226 = arith.mulf %197, %225 : vector<16x16x128xf32>
    %cst_71 = arith.constant dense<0.000000e+00> : vector<16x128xf32>
    %227 = vector.multi_reduction <add>, %226, %cst_71 [1] : vector<16x16x128xf32> to vector<16x128xf32>
    %228 = arith.mulf %200, %227 : vector<16x128xf32>
    %229 = arith.addf %220, %228 : vector<16x128xf32>
    %c0_72 = arith.constant 0 : index
    %c0_73 = arith.constant 0 : index
    %c0_74 = arith.constant 0 : index
    %c48 = arith.constant 48 : index
    %c0_75 = arith.constant 0 : index
    %230 = vector.load %arg7[%c0_72, %c0_73, %c0_74, %c48, %c0_75] : memref<1x1x2x64x128xbf16, #tpu.memory_space<vmem>>, vector<1x1x1x16x128xbf16>
    %231 = vector.shape_cast %230 : vector<1x1x1x16x128xbf16> to vector<16x128xbf16>
    %232 = arith.extf %231 : vector<16x128xbf16> to vector<16x128xf32>
    %233 = vector.shape_cast %232 : vector<16x128xf32> to vector<1x16x128xf32>
    %234 = vector.broadcast %233 : vector<1x16x128xf32> to vector<16x16x128xf32>
    %235 = arith.mulf %197, %234 : vector<16x16x128xf32>
    %cst_76 = arith.constant dense<0.000000e+00> : vector<16x128xf32>
    %236 = vector.multi_reduction <add>, %235, %cst_76 [1] : vector<16x16x128xf32> to vector<16x128xf32>
    %237 = arith.mulf %201, %236 : vector<16x128xf32>
    %238 = arith.addf %229, %237 : vector<16x128xf32>
    %c0_i32_77 = arith.constant 0 : i32
    %239 = arith.cmpi eq, %arg2, %c0_i32_77 : i32
    %240 = arith.extui %239 : i1 to i32
    %c0_i32_78 = arith.constant 0 : i32
    %241 = arith.cmpi ne, %240, %c0_i32_78 : i32
    scf.if %241 {
      %c0_83 = arith.constant 0 : index
      %c0_84 = arith.constant 0 : index
      %c0_85 = arith.constant 0 : index
      %248 = vector.load %arg8[%c0_83, %c0_84, %c0_85] : memref<1x16x128xf32, #tpu.memory_space<vmem>>, vector<1x16x128xf32>
      %249 = vector.shape_cast %248 : vector<1x16x128xf32> to vector<16x128xf32>
      %250 = vector.shape_cast %238 : vector<16x128xf32> to vector<1x16x128xf32>
      tpu.vector_store %arg8[%c0_83, %c0_84, %c0_85], %250 {strides = array<i32>} : memref<1x16x128xf32, #tpu.memory_space<vmem>>, vector<1x16x128xf32>,
    } else {
    }
    %c0_i32_79 = arith.constant 0 : i32
    %242 = arith.cmpi sgt, %arg2, %c0_i32_79 : i32
    %243 = arith.extui %242 : i1 to i32
    %c0_i32_80 = arith.constant 0 : i32
    %244 = arith.cmpi ne, %243, %c0_i32_80 : i32
    scf.if %244 {
      %c0_83 = arith.constant 0 : index
      %c0_84 = arith.constant 0 : index
      %c0_85 = arith.constant 0 : index
      %248 = vector.load %arg8[%c0_83, %c0_84, %c0_85] : memref<1x16x128xf32, #tpu.memory_space<vmem>>, vector<1x16x128xf32>
      %249 = vector.shape_cast %248 : vector<1x16x128xf32> to vector<16x128xf32>
      %250 = arith.addf %249, %238 : vector<16x128xf32>
      %c0_86 = arith.constant 0 : index
      %c0_87 = arith.constant 0 : index
      %c0_88 = arith.constant 0 : index
      %251 = vector.load %arg8[%c0_86, %c0_87, %c0_88] : memref<1x16x128xf32, #tpu.memory_space<vmem>>, vector<1x16x128xf32>
      %252 = vector.shape_cast %251 : vector<1x16x128xf32> to vector<16x128xf32>
      %253 = vector.shape_cast %250 : vector<16x128xf32> to vector<1x16x128xf32>
      tpu.vector_store %arg8[%c0_86, %c0_87, %c0_88], %253 {strides = array<i32>} : memref<1x16x128xf32, #tpu.memory_space<vmem>>, vector<1x16x128xf32>,
    } else {
    }
    %c1_i32_81 = arith.constant 1 : i32
    %245 = arith.cmpi slt, %arg2, %c1_i32_81 : i32
    %246 = arith.extui %245 : i1 to i32
    %c0_i32_82 = arith.constant 0 : i32
    %247 = arith.cmpi ne, %246, %c0_i32_82 : i32
    scf.if %247 {
      %cst_83 = arith.constant 0.000000e+00 : f32
      %248 = vector.broadcast %cst_83 : f32 to vector<16x128xf32>
      %c0_84 = arith.constant 0 : index
      %c0_85 = arith.constant 0 : index
      %c1 = arith.constant 1 : index
      %c0_86 = arith.constant 0 : index
      %c0_87 = arith.constant 0 : index
      %249 = vector.load %arg7[%c0_84, %c0_85, %c1, %c0_86, %c0_87] : memref<1x1x2x64x128xbf16, #tpu.memory_space<vmem>>, vector<1x1x1x16x128xbf16>
      %250 = vector.shape_cast %249 : vector<1x1x1x16x128xbf16> to vector<16x128xbf16>
      %251 = arith.extf %250 : vector<16x128xbf16> to vector<16x128xf32>
      %252 = vector.shape_cast %251 : vector<16x128xf32> to vector<1x16x128xf32>
      %253 = vector.broadcast %252 : vector<1x16x128xf32> to vector<16x16x128xf32>
      %254 = arith.mulf %197, %253 : vector<16x16x128xf32>
      %cst_88 = arith.constant dense<0.000000e+00> : vector<16x128xf32>
      %255 = vector.multi_reduction <add>, %254, %cst_88 [1] : vector<16x16x128xf32> to vector<16x128xf32>
      %256 = arith.mulf %198, %255 : vector<16x128xf32>
      %257 = arith.addf %248, %256 : vector<16x128xf32>
      %c0_89 = arith.constant 0 : index
      %c0_90 = arith.constant 0 : index
      %c1_91 = arith.constant 1 : index
      %c16_92 = arith.constant 16 : index
      %c0_93 = arith.constant 0 : index
      %258 = vector.load %arg7[%c0_89, %c0_90, %c1_91, %c16_92, %c0_93] : memref<1x1x2x64x128xbf16, #tpu.memory_space<vmem>>, vector<1x1x1x16x128xbf16>
      %259 = vector.shape_cast %258 : vector<1x1x1x16x128xbf16> to vector<16x128xbf16>
      %260 = arith.extf %259 : vector<16x128xbf16> to vector<16x128xf32>
      %261 = vector.shape_cast %260 : vector<16x128xf32> to vector<1x16x128xf32>
      %262 = vector.broadcast %261 : vector<1x16x128xf32> to vector<16x16x128xf32>
      %263 = arith.mulf %197, %262 : vector<16x16x128xf32>
      %cst_94 = arith.constant dense<0.000000e+00> : vector<16x128xf32>
      %264 = vector.multi_reduction <add>, %263, %cst_94 [1] : vector<16x16x128xf32> to vector<16x128xf32>
      %265 = arith.mulf %199, %264 : vector<16x128xf32>
      %266 = arith.addf %257, %265 : vector<16x128xf32>
      %c0_95 = arith.constant 0 : index
      %c0_96 = arith.constant 0 : index
      %c1_97 = arith.constant 1 : index
      %c32_98 = arith.constant 32 : index
      %c0_99 = arith.constant 0 : index
      %267 = vector.load %arg7[%c0_95, %c0_96, %c1_97, %c32_98, %c0_99] : memref<1x1x2x64x128xbf16, #tpu.memory_space<vmem>>, vector<1x1x1x16x128xbf16>
      %268 = vector.shape_cast %267 : vector<1x1x1x16x128xbf16> to vector<16x128xbf16>
      %269 = arith.extf %268 : vector<16x128xbf16> to vector<16x128xf32>
      %270 = vector.shape_cast %269 : vector<16x128xf32> to vector<1x16x128xf32>
      %271 = vector.broadcast %270 : vector<1x16x128xf32> to vector<16x16x128xf32>
      %272 = arith.mulf %197, %271 : vector<16x16x128xf32>
      %cst_100 = arith.constant dense<0.000000e+00> : vector<16x128xf32>
      %273 = vector.multi_reduction <add>, %272, %cst_100 [1] : vector<16x16x128xf32> to vector<16x128xf32>
      %274 = arith.mulf %200, %273 : vector<16x128xf32>
      %275 = arith.addf %266, %274 : vector<16x128xf32>
      %c0_101 = arith.constant 0 : index
      %c0_102 = arith.constant 0 : index
      %c1_103 = arith.constant 1 : index
      %c48_104 = arith.constant 48 : index
      %c0_105 = arith.constant 0 : index
      %276 = vector.load %arg7[%c0_101, %c0_102, %c1_103, %c48_104, %c0_105] : memref<1x1x2x64x128xbf16, #tpu.memory_space<vmem>>, vector<1x1x1x16x128xbf16>
      %277 = vector.shape_cast %276 : vector<1x1x1x16x128xbf16> to vector<16x128xbf16>
      %278 = arith.extf %277 : vector<16x128xbf16> to vector<16x128xf32>
      %279 = vector.shape_cast %278 : vector<16x128xf32> to vector<1x16x128xf32>
      %280 = vector.broadcast %279 : vector<1x16x128xf32> to vector<16x16x128xf32>
      %281 = arith.mulf %197, %280 : vector<16x16x128xf32>
      %cst_106 = arith.constant dense<0.000000e+00> : vector<16x128xf32>
      %282 = vector.multi_reduction <add>, %281, %cst_106 [1] : vector<16x16x128xf32> to vector<16x128xf32>
      %283 = arith.mulf %201, %282 : vector<16x128xf32>
      %284 = arith.addf %275, %283 : vector<16x128xf32>
      %285 = arith.truncf %238 : vector<16x128xf32> to vector<16x128xbf16>
      %c0_107 = arith.constant 0 : index
      %c0_108 = arith.constant 0 : index
      %286 = vector.load %arg9[%c0_107, %c0_108] : memref<16x256xbf16, #tpu.memory_space<vmem>>, vector<16x128xbf16>
      tpu.vector_store %arg9[%c0_107, %c0_108], %285 {strides = array<i32>} : memref<16x256xbf16, #tpu.memory_space<vmem>>, vector<16x128xbf16>,
      %287 = arith.truncf %284 : vector<16x128xf32> to vector<16x128xbf16>
      %c0_109 = arith.constant 0 : index
      %c128 = arith.constant 128 : index
      %288 = vector.load %arg9[%c0_109, %c128] : memref<16x256xbf16, #tpu.memory_space<vmem>>, vector<16x128xbf16>
      tpu.vector_store %arg9[%c0_109, %c128], %287 {strides = array<i32>} : memref<16x256xbf16, #tpu.memory_space<vmem>>, vector<16x128xbf16>,
    } else {
    }
    return
  }
  func.func @transform_0(%arg0: i32, %arg1: i32, %arg2: i32) -> (i32, i32) {
    %c0_i32 = arith.constant 0 : i32
    %c0_i32_0 = arith.constant 0 : i32
    return %arg1, %c0_i32 : i32, i32
  }
  func.func @transform_1(%arg0: i32, %arg1: i32, %arg2: i32) -> (i32, i32, i32, i32) {
    %c0_i32 = arith.constant 0 : i32
    %c0_i32_0 = arith.constant 0 : i32
    %c0_i32_1 = arith.constant 0 : i32
    return %arg0, %arg2, %c0_i32, %c0_i32_0 : i32, i32, i32, i32
  }
  func.func @transform_2(%arg0: i32, %arg1: i32, %arg2: i32) -> (i32, i32, i32) {
    %c0_i32 = arith.constant 0 : i32
    %c0_i32_0 = arith.constant 0 : i32
    %c0_i32_1 = arith.constant 0 : i32
    return %arg0, %c0_i32, %c0_i32_0 : i32, i32, i32
  }
  func.func @transform_3(%arg0: i32, %arg1: i32, %arg2: i32) -> (i32, i32, i32, i32) {
    %c0_i32 = arith.constant 0 : i32
    %c0_i32_0 = arith.constant 0 : i32
    %c0_i32_1 = arith.constant 0 : i32
    return %arg0, %arg2, %c0_i32, %c0_i32_0 : i32, i32, i32, i32
  }
  func.func @transform_4(%arg0: i32, %arg1: i32, %arg2: i32) -> (i32, i32, i32, i32, i32) {
    %c0_i32 = arith.constant 0 : i32
    %c0_i32_0 = arith.constant 0 : i32
    %c0_i32_1 = arith.constant 0 : i32
    %c0_i32_2 = arith.constant 0 : i32
    return %arg0, %arg2, %c0_i32, %c0_i32_0, %c0_i32_1 : i32, i32, i32, i32, i32
  }
  func.func @transform_5(%arg0: i32, %arg1: i32, %arg2: i32) -> (i32, i32, i32) {
    %c0_i32 = arith.constant 0 : i32
    %c0_i32_0 = arith.constant 0 : i32
    return %arg0, %arg1, %c0_i32 : i32, i32, i32
  }
}

</mosaic_0001>

<llo_original>
// kernel: regression_differential_tree_forward.1
$region0: #{regression_differential_tree_forward.1}
  #allocation0 [shape = 'u32[]', space=smem, size = 0x4, offset = 0x4, fixed_abs, tag = 'smem constant byte address 0x4 - core index']
  #allocation1 [shape = 'u32[144,128]{1,0:T(1,128)}', space=vmem, size = 0x12000, scoped, tag = 'internal scratch']
  #allocation2 [shape = 'bf16[16,256]{1,0:T(16,128)(2,1)}', space=vmem, size = 0x2000, scoped, tag = 'scratch operand']
  %s0 = inlined_call_operand.vmem [shape: bf16[16,16], index: 0, kind: input, shape index: {}]
  %s1 = inlined_call_operand.hbm [shape: bf16[5,2,16,768], index: 1, kind: input, shape index: {}]
  %s2 = inlined_call_operand.hbm [shape: bf16[5,256,768], index: 2, kind: input, shape index: {}]
  %s3 = inlined_call_operand.vmem [shape: f32[5,2,6,128], index: 3, kind: input, shape index: {}]
  %s4 = inlined_call_operand.hbm [shape: bf16[5,2,2,64,128], index: 4, kind: input, shape index: {}]
  %s5 = inlined_call_operand.vmem [shape: f32[5,16,128], index: 5, kind: output, shape index: {}]
  %s6 = sld [smem:[#allocation0]]
  $region81: #{regression_differential_tree_forward.1} parent=0
    _
  %s8 = ssub.s32 1, %s6
  %s9 = scalar_select 0, %s8, %s6
  $region1: #{regression_differential_tree_forward.1} parent=0
    #allocation3 [shape = 'u8[49152]{0}', space=vmem, size = 0xc000, scoped, tag = 'input window, operand 1']
    #allocation4 [shape = 's32[2]{0}', space=sflag, size = 0x8, scoped, tag = 'scoped memory for regression_differential_tree_forward.1']
    #allocation5 [shape = 'u8[786432]{0}', space=vmem, size = 0xc0000, scoped, tag = 'input window, operand 2']
    #allocation6 [shape = 's32[2]{0}', space=sflag, size = 0x8, scoped, tag = 'scoped memory for regression_differential_tree_forward.1']
    #allocation7 [shape = 'u8[65536]{0}', space=vmem, size = 0x10000, scoped, tag = 'input window, operand 4']
    %10 = vsyncpa [#allocation4], 0
    %s11 = scalar_lea.sflag [#allocation4], 1
    %12 = vsyncpa %s11, 0
    %13 = vsyncpa [#allocation6], 0
    %s14 = scalar_lea.sflag [#allocation6], 1
    %15 = vsyncpa %s14, 0
    loop: start=0, step=1, limit=12
    $region2: #{regression_differential_tree_forward.1} parent=1 // loop_pre_header
      _
    $region3: #{regression_differential_tree_forward.1} parent=1 // loop_header
      %s17 = sphi 0, %s21
      %p18 = scmp.ge.s32.totalorder %s17, 12
      %s24 = sphi 0, %s43
      %s25 = sphi 0, %s39
      %s26 = sphi 0, %s35
      %s27 = sphi 0, %s24
      %s28 = sphi 0, %s25
      %s29 = sphi 0, %s26
      %s30 = sphi 0, %s27
      %s31 = sphi 0, %s28
      %s32 = sphi 0, %s29
      %s46 = sphi 0, %s48
      %s49 = sphi 0, %s46
      %s50 = sphi 0, %s49
      %s66 = sphi 0, %s50
      %s74 = sphi 0, %s76
      %s77 = sphi 0, %s74
      %s78 = sphi 0, %s77
      %s94 = sphi 0, %s78
      %s100 = sphi 0, %s102
      %s103 = sphi 0, %s100
      %s104 = sphi 0, %s103
      %s120 = sphi 0, %s104
      %s128 = sphi 0, %s130
      %s131 = sphi 0, %s128
      %s132 = sphi 0, %s131
      %s148 = sphi 0, %s132
      %s156 = sphi 0, %s158
      %s159 = sphi 0, %s156
      %s160 = sphi 0, %s159
      %s176 = sphi 0, %s160
      %s184 = sphi 0, %s186
      %s187 = sphi 0, %s184
      %s188 = sphi 0, %s187
      %s204 = sphi 0, %s188
    $region4: #{regression_differential_tree_forward.1} parent=1 // loop_header_branch
      %20 = sbr.rel (%p18) target = $region8
    $region5: #{regression_differential_tree_forward.1} parent=1 // loop_body
      %s22 = ssub.s32 %s17, 1
      %s23 = ssub.s32 %s17, 2
      %s33 = sadd.s32 1, %s26
      %p34 = scmp.ge.s32.totalorder %s33, 2
      %s35 = scalar_select %p34, 0, %s33
      %s36 = sadd.s32 1, %s25
      %s37 = scalar_select %p34, %s36, %s25
      %p38 = scmp.ge.s32.totalorder %s37, 1
      %s39 = scalar_select %p38, 0, %s37
      %s40 = sadd.s32 1, %s24
      %s41 = scalar_select %p38, %s40, %s24
      %p42 = scmp.ge.s32.totalorder %s41, 5
      %s43 = scalar_select %p42, 0, %s41
      %s44 = ssub.s32 %s25, %s39
      %p45 = scmp.eq.s32.totalorder %s44, 0
      %s47 = sadd.s32 %s46, 1
      %s48 = scalar_select %p45, %s46, %s47
      %p51 = pneg %p45
      %p52 = scmp.eq.s32.totalorder %s17, 9
      %p53 = por %p51, %p52
      %p54 = scmp.ne.s32.totalorder %s46, %s49
      %p55 = scmp.eq.s32.totalorder %s17, 0
      %p56 = por %p54, %p55
      %p57 = scmp.ne.s32.totalorder %s46, %s49
      %p58 = scmp.eq.s32.totalorder %s22, 9
      %p59 = por %p57, %p58
      %p60 = scmp.ne.s32.totalorder %s49, %s50
      %p61 = scmp.eq.s32.totalorder %s22, 0
      %p62 = por %p60, %p61
      %p63 = scmp.ne.s32.totalorder %s49, %s50
      %p64 = scmp.eq.s32.totalorder %s23, 9
      %p65 = por %p63, %p64
      %p67 = scmp.ne.s32.totalorder %s50, %s66
      %p68 = scmp.eq.s32.totalorder %s23, 0
      %p69 = por %p67, %p68
      %s70 = ssub.s32 %s24, %s43
      %s71 = ssub.s32 %s26, %s35
      %s72 = sor.u32 %s70, %s71
      %p73 = scmp.eq.s32.totalorder %s72, 0
      %s75 = sadd.s32 %s74, 1
      %s76 = scalar_select %p73, %s74, %s75
      %p79 = pneg %p73
      %p80 = scmp.eq.s32.totalorder %s17, 9
      %p81 = por %p79, %p80
      %p82 = scmp.ne.s32.totalorder %s74, %s77
      %p83 = scmp.eq.s32.totalorder %s17, 0
      %p84 = por %p82, %p83
      %p85 = scmp.ne.s32.totalorder %s74, %s77
      %p86 = scmp.eq.s32.totalorder %s22, 9
      %p87 = por %p85, %p86
      %p88 = scmp.ne.s32.totalorder %s77, %s78
      %p89 = scmp.eq.s32.totalorder %s22, 0
      %p90 = por %p88, %p89
      %p91 = scmp.ne.s32.totalorder %s77, %s78
      %p92 = scmp.eq.s32.totalorder %s23, 9
      %p93 = por %p91, %p92
      %p95 = scmp.ne.s32.totalorder %s78, %s94
      %p96 = scmp.eq.s32.totalorder %s23, 0
      %p97 = por %p95, %p96
      %s98 = ssub.s32 %s24, %s43
      %p99 = scmp.eq.s32.totalorder %s98, 0
      %s101 = sadd.s32 %s100, 1
      %s102 = scalar_select %p99, %s100, %s101
      %p105 = pneg %p99
      %p106 = scmp.eq.s32.totalorder %s17, 9
      %p107 = por %p105, %p106
      %p108 = scmp.ne.s32.totalorder %s100, %s103
      %p109 = scmp.eq.s32.totalorder %s17, 0
      %p110 = por %p108, %p109
      %p111 = scmp.ne.s32.totalorder %s100, %s103
      %p112 = scmp.eq.s32.totalorder %s22, 9
      %p113 = por %p111, %p112
      %p114 = scmp.ne.s32.totalorder %s103, %s104
      %p115 = scmp.eq.s32.totalorder %s22, 0
      %p116 = por %p114, %p115
      %p117 = scmp.ne.s32.totalorder %s103, %s104
      %p118 = scmp.eq.s32.totalorder %s23, 9
      %p119 = por %p117, %p118
      %p121 = scmp.ne.s32.totalorder %s104, %s120
      %p122 = scmp.eq.s32.totalorder %s23, 0
      %p123 = por %p121, %p122
      %s124 = ssub.s32 %s24, %s43
      %s125 = ssub.s32 %s26, %s35
      %s126 = sor.u32 %s124, %s125
      %p127 = scmp.eq.s32.totalorder %s126, 0
      %s129 = sadd.s32 %s128, 1
      %s130 = scalar_select %p127, %s128, %s129
      %p133 = pneg %p127
      %p134 = scmp.eq.s32.totalorder %s17, 9
      %p135 = por %p133, %p134
      %p136 = scmp.ne.s32.totalorder %s128, %s131
      %p137 = scmp.eq.s32.totalorder %s17, 0
      %p138 = por %p136, %p137
      %p139 = scmp.ne.s32.totalorder %s128, %s131
      %p140 = scmp.eq.s32.totalorder %s22, 9
      %p141 = por %p139, %p140
      %p142 = scmp.ne.s32.totalorder %s131, %s132
      %p143 = scmp.eq.s32.totalorder %s22, 0
      %p144 = por %p142, %p143
      %p145 = scmp.ne.s32.totalorder %s131, %s132
      %p146 = scmp.eq.s32.totalorder %s23, 9
      %p147 = por %p145, %p146
      %p149 = scmp.ne.s32.totalorder %s132, %s148
      %p150 = scmp.eq.s32.totalorder %s23, 0
      %p151 = por %p149, %p150
      %s152 = ssub.s32 %s24, %s43
      %s153 = ssub.s32 %s26, %s35
      %s154 = sor.u32 %s152, %s153
      %p155 = scmp.eq.s32.totalorder %s154, 0
      %s157 = sadd.s32 %s156, 1
      %s158 = scalar_select %p155, %s156, %s157
      %p161 = pneg %p155
      %p162 = scmp.eq.s32.totalorder %s17, 9
      %p163 = por %p161, %p162
      %p164 = scmp.ne.s32.totalorder %s156, %s159
      %p165 = scmp.eq.s32.totalorder %s17, 0
      %p166 = por %p164, %p165
      %p167 = scmp.ne.s32.totalorder %s156, %s159
      %p168 = scmp.eq.s32.totalorder %s22, 9
      %p169 = por %p167, %p168
      %p170 = scmp.ne.s32.totalorder %s159, %s160
      %p171 = scmp.eq.s32.totalorder %s22, 0
      %p172 = por %p170, %p171
      %p173 = scmp.ne.s32.totalorder %s159, %s160
      %p174 = scmp.eq.s32.totalorder %s23, 9
      %p175 = por %p173, %p174
      %p177 = scmp.ne.s32.totalorder %s160, %s176
      %p178 = scmp.eq.s32.totalorder %s23, 0
      %p179 = por %p177, %p178
      %s180 = ssub.s32 %s24, %s43
      %s181 = ssub.s32 %s25, %s39
      %s182 = sor.u32 %s180, %s181
      %p183 = scmp.eq.s32.totalorder %s182, 0
      %s185 = sadd.s32 %s184, 1
      %s186 = scalar_select %p183, %s184, %s185
      %p189 = pneg %p183
      %p190 = scmp.eq.s32.totalorder %s17, 9
      %p191 = por %p189, %p190
      %p192 = scmp.ne.s32.totalorder %s184, %s187
      %p193 = scmp.eq.s32.totalorder %s17, 0
      %p194 = por %p192, %p193
      %p195 = scmp.ne.s32.totalorder %s184, %s187
      %p196 = scmp.eq.s32.totalorder %s22, 9
      %p197 = por %p195, %p196
      %p198 = scmp.ne.s32.totalorder %s187, %s188
      %p199 = scmp.eq.s32.totalorder %s22, 0
      %p200 = por %p198, %p199
      %p201 = scmp.ne.s32.totalorder %s187, %s188
      %p202 = scmp.eq.s32.totalorder %s23, 9
      %p203 = por %p201, %p202
      %p205 = scmp.ne.s32.totalorder %s188, %s204
      %p206 = scmp.eq.s32.totalorder %s23, 0
      %p207 = por %p205, %p206
      %p208 = scmp.le.s32.totalorder 1, %s17
      %p209 = scmp.lt.s32.totalorder %s17, 11
      %p210 = pnand %p208, %p209
      %p211 = pneg %p210
      // Predicated region
      $region9: #{regression_differential_tree_forward.1} parent=5 // pred_check
        _
      $region10: #{regression_differential_tree_forward.1} parent=5 // pred_check_branch
        %213 = sbr.rel (%p210) target = $region12
      $region11: #{regression_differential_tree_forward.1} parent=5 // pred_region
        %s214 = ssub.s32 %s17, 1
        // Predicated region
        $region13: #{regression_differential_tree_forward.1} parent=11 // pred_check
          %p215 = pneg %p62
        $region14: #{regression_differential_tree_forward.1} parent=11 // pred_check_branch
          %217 = sbr.rel (%p215) target = $region16
        $region15: #{regression_differential_tree_forward.1} parent=11 // pred_region
          %s218 = smul.u32 2, %s28
          %p219 = scmp.lt.s32.totalorder %s218, 1
          %s220 = scalar_select %p219, %s218, 1
          %s221 = smul.addr %s220, 4
          %s222 = scalar_lea.vmem %s0, %s221
          %s223 = smul.u32 2, %s28
        $region16: #{regression_differential_tree_forward.1} parent=11 // pred_fallthru
          _
      $region12: #{regression_differential_tree_forward.1} parent=5 // pred_fallthru
        _
      %p224 = scmp.lt.s32.totalorder %s17, 10
      // Predicated region
      $region17: #{regression_differential_tree_forward.1} parent=5 // pred_check
        %p225 = pneg %p224
      $region18: #{regression_differential_tree_forward.1} parent=5 // pred_check_branch
        %227 = sbr.rel (%p225) target = $region20
      $region19: #{regression_differential_tree_forward.1} parent=5 // pred_region
        // Predicated region
        $region21: #{regression_differential_tree_forward.1} parent=19 // pred_check
          %p228 = pneg %p84
        $region22: #{regression_differential_tree_forward.1} parent=19 // pred_check_branch
          %230 = sbr.rel (%p228) target = $region24
        $region23: #{regression_differential_tree_forward.1} parent=19 // pred_region
          %s231 = sand.u32 %s74, 1
          %s232 = scalar_lea.sflag [#allocation4], %s231
          %s233 = sand.u32 %s74, 1
          %s234 = smul.addr %s233, 48
          %s235 = scalar_lea.vmem [#allocation3], %s234
          %s237 = ssub.s32 768, 768
          %238 = vsyncadd %s232, %s237
          %s239 = smul.addr %s26, 12
          %s240 = smul.addr %s24, 24
          %s241 = sadd.s32 %s239, %s240
          %s242 = smul.addr %s241, 64
          %s243 = scalar_lea.hbm %s1, %s242
          %s244 = sshll.u32 %s235, 4
          %s245 = int_to_ptr.vmem [resolvable:$true] %s244
          %250 = dma.hbm_to_vmem [thread:$0]  %s243, 768, %s245, %s232, 384, 384, 24
        $region24: #{regression_differential_tree_forward.1} parent=19 // pred_fallthru
          _
        // Predicated region
        $region25: #{regression_differential_tree_forward.1} parent=19 // pred_check
          %p251 = pneg %p110
        $region26: #{regression_differential_tree_forward.1} parent=19 // pred_check_branch
          %253 = sbr.rel (%p251) target = $region28
        $region27: #{regression_differential_tree_forward.1} parent=19 // pred_region
          %s254 = sand.u32 %s17, 1
          %s255 = scalar_lea.sflag [#allocation6], %s254
          %s256 = sand.u32 %s100, 1
          %s257 = smul.addr %s256, 768
          %s258 = scalar_lea.vmem [#allocation5], %s257
          %s260 = ssub.s32 12288, 12288
          %261 = vsyncadd %s255, %s260
          %s262 = smul.addr %s24, 192
          %s263 = smul.addr %s262, 64
          %s264 = scalar_lea.hbm %s2, %s263
          %s265 = sshll.u32 %s258, 4
          %s266 = int_to_ptr.vmem [resolvable:$true] %s265
          %271 = dma.hbm_to_vmem [thread:$0]  %s264, 12288, %s266, %s255, 384, 384, 24
        $region28: #{regression_differential_tree_forward.1} parent=19 // pred_fallthru
          _
        // Predicated region
        $region29: #{regression_differential_tree_forward.1} parent=19 // pred_check
          %p272 = pneg %p138
        $region30: #{regression_differential_tree_forward.1} parent=19 // pred_check_branch
          %274 = sbr.rel (%p272) target = $region32
        $region31: #{regression_differential_tree_forward.1} parent=19 // pred_region
          %p275 = scmp.lt.s32.totalorder %s24, 4
          %s276 = scalar_select %p275, %s24, 4
          %p277 = scmp.lt.s32.totalorder %s26, 1
          %s278 = scalar_select %p277, %s26, 1
          %s279 = smul.addr %s276, 2
          %s280 = sadd.s32 %s278, %s279
          %s281 = smul.addr %s280, 8
          %s282 = scalar_lea.vmem %s3, %s281
        $region32: #{regression_differential_tree_forward.1} parent=19 // pred_fallthru
          _
        // Predicated region
        $region33: #{regression_differential_tree_forward.1} parent=19 // pred_check
          %p283 = pneg %p166
        $region34: #{regression_differential_tree_forward.1} parent=19 // pred_check_branch
          %285 = sbr.rel (%p283) target = $region36
        $region35: #{regression_differential_tree_forward.1} parent=19 // pred_region
          %s286 = sand.u32 %s17, 1
          %s287 = scalar_lea.sflag [#allocation6], %s286
          %s288 = sand.u32 %s156, 1
          %s289 = smul.addr %s288, 64
          %s290 = scalar_lea.vmem [#allocation7], %s289
          %s292 = ssub.s32 1024, 1024
          %293 = vsyncadd %s287, %s292
          %s294 = smul.addr %s26, 16
          %s295 = smul.addr %s24, 32
          %s296 = sadd.s32 %s294, %s295
          %s297 = smul.addr %s296, 64
          %s298 = scalar_lea.hbm %s4, %s297
          %s299 = sshll.u32 %s290, 4
          %s300 = int_to_ptr.vmem [resolvable:$true] %s299
          %305 = dma.hbm_to_vmem [thread:$0]  %s298, 1024, %s300, %s287, 64, 64, 4
        $region36: #{regression_differential_tree_forward.1} parent=19 // pred_fallthru
          _
      $region20: #{regression_differential_tree_forward.1} parent=5 // pred_fallthru
        _
      %p306 = scmp.le.s32.totalorder 1, %s17
      %p307 = scmp.lt.s32.totalorder %s17, 11
      %p308 = pnand %p306, %p307
      %p309 = pneg %p308
      // Predicated region
      $region37: #{regression_differential_tree_forward.1} parent=5 // pred_check
        _
      $region38: #{regression_differential_tree_forward.1} parent=5 // pred_check_branch
        %311 = sbr.rel (%p308) target = $region40
      $region39: #{regression_differential_tree_forward.1} parent=5 // pred_region
        %s312 = ssub.s32 %s17, 1
        %s313 = sand.u32 %s77, 1
        %s314 = scalar_lea.sflag [#allocation4], %s313
        %s315 = sand.u32 %s77, 1
        %s316 = smul.addr %s315, 48
        %s317 = scalar_lea.vmem [#allocation3], %s316
        // Predicated region
        $region41: #{regression_differential_tree_forward.1} parent=39 // pred_check
          %p318 = pneg %p90
        $region42: #{regression_differential_tree_forward.1} parent=39 // pred_check_branch
          %320 = sbr.rel (%p318) target = $region44
        $region43: #{regression_differential_tree_forward.1} parent=39 // pred_region
          %321 = dma.done %s314, 768
        $region44: #{regression_differential_tree_forward.1} parent=39 // pred_fallthru
          _
        %s322 = sand.u32 %s22, 1
        %s323 = scalar_lea.sflag [#allocation6], %s322
        %s324 = sand.u32 %s103, 1
        %s325 = smul.addr %s324, 768
        %s326 = scalar_lea.vmem [#allocation5], %s325
        // Predicated region
        $region45: #{regression_differential_tree_forward.1} parent=39 // pred_check
          %p327 = pneg %p116
        $region46: #{regression_differential_tree_forward.1} parent=39 // pred_check_branch
          %329 = sbr.rel (%p327) target = $region48
        $region47: #{regression_differential_tree_forward.1} parent=39 // pred_region
          %330 = dma.done %s323, 12288
        $region48: #{regression_differential_tree_forward.1} parent=39 // pred_fallthru
          _
        %s331 = sand.u32 %s22, 1
        %s332 = scalar_lea.sflag [#allocation6], %s331
        %s333 = sand.u32 %s159, 1
        %s334 = smul.addr %s333, 64
        %s335 = scalar_lea.vmem [#allocation7], %s334
        // Predicated region
        $region49: #{regression_differential_tree_forward.1} parent=39 // pred_check
          %p336 = pneg %p172
        $region50: #{regression_differential_tree_forward.1} parent=39 // pred_check_branch
          %338 = sbr.rel (%p336) target = $region52
        $region51: #{regression_differential_tree_forward.1} parent=39 // pred_region
          %339 = dma.done %s332, 1024
        $region52: #{regression_differential_tree_forward.1} parent=39 // pred_fallthru
          _
        %s340 = smul.u32 2, %s28
        %p341 = scmp.lt.s32.totalorder %s340, 1
        %s342 = scalar_select %p341, %s340, 1
        %s343 = smul.addr %s342, 4
        %s344 = scalar_lea.vmem %s0, %s343
        %p345 = pneg %p62
        %p346 = pneg %p59
        %s347 = sand.u32 %s77, 1
        %s348 = scalar_lea.sflag [#allocation4], %s347
        %s349 = sand.u32 %s77, 1
        %s350 = smul.addr %s349, 48
        %s351 = scalar_lea.vmem [#allocation3], %s350
        %p352 = pneg %p90
        %p353 = pneg %p87
        %s354 = sand.u32 %s22, 1
        %s355 = scalar_lea.sflag [#allocation6], %s354
        %s356 = sand.u32 %s103, 1
        %s357 = smul.addr %s356, 768
        %s358 = scalar_lea.vmem [#allocation5], %s357
        %p359 = pneg %p116
        %p360 = pneg %p113
        %p361 = scmp.lt.s32.totalorder %s27, 4
        %s362 = scalar_select %p361, %s27, 4
        %p363 = scmp.lt.s32.totalorder %s29, 1
        %s364 = scalar_select %p363, %s29, 1
        %s365 = smul.addr %s362, 2
        %s366 = sadd.s32 %s364, %s365
        %s367 = smul.addr %s366, 8
        %s368 = scalar_lea.vmem %s3, %s367
        %p369 = pneg %p144
        %p370 = pneg %p141
        %s371 = sand.u32 %s22, 1
        %s372 = scalar_lea.sflag [#allocation6], %s371
        %s373 = sand.u32 %s159, 1
        %s374 = smul.addr %s373, 64
        %s375 = scalar_lea.vmem [#allocation7], %s374
        %p376 = pneg %p172
        %p377 = pneg %p169
        %p378 = pneg %p200
        %p379 = pneg %p197
        %s380 = smul.u32 2, %s28
        %p381 = scmp.lt.s32.totalorder %s27, 4
        %s382 = scalar_select %p381, %s27, 4
        %p383 = scmp.lt.s32.totalorder %s380, 1
        %s384 = scalar_select %p383, %s380, 1
        %s385 = smul.addr %s382, 2
        %s386 = sadd.s32 %s384, %s385
        %s387 = smul.addr %s386, 8
        %s388 = scalar_lea.vmem %s5, %s387
        %s389 = smul.u32 2, %s28
        %p390 = scmp.lt.s32.totalorder %s389, 1
        %s391 = scalar_select %p390, %s389, 1
        %s392 = smul.addr %s391, 4
        %s393 = scalar_lea.vmem %s0, %s392
        %s394 = smul.u32 2, %s28
        %p395 = scmp.lt.s32.totalorder %s27, 4
        %s396 = scalar_select %p395, %s27, 4
        %p397 = scmp.lt.s32.totalorder %s29, 1
        %s398 = scalar_select %p397, %s29, 1
        %s399 = smul.addr %s396, 2
        %s400 = sadd.s32 %s398, %s399
        %s401 = smul.addr %s400, 8
        %s402 = scalar_lea.vmem %s3, %s401
        %s403 = smul.u32 2, %s28
        %p404 = scmp.lt.s32.totalorder %s27, 4
        %s405 = scalar_select %p404, %s27, 4
        %p406 = scmp.lt.s32.totalorder %s403, 1
        %s407 = scalar_select %p406, %s403, 1
        %s408 = smul.addr %s405, 2
        %s409 = sadd.s32 %s407, %s408
        %s410 = smul.addr %s409, 8
        %s411 = scalar_lea.vmem %s5, %s410
        %s412 = smul.u32 2, %s28
        %p414 = scmp.eq.s32.totalorder %s29, 0
        // Predicated region
        $region53: #{regression_differential_tree_forward.1} parent=39 // pred_check
          %p415 = pneg %p414
        $region54: #{regression_differential_tree_forward.1} parent=39 // pred_check_branch
          %417 = sbr.rel (%p415) target = $region56
        $region55: #{regression_differential_tree_forward.1} parent=39 // pred_region
          %418 = vst [vmem:[#allocation2] sm:$0xff] 0
          %419 = vst [vmem:[#allocation2 + $0x8] sm:$0xff] 0
        $region56: #{regression_differential_tree_forward.1} parent=39 // pred_fallthru
          _
        %v420 = vld [vmem:[%s393] sm:$0xf]
        %v421 = vld [vmem:[%s393 + $0x4] sm:$0xf]
        %v422 = vld [vmem:[%s317] sm:$0xff]
        %v423 = vld [vmem:[%s317 + $0x8] sm:$0xff]
        %v424 = vld [vmem:[%s317 + $0x10] sm:$0xff]
        %v425 = vld [vmem:[%s317 + $0x18] sm:$0xff]
        %v426 = vld [vmem:[%s317 + $0x20] sm:$0xff]
        %v427 = vld [vmem:[%s317 + $0x28] sm:$0xff]
        %v428 = vld [vmem:[#allocation2] sm:$0xff]
        %v429 = vld [vmem:[#allocation2 + $0x8] sm:$0xff]
        %v430 = vld [vmem:[%s326] sm:$0xff]
        %v431 = vld [vmem:[%s326 + $0x8] sm:$0xff]
        %v432 = vld [vmem:[%s326 + $0x10] sm:$0xff]
        %v433 = vld [vmem:[%s326 + $0x18] sm:$0xff]
        %v434 = vld [vmem:[%s326 + $0x20] sm:$0xff]
        %v435 = vld [vmem:[%s326 + $0x28] sm:$0xff]
        %v436 = vld [vmem:[%s326 + $0x30] sm:$0xff]
        %v437 = vld [vmem:[%s326 + $0x38] sm:$0xff]
        %v438 = vld [vmem:[%s326 + $0x40] sm:$0xff]
        %v439 = vld [vmem:[%s326 + $0x48] sm:$0xff]
        %v440 = vld [vmem:[%s326 + $0x50] sm:$0xff]
        %v441 = vld [vmem:[%s326 + $0x58] sm:$0xff]
        %v442 = vld [vmem:[%s326 + $0x60] sm:$0xff]
        %v443 = vld [vmem:[%s326 + $0x68] sm:$0xff]
        %v444 = vld [vmem:[%s326 + $0x70] sm:$0xff]
        %v445 = vld [vmem:[%s326 + $0x78] sm:$0xff]
        %v446 = vld [vmem:[%s326 + $0x80] sm:$0xff]
        %v447 = vld [vmem:[%s326 + $0x88] sm:$0xff]
        %v448 = vld [vmem:[%s326 + $0x90] sm:$0xff]
        %v449 = vld [vmem:[%s326 + $0x98] sm:$0xff]
        %v450 = vld [vmem:[%s326 + $0xa0] sm:$0xff]
        %v451 = vld [vmem:[%s326 + $0xa8] sm:$0xff]
        %v452 = vld [vmem:[%s326 + $0xb0] sm:$0xff]
        %v453 = vld [vmem:[%s326 + $0xb8] sm:$0xff]
        %v454 = vld [vmem:[%s326 + $0xc0] sm:$0xff]
        %v455 = vld [vmem:[%s326 + $0xc8] sm:$0xff]
        %v456 = vld [vmem:[%s326 + $0xd0] sm:$0xff]
        %v457 = vld [vmem:[%s326 + $0xd8] sm:$0xff]
        %v458 = vld [vmem:[%s326 + $0xe0] sm:$0xff]
        %v459 = vld [vmem:[%s326 + $0xe8] sm:$0xff]
        %v460 = vld [vmem:[%s326 + $0xf0] sm:$0xff]
        %v461 = vld [vmem:[%s326 + $0xf8] sm:$0xff]
        %v462 = vld [vmem:[%s326 + $0x100] sm:$0xff]
        %v463 = vld [vmem:[%s326 + $0x108] sm:$0xff]
        %v464 = vld [vmem:[%s326 + $0x110] sm:$0xff]
        %v465 = vld [vmem:[%s326 + $0x118] sm:$0xff]
        %v466 = vld [vmem:[%s326 + $0x120] sm:$0xff]
        %v467 = vld [vmem:[%s326 + $0x128] sm:$0xff]
        %v468 = vld [vmem:[%s326 + $0x130] sm:$0xff]
        %v469 = vld [vmem:[%s326 + $0x138] sm:$0xff]
        %v470 = vld [vmem:[%s326 + $0x140] sm:$0xff]
        %v471 = vld [vmem:[%s326 + $0x148] sm:$0xff]
        %v472 = vld [vmem:[%s326 + $0x150] sm:$0xff]
        %v473 = vld [vmem:[%s326 + $0x158] sm:$0xff]
        %v474 = vld [vmem:[%s326 + $0x160] sm:$0xff]
        %v475 = vld [vmem:[%s326 + $0x168] sm:$0xff]
        %v476 = vld [vmem:[%s326 + $0x170] sm:$0xff]
        %v477 = vld [vmem:[%s326 + $0x178] sm:$0xff]
        %v478 = vld [vmem:[%s326 + $0x180] sm:$0xff]
        %v479 = vld [vmem:[%s326 + $0x188] sm:$0xff]
        %v480 = vld [vmem:[%s326 + $0x190] sm:$0xff]
        %v481 = vld [vmem:[%s326 + $0x198] sm:$0xff]
        %v482 = vld [vmem:[%s326 + $0x1a0] sm:$0xff]
        %v483 = vld [vmem:[%s326 + $0x1a8] sm:$0xff]
        %v484 = vld [vmem:[%s326 + $0x1b0] sm:$0xff]
        %v485 = vld [vmem:[%s326 + $0x1b8] sm:$0xff]
        %v486 = vld [vmem:[%s326 + $0x1c0] sm:$0xff]
        %v487 = vld [vmem:[%s326 + $0x1c8] sm:$0xff]
        %v488 = vld [vmem:[%s326 + $0x1d0] sm:$0xff]
        %v489 = vld [vmem:[%s326 + $0x1d8] sm:$0xff]
        %v490 = vld [vmem:[%s326 + $0x1e0] sm:$0xff]
        %v491 = vld [vmem:[%s326 + $0x1e8] sm:$0xff]
        %v492 = vld [vmem:[%s326 + $0x1f0] sm:$0xff]
        %v493 = vld [vmem:[%s326 + $0x1f8] sm:$0xff]
        %v494 = vld [vmem:[%s326 + $0x200] sm:$0xff]
        %v495 = vld [vmem:[%s326 + $0x208] sm:$0xff]
        %v496 = vld [vmem:[%s326 + $0x210] sm:$0xff]
        %v497 = vld [vmem:[%s326 + $0x218] sm:$0xff]
        %v498 = vld [vmem:[%s326 + $0x220] sm:$0xff]
        %v499 = vld [vmem:[%s326 + $0x228] sm:$0xff]
        %v500 = vld [vmem:[%s326 + $0x230] sm:$0xff]
        %v501 = vld [vmem:[%s326 + $0x238] sm:$0xff]
        %v502 = vld [vmem:[%s326 + $0x240] sm:$0xff]
        %v503 = vld [vmem:[%s326 + $0x248] sm:$0xff]
        %v504 = vld [vmem:[%s326 + $0x250] sm:$0xff]
        %v505 = vld [vmem:[%s326 + $0x258] sm:$0xff]
        %v506 = vld [vmem:[%s326 + $0x260] sm:$0xff]
        %v507 = vld [vmem:[%s326 + $0x268] sm:$0xff]
        %v508 = vld [vmem:[%s326 + $0x270] sm:$0xff]
        %v509 = vld [vmem:[%s326 + $0x278] sm:$0xff]
        %v510 = vld [vmem:[%s326 + $0x280] sm:$0xff]
        %v511 = vld [vmem:[%s326 + $0x288] sm:$0xff]
        %v512 = vld [vmem:[%s326 + $0x290] sm:$0xff]
        %v513 = vld [vmem:[%s326 + $0x298] sm:$0xff]
        %v514 = vld [vmem:[%s326 + $0x2a0] sm:$0xff]
        %v515 = vld [vmem:[%s326 + $0x2a8] sm:$0xff]
        %v516 = vld [vmem:[%s326 + $0x2b0] sm:$0xff]
        %v517 = vld [vmem:[%s326 + $0x2b8] sm:$0xff]
        %v518 = vld [vmem:[%s326 + $0x2c0] sm:$0xff]
        %v519 = vld [vmem:[%s326 + $0x2c8] sm:$0xff]
        %v520 = vld [vmem:[%s326 + $0x2d0] sm:$0xff]
        %v521 = vld [vmem:[%s326 + $0x2d8] sm:$0xff]
        %v522 = vld [vmem:[%s326 + $0x2e0] sm:$0xff]
        %v523 = vld [vmem:[%s326 + $0x2e8] sm:$0xff]
        %v524 = vld [vmem:[%s326 + $0x2f0] sm:$0xff]
        %v525 = vld [vmem:[%s326 + $0x2f8] sm:$0xff]
        %v622 = vunpack.c.l.b16 %v430
        %v623 = vunpack.c.h.b16 %v430
        %v624 = vunpack.c.l.b16 %v431
        %v625 = vunpack.c.h.b16 %v431
        %v626 = vunpack.c.l.b16 %v432
        %v627 = vunpack.c.h.b16 %v432
        %v628 = vunpack.c.l.b16 %v433
        %v629 = vunpack.c.h.b16 %v433
        %v630 = vunpack.c.l.b16 %v434
        %v631 = vunpack.c.h.b16 %v434
        %v632 = vunpack.c.l.b16 %v435
        %v633 = vunpack.c.h.b16 %v435
        %v634 = vunpack.c.l.b16 %v436
        %v635 = vunpack.c.h.b16 %v436
        %v636 = vunpack.c.l.b16 %v437
        %v637 = vunpack.c.h.b16 %v437
        %v638 = vunpack.c.l.b16 %v438
        %v639 = vunpack.c.h.b16 %v438
        %v640 = vunpack.c.l.b16 %v439
        %v641 = vunpack.c.h.b16 %v439
        %v642 = vunpack.c.l.b16 %v440
        %v643 = vunpack.c.h.b16 %v440
        %v644 = vunpack.c.l.b16 %v441
        %v645 = vunpack.c.h.b16 %v441
        %v646 = vunpack.c.l.b16 %v442
        %v647 = vunpack.c.h.b16 %v442
        %v648 = vunpack.c.l.b16 %v443
        %v649 = vunpack.c.h.b16 %v443
        %v650 = vunpack.c.l.b16 %v444
        %v651 = vunpack.c.h.b16 %v444
        %v652 = vunpack.c.l.b16 %v445
        %v653 = vunpack.c.h.b16 %v445
        %v654 = vunpack.c.l.b16 %v446
        %v655 = vunpack.c.h.b16 %v446
        %v656 = vunpack.c.l.b16 %v447
        %v657 = vunpack.c.h.b16 %v447
        %v658 = vunpack.c.l.b16 %v448
        %v659 = vunpack.c.h.b16 %v448
        %v660 = vunpack.c.l.b16 %v449
        %v661 = vunpack.c.h.b16 %v449
        %v662 = vunpack.c.l.b16 %v450
        %v663 = vunpack.c.h.b16 %v450
        %v664 = vunpack.c.l.b16 %v451
        %v665 = vunpack.c.h.b16 %v451
        %v666 = vunpack.c.l.b16 %v452
        %v667 = vunpack.c.h.b16 %v452
        %v668 = vunpack.c.l.b16 %v453
        %v669 = vunpack.c.h.b16 %v453
        %v670 = vunpack.c.l.b16 %v454
        %v671 = vunpack.c.h.b16 %v454
        %v672 = vunpack.c.l.b16 %v455
        %v673 = vunpack.c.h.b16 %v455
        %v674 = vunpack.c.l.b16 %v456
        %v675 = vunpack.c.h.b16 %v456
        %v676 = vunpack.c.l.b16 %v457
        %v677 = vunpack.c.h.b16 %v457
        %v678 = vunpack.c.l.b16 %v458
        %v679 = vunpack.c.h.b16 %v458
        %v680 = vunpack.c.l.b16 %v459
        %v681 = vunpack.c.h.b16 %v459
        %v682 = vunpack.c.l.b16 %v460
        %v683 = vunpack.c.h.b16 %v460
        %v684 = vunpack.c.l.b16 %v461
        %v685 = vunpack.c.h.b16 %v461
        %v686 = vunpack.c.l.b16 %v462
        %v687 = vunpack.c.h.b16 %v462
        %v688 = vunpack.c.l.b16 %v463
        %v689 = vunpack.c.h.b16 %v463
        %v690 = vunpack.c.l.b16 %v464
        %v691 = vunpack.c.h.b16 %v464
        %v692 = vunpack.c.l.b16 %v465
        %v693 = vunpack.c.h.b16 %v465
        %v694 = vunpack.c.l.b16 %v466
        %v695 = vunpack.c.h.b16 %v466
        %v696 = vunpack.c.l.b16 %v467
        %v697 = vunpack.c.h.b16 %v467
        %v698 = vunpack.c.l.b16 %v468
        %v699 = vunpack.c.h.b16 %v468
        %v700 = vunpack.c.l.b16 %v469
        %v701 = vunpack.c.h.b16 %v469
        %v702 = vunpack.c.l.b16 %v470
        %v703 = vunpack.c.h.b16 %v470
        %v704 = vunpack.c.l.b16 %v471
        %v705 = vunpack.c.h.b16 %v471
        %v706 = vunpack.c.l.b16 %v472
        %v707 = vunpack.c.h.b16 %v472
        %v708 = vunpack.c.l.b16 %v473
        %v709 = vunpack.c.h.b16 %v473
        %v710 = vunpack.c.l.b16 %v474
        %v711 = vunpack.c.h.b16 %v474
        %v712 = vunpack.c.l.b16 %v475
        %v713 = vunpack.c.h.b16 %v475
        %v714 = vunpack.c.l.b16 %v476
        %v715 = vunpack.c.h.b16 %v476
        %v716 = vunpack.c.l.b16 %v477
        %v717 = vunpack.c.h.b16 %v477
        %v718 = vunpack.c.l.b16 %v478
        %v719 = vunpack.c.h.b16 %v478
        %v720 = vunpack.c.l.b16 %v479
        %v721 = vunpack.c.h.b16 %v479
        %v722 = vunpack.c.l.b16 %v480
        %v723 = vunpack.c.h.b16 %v480
        %v724 = vunpack.c.l.b16 %v481
        %v725 = vunpack.c.h.b16 %v481
        %v726 = vunpack.c.l.b16 %v482
        %v727 = vunpack.c.h.b16 %v482
        %v728 = vunpack.c.l.b16 %v483
        %v729 = vunpack.c.h.b16 %v483
        %v730 = vunpack.c.l.b16 %v484
        %v731 = vunpack.c.h.b16 %v484
        %v732 = vunpack.c.l.b16 %v485
        %v733 = vunpack.c.h.b16 %v485
        %v734 = vunpack.c.l.b16 %v486
        %v735 = vunpack.c.h.b16 %v486
        %v736 = vunpack.c.l.b16 %v487
        %v737 = vunpack.c.h.b16 %v487
        %v738 = vunpack.c.l.b16 %v488
        %v739 = vunpack.c.h.b16 %v488
        %v740 = vunpack.c.l.b16 %v489
        %v741 = vunpack.c.h.b16 %v489
        %v742 = vunpack.c.l.b16 %v490
        %v743 = vunpack.c.h.b16 %v490
        %v744 = vunpack.c.l.b16 %v491
        %v745 = vunpack.c.h.b16 %v491
        %v746 = vunpack.c.l.b16 %v492
        %v747 = vunpack.c.h.b16 %v492
        %v748 = vunpack.c.l.b16 %v493
        %v749 = vunpack.c.h.b16 %v493
        %v750 = vunpack.c.l.b16 %v494
        %v751 = vunpack.c.h.b16 %v494
        %v752 = vunpack.c.l.b16 %v495
        %v753 = vunpack.c.h.b16 %v495
        %v754 = vunpack.c.l.b16 %v496
        %v755 = vunpack.c.h.b16 %v496
        %v756 = vunpack.c.l.b16 %v497
        %v757 = vunpack.c.h.b16 %v497
        %v758 = vunpack.c.l.b16 %v498
        %v759 = vunpack.c.h.b16 %v498
        %v760 = vunpack.c.l.b16 %v499
        %v761 = vunpack.c.h.b16 %v499
        %v762 = vunpack.c.l.b16 %v500
        %v763 = vunpack.c.h.b16 %v500
        %v764 = vunpack.c.l.b16 %v501
        %v765 = vunpack.c.h.b16 %v501
        %v766 = vunpack.c.l.b16 %v502
        %v767 = vunpack.c.h.b16 %v502
        %v768 = vunpack.c.l.b16 %v503
        %v769 = vunpack.c.h.b16 %v503
        %v770 = vunpack.c.l.b16 %v504
        %v771 = vunpack.c.h.b16 %v504
        %v772 = vunpack.c.l.b16 %v505
        %v773 = vunpack.c.h.b16 %v505
        %v774 = vunpack.c.l.b16 %v506
        %v775 = vunpack.c.h.b16 %v506
        %v776 = vunpack.c.l.b16 %v507
        %v777 = vunpack.c.h.b16 %v507
        %v778 = vunpack.c.l.b16 %v508
        %v779 = vunpack.c.h.b16 %v508
        %v780 = vunpack.c.l.b16 %v509
        %v781 = vunpack.c.h.b16 %v509
        %v782 = vunpack.c.l.b16 %v510
        %v783 = vunpack.c.h.b16 %v510
        %v784 = vunpack.c.l.b16 %v511
        %v785 = vunpack.c.h.b16 %v511
        %v786 = vunpack.c.l.b16 %v512
        %v787 = vunpack.c.h.b16 %v512
        %v788 = vunpack.c.l.b16 %v513
        %v789 = vunpack.c.h.b16 %v513
        %v790 = vunpack.c.l.b16 %v514
        %v791 = vunpack.c.h.b16 %v514
        %v792 = vunpack.c.l.b16 %v515
        %v793 = vunpack.c.h.b16 %v515
        %v794 = vunpack.c.l.b16 %v516
        %v795 = vunpack.c.h.b16 %v516
        %v796 = vunpack.c.l.b16 %v517
        %v797 = vunpack.c.h.b16 %v517
        %v798 = vunpack.c.l.b16 %v518
        %v799 = vunpack.c.h.b16 %v518
        %v800 = vunpack.c.l.b16 %v519
        %v801 = vunpack.c.h.b16 %v519
        %v802 = vunpack.c.l.b16 %v520
        %v803 = vunpack.c.h.b16 %v520
        %v804 = vunpack.c.l.b16 %v521
        %v805 = vunpack.c.h.b16 %v521
        %v806 = vunpack.c.l.b16 %v522
        %v807 = vunpack.c.h.b16 %v522
        %v808 = vunpack.c.l.b16 %v523
        %v809 = vunpack.c.h.b16 %v523
        %v810 = vunpack.c.l.b16 %v524
        %v811 = vunpack.c.h.b16 %v524
        %v812 = vunpack.c.l.b16 %v525
        %v813 = vunpack.c.h.b16 %v525
        %v814 = vpack.c.b16 %v628, %v622
        %v815 = vpack.c.b16 %v629, %v623
        %v816 = vpack.c.b16 %v630, %v624
        %v817 = vpack.c.b16 %v631, %v625
        %v818 = vpack.c.b16 %v632, %v626
        %v819 = vpack.c.b16 %v633, %v627
        %v820 = vpack.c.b16 %v640, %v634
        %v821 = vpack.c.b16 %v641, %v635
        %v822 = vpack.c.b16 %v642, %v636
        %v823 = vpack.c.b16 %v643, %v637
        %v824 = vpack.c.b16 %v644, %v638
        %v825 = vpack.c.b16 %v645, %v639
        %v826 = vpack.c.b16 %v652, %v646
        %v827 = vpack.c.b16 %v653, %v647
        %v828 = vpack.c.b16 %v654, %v648
        %v829 = vpack.c.b16 %v655, %v649
        %v830 = vpack.c.b16 %v656, %v650
        %v831 = vpack.c.b16 %v657, %v651
        %v832 = vpack.c.b16 %v664, %v658
        %v833 = vpack.c.b16 %v665, %v659
        %v834 = vpack.c.b16 %v666, %v660
        %v835 = vpack.c.b16 %v667, %v661
        %v836 = vpack.c.b16 %v668, %v662
        %v837 = vpack.c.b16 %v669, %v663
        %v838 = vpack.c.b16 %v676, %v670
        %v839 = vpack.c.b16 %v677, %v671
        %v840 = vpack.c.b16 %v678, %v672
        %v841 = vpack.c.b16 %v679, %v673
        %v842 = vpack.c.b16 %v680, %v674
        %v843 = vpack.c.b16 %v681, %v675
        %v844 = vpack.c.b16 %v688, %v682
        %v845 = vpack.c.b16 %v689, %v683
        %v846 = vpack.c.b16 %v690, %v684
        %v847 = vpack.c.b16 %v691, %v685
        %v848 = vpack.c.b16 %v692, %v686
        %v849 = vpack.c.b16 %v693, %v687
        %v850 = vpack.c.b16 %v700, %v694
        %v851 = vpack.c.b16 %v701, %v695
        %v852 = vpack.c.b16 %v702, %v696
        %v853 = vpack.c.b16 %v703, %v697
        %v854 = vpack.c.b16 %v704, %v698
        %v855 = vpack.c.b16 %v705, %v699
        %v856 = vpack.c.b16 %v712, %v706
        %v857 = vpack.c.b16 %v713, %v707
        %v858 = vpack.c.b16 %v714, %v708
        %v859 = vpack.c.b16 %v715, %v709
        %v860 = vpack.c.b16 %v716, %v710
        %v861 = vpack.c.b16 %v717, %v711
        %v862 = vpack.c.b16 %v724, %v718
        %v863 = vpack.c.b16 %v725, %v719
        %v864 = vpack.c.b16 %v726, %v720
        %v865 = vpack.c.b16 %v727, %v721
        %v866 = vpack.c.b16 %v728, %v722
        %v867 = vpack.c.b16 %v729, %v723
        %v868 = vpack.c.b16 %v736, %v730
        %v869 = vpack.c.b16 %v737, %v731
        %v870 = vpack.c.b16 %v738, %v732
        %v871 = vpack.c.b16 %v739, %v733
        %v872 = vpack.c.b16 %v740, %v734
        %v873 = vpack.c.b16 %v741, %v735
        %v874 = vpack.c.b16 %v748, %v742
        %v875 = vpack.c.b16 %v749, %v743
        %v876 = vpack.c.b16 %v750, %v744
        %v877 = vpack.c.b16 %v751, %v745
        %v878 = vpack.c.b16 %v752, %v746
        %v879 = vpack.c.b16 %v753, %v747
        %v880 = vpack.c.b16 %v760, %v754
        %v881 = vpack.c.b16 %v761, %v755
        %v882 = vpack.c.b16 %v762, %v756
        %v883 = vpack.c.b16 %v763, %v757
        %v884 = vpack.c.b16 %v764, %v758
        %v885 = vpack.c.b16 %v765, %v759
        %v886 = vpack.c.b16 %v772, %v766
        %v887 = vpack.c.b16 %v773, %v767
        %v888 = vpack.c.b16 %v774, %v768
        %v889 = vpack.c.b16 %v775, %v769
        %v890 = vpack.c.b16 %v776, %v770
        %v891 = vpack.c.b16 %v777, %v771
        %v892 = vpack.c.b16 %v784, %v778
        %v893 = vpack.c.b16 %v785, %v779
        %v894 = vpack.c.b16 %v786, %v780
        %v895 = vpack.c.b16 %v787, %v781
        %v896 = vpack.c.b16 %v788, %v782
        %v897 = vpack.c.b16 %v789, %v783
        %v898 = vpack.c.b16 %v796, %v790
        %v899 = vpack.c.b16 %v797, %v791
        %v900 = vpack.c.b16 %v798, %v792
        %v901 = vpack.c.b16 %v799, %v793
        %v902 = vpack.c.b16 %v800, %v794
        %v903 = vpack.c.b16 %v801, %v795
        %v904 = vpack.c.b16 %v808, %v802
        %v905 = vpack.c.b16 %v809, %v803
        %v906 = vpack.c.b16 %v810, %v804
        %v907 = vpack.c.b16 %v811, %v805
        %v908 = vpack.c.b16 %v812, %v806
        %v909 = vpack.c.b16 %v813, %v807
        %1006 = vmatprep.subr.bf16.mxu0 %v815
        %1007 = vmatpush1.bf16.msra.mxu0 %v814
        %1008 = vmatprep.subr.bf16.mxu0 %v821
        %1009 = vmatpush1.bf16.msra.mxu0 %v820
        %1010 = vmatprep.subr.bf16.mxu0 %v827
        %1011 = vmatpush1.bf16.msra.mxu0 %v826
        %1012 = vmatprep.subr.bf16.mxu0 %v833
        %1013 = vmatpush1.bf16.msra.mxu0 %v832
        %1014 = vmatprep.subr.bf16.mxu0 %v839
        %1015 = vmatpush1.bf16.msra.mxu0 %v838
        %1016 = vmatprep.subr.bf16.mxu0 %v845
        %1017 = vmatpush1.bf16.msra.mxu0 %v844
        %1018 = vmatprep.subr.bf16.mxu0 %v851
        %1019 = vmatpush1.bf16.msra.mxu0 %v850
        %1020 = vmatprep.subr.bf16.mxu0 %v857
        %1021 = vmatpush1.bf16.msra.mxu0 %v856
        %1022 = vmatprep.subr.bf16.mxu0 %v863
        %1023 = vmatpush1.bf16.msra.mxu0 %v862
        %1024 = vmatprep.subr.bf16.mxu0 %v869
        %1025 = vmatpush1.bf16.msra.mxu0 %v868
        %1026 = vmatprep.subr.bf16.mxu0 %v875
        %1027 = vmatpush1.bf16.msra.mxu0 %v874
        %1028 = vmatprep.subr.bf16.mxu0 %v881
        %1029 = vmatpush1.bf16.msra.mxu0 %v880
        %1030 = vmatprep.subr.bf16.mxu0 %v887
        %1031 = vmatpush1.bf16.msra.mxu0 %v886
        %1032 = vmatprep.subr.bf16.mxu0 %v893
        %1033 = vmatpush1.bf16.msra.mxu0 %v892
        %1034 = vmatprep.subr.bf16.mxu0 %v899
        %1035 = vmatpush1.bf16.msra.mxu0 %v898
        %1036 = vmatprep.subr.bf16.mxu0 %v905
        %1037 = vmatpush1.bf16.msra.mxu0 %v904
        %1038 = vmatprep.mubr.bf16.mxu0 %v429
        %1039 = vmatmul.mubr.bf16.gmra.mrb[0].mxu0 %v428
        %v1040 = vpop.f32.mrb[0].mxu0
        %v1041 = vadd.f32 0.0, %v1040
        %v1042 = vpop.f32.mrb[0].mxu0
        %v1043 = vadd.f32 0.0, %v1042
        %v1044 = vpop.f32.mrb[0].mxu0
        %v1045 = vadd.f32 0.0, %v1044
        %v1046 = vpop.f32.mrb[0].mxu0
        %v1047 = vadd.f32 0.0, %v1046
        %1048 = vdwg.mxu0
        %1049 = vmatprep.subr.bf16.mxu0 %v817
        %1050 = vmatpush1.bf16.msra.mxu0 %v816
        %1051 = vmatprep.subr.bf16.mxu0 %v823
        %1052 = vmatpush1.bf16.msra.mxu0 %v822
        %1053 = vmatprep.subr.bf16.mxu0 %v829
        %1054 = vmatpush1.bf16.msra.mxu0 %v828
        %1055 = vmatprep.subr.bf16.mxu0 %v835
        %1056 = vmatpush1.bf16.msra.mxu0 %v834
        %1057 = vmatprep.subr.bf16.mxu0 %v841
        %1058 = vmatpush1.bf16.msra.mxu0 %v840
        %1059 = vmatprep.subr.bf16.mxu0 %v847
        %1060 = vmatpush1.bf16.msra.mxu0 %v846
        %1061 = vmatprep.subr.bf16.mxu0 %v853
        %1062 = vmatpush1.bf16.msra.mxu0 %v852
        %1063 = vmatprep.subr.bf16.mxu0 %v859
        %1064 = vmatpush1.bf16.msra.mxu0 %v858
        %1065 = vmatprep.subr.bf16.mxu0 %v865
        %1066 = vmatpush1.bf16.msra.mxu0 %v864
        %1067 = vmatprep.subr.bf16.mxu0 %v871
        %1068 = vmatpush1.bf16.msra.mxu0 %v870
        %1069 = vmatprep.subr.bf16.mxu0 %v877
        %1070 = vmatpush1.bf16.msra.mxu0 %v876
        %1071 = vmatprep.subr.bf16.mxu0 %v883
        %1072 = vmatpush1.bf16.msra.mxu0 %v882
        %1073 = vmatprep.subr.bf16.mxu0 %v889
        %1074 = vmatpush1.bf16.msra.mxu0 %v888
        %1075 = vmatprep.subr.bf16.mxu0 %v895
        %1076 = vmatpush1.bf16.msra.mxu0 %v894
        %1077 = vmatprep.subr.bf16.mxu0 %v901
        %1078 = vmatpush1.bf16.msra.mxu0 %v900
        %1079 = vmatprep.subr.bf16.mxu0 %v907
        %1080 = vmatpush1.bf16.msra.mxu0 %v906
        %1081 = vmatprep.mubr.bf16.mxu0 %v429
        %1082 = vmatmul.mubr.bf16.gmra.mrb[0].mxu0 %v428
        %v1083 = vpop.f32.mrb[0].mxu0
        %v1084 = vadd.f32 0.0, %v1083
        %v1085 = vpop.f32.mrb[0].mxu0
        %v1086 = vadd.f32 0.0, %v1085
        %v1087 = vpop.f32.mrb[0].mxu0
        %v1088 = vadd.f32 0.0, %v1087
        %v1089 = vpop.f32.mrb[0].mxu0
        %v1090 = vadd.f32 0.0, %v1089
        %1091 = vdwg.mxu0
        %1092 = vmatprep.subr.bf16.mxu0 %v819
        %1093 = vmatpush1.bf16.msra.mxu0 %v818
        %1094 = vmatprep.subr.bf16.mxu0 %v825
        %1095 = vmatpush1.bf16.msra.mxu0 %v824
        %1096 = vmatprep.subr.bf16.mxu0 %v831
        %1097 = vmatpush1.bf16.msra.mxu0 %v830
        %1098 = vmatprep.subr.bf16.mxu0 %v837
        %1099 = vmatpush1.bf16.msra.mxu0 %v836
        %1100 = vmatprep.subr.bf16.mxu0 %v843
        %1101 = vmatpush1.bf16.msra.mxu0 %v842
        %1102 = vmatprep.subr.bf16.mxu0 %v849
        %1103 = vmatpush1.bf16.msra.mxu0 %v848
        %1104 = vmatprep.subr.bf16.mxu0 %v855
        %1105 = vmatpush1.bf16.msra.mxu0 %v854
        %1106 = vmatprep.subr.bf16.mxu0 %v861
        %1107 = vmatpush1.bf16.msra.mxu0 %v860
        %1108 = vmatprep.subr.bf16.mxu0 %v867
        %1109 = vmatpush1.bf16.msra.mxu0 %v866
        %1110 = vmatprep.subr.bf16.mxu0 %v873
        %1111 = vmatpush1.bf16.msra.mxu0 %v872
        %1112 = vmatprep.subr.bf16.mxu0 %v879
        %1113 = vmatpush1.bf16.msra.mxu0 %v878
        %1114 = vmatprep.subr.bf16.mxu0 %v885
        %1115 = vmatpush1.bf16.msra.mxu0 %v884
        %1116 = vmatprep.subr.bf16.mxu0 %v891
        %1117 = vmatpush1.bf16.msra.mxu0 %v890
        %1118 = vmatprep.subr.bf16.mxu0 %v897
        %1119 = vmatpush1.bf16.msra.mxu0 %v896
        %1120 = vmatprep.subr.bf16.mxu0 %v903
        %1121 = vmatpush1.bf16.msra.mxu0 %v902
        %1122 = vmatprep.subr.bf16.mxu0 %v909
        %1123 = vmatpush1.bf16.msra.mxu0 %v908
        %1124 = vmatprep.mubr.bf16.mxu0 %v429
        %1125 = vmatmul.mubr.bf16.gmra.mrb[0].mxu0 %v428
        %v1126 = vpop.f32.mrb[0].mxu0
        %v1127 = vadd.f32 0.0, %v1126
        %v1128 = vpop.f32.mrb[0].mxu0
        %v1129 = vadd.f32 0.0, %v1128
        %v1130 = vpop.f32.mrb[0].mxu0
        %v1131 = vadd.f32 0.0, %v1130
        %v1132 = vpop.f32.mrb[0].mxu0
        %v1133 = vadd.f32 0.0, %v1132
        %1134 = vdwg.mxu0
        %v1137 = vunpack.c.l.b16 %v420
        %v1138 = vunpack.c.l.b16 %v421
        %v1139 = vpack.c.b16 %v1138, %v1137
        %v1146 = vunpack.c.l.b16 %v422
        %v1147 = vunpack.c.h.b16 %v422
        %v1148 = vunpack.c.l.b16 %v423
        %v1149 = vunpack.c.h.b16 %v423
        %v1150 = vunpack.c.l.b16 %v424
        %v1151 = vunpack.c.h.b16 %v424
        %v1152 = vunpack.c.l.b16 %v425
        %v1153 = vunpack.c.h.b16 %v425
        %v1154 = vunpack.c.l.b16 %v426
        %v1155 = vunpack.c.h.b16 %v426
        %v1156 = vunpack.c.l.b16 %v427
        %v1157 = vunpack.c.h.b16 %v427
        %v1158 = vpack.c.b16 %v1152, %v1146
        %v1159 = vpack.c.b16 %v1153, %v1147
        %v1160 = vpack.c.b16 %v1154, %v1148
        %v1161 = vpack.c.b16 %v1155, %v1149
        %v1162 = vpack.c.b16 %v1156, %v1150
        %v1163 = vpack.c.b16 %v1157, %v1151
        %vm1170 = vcmask 130048
        %v1172 = vsel %vm1170, %v1139, 0
        %1174 = vmatprep.subr.bf16.mxu0 %v1159
        %1175 = vmatpush1.bf16.msra.mxu0 %v1158
        %1176 = vmatprep.subr.bf16.mxu0 0
        %1177 = vmatpush1.bf16.msra.mxu0 0
        %1178 = vmatprep.subr.bf16.mxu0 0
        %1179 = vmatpush1.bf16.msra.mxu0 0
        %1180 = vmatprep.subr.bf16.mxu0 0
        %1181 = vmatpush1.bf16.msra.mxu0 0
        %1182 = vmatprep.subr.bf16.mxu0 0
        %1183 = vmatpush1.bf16.msra.mxu0 0
        %1184 = vmatprep.subr.bf16.mxu0 0
        %1185 = vmatpush1.bf16.msra.mxu0 0
        %1186 = vmatprep.subr.bf16.mxu0 0
        %1187 = vmatpush1.bf16.msra.mxu0 0
        %1188 = vmatprep.subr.bf16.mxu0 0
        %1189 = vmatpush1.bf16.msra.mxu0 0
        %1190 = vmatprep.subr.bf16.mxu0 0
        %1191 = vmatpush1.bf16.msra.mxu0 0
        %1192 = vmatprep.subr.bf16.mxu0 0
        %1193 = vmatpush1.bf16.msra.mxu0 0
        %1194 = vmatprep.subr.bf16.mxu0 0
        %1195 = vmatpush1.bf16.msra.mxu0 0
        %1196 = vmatprep.subr.bf16.mxu0 0
        %1197 = vmatpush1.bf16.msra.mxu0 0
        %1198 = vmatprep.subr.bf16.mxu0 0
        %1199 = vmatpush1.bf16.msra.mxu0 0
        %1200 = vmatprep.subr.bf16.mxu0 0
        %1201 = vmatpush1.bf16.msra.mxu0 0
        %1202 = vmatprep.subr.bf16.mxu0 0
        %1203 = vmatpush1.bf16.msra.mxu0 0
        %1204 = vmatprep.subr.bf16.mxu0 0
        %1205 = vmatpush1.bf16.msra.mxu0 0
        %1206 = vmatprep.mubr.bf16.mxu0 0
        %1207 = vmatmul.mubr.bf16.gmra.mrb[0].mxu0 %v1172
        %v1208 = vpop.f32.mrb[0].mxu0
        %v1209 = vadd.f32 %v1041, %v1208
        %v1210 = vpop.f32.mrb[0].mxu0
        %v1211 = vadd.f32 %v1043, %v1210
        %v1212 = vpop.f32.mrb[0].mxu0
        %v1213 = vadd.f32 %v1045, %v1212
        %v1214 = vpop.f32.mrb[0].mxu0
        %v1215 = vadd.f32 %v1047, %v1214
        %1216 = vdwg.mxu0
        %1217 = vmatprep.subr.bf16.mxu0 %v1161
        %1218 = vmatpush1.bf16.msra.mxu0 %v1160
        %1219 = vmatprep.subr.bf16.mxu0 0
        %1220 = vmatpush1.bf16.msra.mxu0 0
        %1221 = vmatprep.subr.bf16.mxu0 0
        %1222 = vmatpush1.bf16.msra.mxu0 0
        %1223 = vmatprep.subr.bf16.mxu0 0
        %1224 = vmatpush1.bf16.msra.mxu0 0
        %1225 = vmatprep.subr.bf16.mxu0 0
        %1226 = vmatpush1.bf16.msra.mxu0 0
        %1227 = vmatprep.subr.bf16.mxu0 0
        %1228 = vmatpush1.bf16.msra.mxu0 0
        %1229 = vmatprep.subr.bf16.mxu0 0
        %1230 = vmatpush1.bf16.msra.mxu0 0
        %1231 = vmatprep.subr.bf16.mxu0 0
        %1232 = vmatpush1.bf16.msra.mxu0 0
        %1233 = vmatprep.subr.bf16.mxu0 0
        %1234 = vmatpush1.bf16.msra.mxu0 0
        %1235 = vmatprep.subr.bf16.mxu0 0
        %1236 = vmatpush1.bf16.msra.mxu0 0
        %1237 = vmatprep.subr.bf16.mxu0 0
        %1238 = vmatpush1.bf16.msra.mxu0 0
        %1239 = vmatprep.subr.bf16.mxu0 0
        %1240 = vmatpush1.bf16.msra.mxu0 0
        %1241 = vmatprep.subr.bf16.mxu0 0
        %1242 = vmatpush1.bf16.msra.mxu0 0
        %1243 = vmatprep.subr.bf16.mxu0 0
        %1244 = vmatpush1.bf16.msra.mxu0 0
        %1245 = vmatprep.subr.bf16.mxu0 0
        %1246 = vmatpush1.bf16.msra.mxu0 0
        %1247 = vmatprep.subr.bf16.mxu0 0
        %1248 = vmatpush1.bf16.msra.mxu0 0
        %1249 = vmatprep.mubr.bf16.mxu0 0
        %1250 = vmatmul.mubr.bf16.gmra.mrb[0].mxu0 %v1172
        %v1251 = vpop.f32.mrb[0].mxu0
        %v1252 = vadd.f32 %v1084, %v1251
        %v1253 = vpop.f32.mrb[0].mxu0
        %v1254 = vadd.f32 %v1086, %v1253
        %v1255 = vpop.f32.mrb[0].mxu0
        %v1256 = vadd.f32 %v1088, %v1255
        %v1257 = vpop.f32.mrb[0].mxu0
        %v1258 = vadd.f32 %v1090, %v1257
        %1259 = vdwg.mxu0
        %1260 = vmatprep.subr.bf16.mxu0 %v1163
        %1261 = vmatpush1.bf16.msra.mxu0 %v1162
        %1262 = vmatprep.subr.bf16.mxu0 0
        %1263 = vmatpush1.bf16.msra.mxu0 0
        %1264 = vmatprep.subr.bf16.mxu0 0
        %1265 = vmatpush1.bf16.msra.mxu0 0
        %1266 = vmatprep.subr.bf16.mxu0 0
        %1267 = vmatpush1.bf16.msra.mxu0 0
        %1268 = vmatprep.subr.bf16.mxu0 0
        %1269 = vmatpush1.bf16.msra.mxu0 0
        %1270 = vmatprep.subr.bf16.mxu0 0
        %1271 = vmatpush1.bf16.msra.mxu0 0
        %1272 = vmatprep.subr.bf16.mxu0 0
        %1273 = vmatpush1.bf16.msra.mxu0 0
        %1274 = vmatprep.subr.bf16.mxu0 0
        %1275 = vmatpush1.bf16.msra.mxu0 0
        %1276 = vmatprep.subr.bf16.mxu0 0
        %1277 = vmatpush1.bf16.msra.mxu0 0
        %1278 = vmatprep.subr.bf16.mxu0 0
        %1279 = vmatpush1.bf16.msra.mxu0 0
        %1280 = vmatprep.subr.bf16.mxu0 0
        %1281 = vmatpush1.bf16.msra.mxu0 0
        %1282 = vmatprep.subr.bf16.mxu0 0
        %1283 = vmatpush1.bf16.msra.mxu0 0
        %1284 = vmatprep.subr.bf16.mxu0 0
        %1285 = vmatpush1.bf16.msra.mxu0 0
        %1286 = vmatprep.subr.bf16.mxu0 0
        %1287 = vmatpush1.bf16.msra.mxu0 0
        %1288 = vmatprep.subr.bf16.mxu0 0
        %1289 = vmatpush1.bf16.msra.mxu0 0
        %1290 = vmatprep.subr.bf16.mxu0 0
        %1291 = vmatpush1.bf16.msra.mxu0 0
        %1292 = vmatprep.mubr.bf16.mxu0 0
        %1293 = vmatmul.mubr.bf16.gmra.mrb[0].mxu0 %v1172
        %v1294 = vpop.f32.mrb[0].mxu0
        %v1295 = vadd.f32 %v1127, %v1294
        %v1296 = vpop.f32.mrb[0].mxu0
        %v1297 = vadd.f32 %v1129, %v1296
        %v1298 = vpop.f32.mrb[0].mxu0
        %v1299 = vadd.f32 %v1131, %v1298
        %v1300 = vpop.f32.mrb[0].mxu0
        %v1301 = vadd.f32 %v1133, %v1300
        %1302 = vdwg.mxu0
        %v1303 = vld [vmem:[%s402] sm:$0x3f]
        %v1304 = vlaneseq
        %v1305 = vshrl.u32 %v1304, 7
        %v1306 = vsub.s32 0, %v1305
        %v1307 = vrot.slane %v1303, %v1306
        %v1308 = vsub.f32 %v1209, %v1307
        %v1309 = vsub.f32 %v1213, %v1307
        %v1310 = vmax.f32 %v1308, -1.0
        %v1311 = vmax.f32 %v1309, -1.0
        %v1312 = vmin.f32 %v1310, 1.0
        %v1313 = vmin.f32 %v1311, 1.0
        %v1314 = vmul.f32 %v1312, %v1312
        %v1315 = vmul.f32 %v1313, %v1313
        %v1316 = vsub.f32 2.0, %v1314
        %v1317 = vsub.f32 2.0, %v1315
        %v1318 = vrsqrt.pop %v1316
        %v1319 = vmul.f32 %v1316, %v1318
        %vm1320 = vcmp.eq.f32.partialorder %v1316, inf
        %v1321 = vsel %vm1320, %v1316, %v1319
        %vm1322 = vcmp.eq.f32.partialorder %v1316, 0.0
        %v1323 = vand.u32 %v1316, 2147483648
        %v1324 = vsel %vm1322, %v1323, %v1321
        %v1325 = vrsqrt.pop %v1317
        %v1326 = vmul.f32 %v1317, %v1325
        %vm1327 = vcmp.eq.f32.partialorder %v1317, inf
        %v1328 = vsel %vm1327, %v1317, %v1326
        %vm1329 = vcmp.eq.f32.partialorder %v1317, 0.0
        %v1330 = vand.u32 %v1317, 2147483648
        %v1331 = vsel %vm1329, %v1330, %v1328
        %v1332 = vadd.f32 %v1324, %v1312
        %v1333 = vadd.f32 %v1331, %v1313
        %v1334 = vmul.f32 %v1332, 0.5
        %v1335 = vmul.f32 %v1333, 0.5
        %v1336 = vmul.f32 %v1334, %v1334
        %v1337 = vmul.f32 %v1335, %v1335
        %v1338 = vsub.f32 1.0, %v1336
        %v1339 = vsub.f32 1.0, %v1337
        %v1340 = vlaneseq
        %v1341 = vshrl.u32 %v1340, 7
        %v1342 = vsub.s32 1, %v1341
        %v1343 = vrot.slane %v1303, %v1342
        %v1344 = vsub.f32 %v1211, %v1343
        %v1345 = vsub.f32 %v1215, %v1343
        %v1346 = vmax.f32 %v1344, -1.0
        %v1347 = vmax.f32 %v1345, -1.0
        %v1348 = vmin.f32 %v1346, 1.0
        %v1349 = vmin.f32 %v1347, 1.0
        %v1350 = vmul.f32 %v1348, %v1348
        %v1351 = vmul.f32 %v1349, %v1349
        %v1352 = vsub.f32 2.0, %v1350
        %v1353 = vsub.f32 2.0, %v1351
        %v1354 = vrsqrt.pop %v1352
        %v1355 = vmul.f32 %v1352, %v1354
        %vm1356 = vcmp.eq.f32.partialorder %v1352, inf
        %v1357 = vsel %vm1356, %v1352, %v1355
        %vm1358 = vcmp.eq.f32.partialorder %v1352, 0.0
        %v1359 = vand.u32 %v1352, 2147483648
        %v1360 = vsel %vm1358, %v1359, %v1357
        %v1361 = vrsqrt.pop %v1353
        %v1362 = vmul.f32 %v1353, %v1361
        %vm1363 = vcmp.eq.f32.partialorder %v1353, inf
        %v1364 = vsel %vm1363, %v1353, %v1362
        %vm1365 = vcmp.eq.f32.partialorder %v1353, 0.0
        %v1366 = vand.u32 %v1353, 2147483648
        %v1367 = vsel %vm1365, %v1366, %v1364
        %v1368 = vadd.f32 %v1360, %v1348
        %v1369 = vadd.f32 %v1367, %v1349
        %v1370 = vmul.f32 %v1368, 0.5
        %v1371 = vmul.f32 %v1369, 0.5
        %v1372 = vmul.f32 %v1370, %v1370
        %v1373 = vmul.f32 %v1371, %v1371
        %v1374 = vsub.f32 1.0, %v1372
        %v1375 = vsub.f32 1.0, %v1373
        %v1376 = vlaneseq
        %v1377 = vshrl.u32 %v1376, 7
        %v1378 = vsub.s32 2, %v1377
        %v1379 = vrot.slane %v1303, %v1378
        %v1380 = vsub.f32 %v1252, %v1379
        %v1381 = vsub.f32 %v1256, %v1379
        %v1382 = vmax.f32 %v1380, -1.0
        %v1383 = vmax.f32 %v1381, -1.0
        %v1384 = vmin.f32 %v1382, 1.0
        %v1385 = vmin.f32 %v1383, 1.0
        %v1386 = vmul.f32 %v1384, %v1384
        %v1387 = vmul.f32 %v1385, %v1385
        %v1388 = vsub.f32 2.0, %v1386
        %v1389 = vsub.f32 2.0, %v1387
        %v1390 = vrsqrt.pop %v1388
        %v1391 = vmul.f32 %v1388, %v1390
        %vm1392 = vcmp.eq.f32.partialorder %v1388, inf
        %v1393 = vsel %vm1392, %v1388, %v1391
        %vm1394 = vcmp.eq.f32.partialorder %v1388, 0.0
        %v1395 = vand.u32 %v1388, 2147483648
        %v1396 = vsel %vm1394, %v1395, %v1393
        %v1397 = vrsqrt.pop %v1389
        %v1398 = vmul.f32 %v1389, %v1397
        %vm1399 = vcmp.eq.f32.partialorder %v1389, inf
        %v1400 = vsel %vm1399, %v1389, %v1398
        %vm1401 = vcmp.eq.f32.partialorder %v1389, 0.0
        %v1402 = vand.u32 %v1389, 2147483648
        %v1403 = vsel %vm1401, %v1402, %v1400
        %v1404 = vadd.f32 %v1396, %v1384
        %v1405 = vadd.f32 %v1403, %v1385
        %v1406 = vmul.f32 %v1404, 0.5
        %v1407 = vmul.f32 %v1405, 0.5
        %v1408 = vmul.f32 %v1406, %v1406
        %v1409 = vmul.f32 %v1407, %v1407
        %v1410 = vsub.f32 1.0, %v1408
        %v1411 = vsub.f32 1.0, %v1409
        %v1412 = vlaneseq
        %v1413 = vshrl.u32 %v1412, 7
        %v1414 = vsub.s32 3, %v1413
        %v1415 = vrot.slane %v1303, %v1414
        %v1416 = vsub.f32 %v1254, %v1415
        %v1417 = vsub.f32 %v1258, %v1415
        %v1418 = vmax.f32 %v1416, -1.0
        %v1419 = vmax.f32 %v1417, -1.0
        %v1420 = vmin.f32 %v1418, 1.0
        %v1421 = vmin.f32 %v1419, 1.0
        %v1422 = vmul.f32 %v1420, %v1420
        %v1423 = vmul.f32 %v1421, %v1421
        %v1424 = vsub.f32 2.0, %v1422
        %v1425 = vsub.f32 2.0, %v1423
        %v1426 = vrsqrt.pop %v1424
        %v1427 = vmul.f32 %v1424, %v1426
        %vm1428 = vcmp.eq.f32.partialorder %v1424, inf
        %v1429 = vsel %vm1428, %v1424, %v1427
        %vm1430 = vcmp.eq.f32.partialorder %v1424, 0.0
        %v1431 = vand.u32 %v1424, 2147483648
        %v1432 = vsel %vm1430, %v1431, %v1429
        %v1433 = vrsqrt.pop %v1425
        %v1434 = vmul.f32 %v1425, %v1433
        %vm1435 = vcmp.eq.f32.partialorder %v1425, inf
        %v1436 = vsel %vm1435, %v1425, %v1434
        %vm1437 = vcmp.eq.f32.partialorder %v1425, 0.0
        %v1438 = vand.u32 %v1425, 2147483648
        %v1439 = vsel %vm1437, %v1438, %v1436
        %v1440 = vadd.f32 %v1432, %v1420
        %v1441 = vadd.f32 %v1439, %v1421
        %v1442 = vmul.f32 %v1440, 0.5
        %v1443 = vmul.f32 %v1441, 0.5
        %v1444 = vmul.f32 %v1442, %v1442
        %v1445 = vmul.f32 %v1443, %v1443
        %v1446 = vsub.f32 1.0, %v1444
        %v1447 = vsub.f32 1.0, %v1445
        %v1448 = vlaneseq
        %v1449 = vshrl.u32 %v1448, 7
        %v1450 = vsub.s32 4, %v1449
        %v1451 = vrot.slane %v1303, %v1450
        %v1452 = vsub.f32 %v1295, %v1451
        %v1453 = vsub.f32 %v1299, %v1451
        %v1454 = vmax.f32 %v1452, -1.0
        %v1455 = vmax.f32 %v1453, -1.0
        %v1456 = vmin.f32 %v1454, 1.0
        %v1457 = vmin.f32 %v1455, 1.0
        %v1458 = vmul.f32 %v1456, %v1456
        %v1459 = vmul.f32 %v1457, %v1457
        %v1460 = vsub.f32 2.0, %v1458
        %v1461 = vsub.f32 2.0, %v1459
        %v1462 = vrsqrt.pop %v1460
        %v1463 = vmul.f32 %v1460, %v1462
        %vm1464 = vcmp.eq.f32.partialorder %v1460, inf
        %v1465 = vsel %vm1464, %v1460, %v1463
        %vm1466 = vcmp.eq.f32.partialorder %v1460, 0.0
        %v1467 = vand.u32 %v1460, 2147483648
        %v1468 = vsel %vm1466, %v1467, %v1465
        %v1469 = vrsqrt.pop %v1461
        %v1470 = vmul.f32 %v1461, %v1469
        %vm1471 = vcmp.eq.f32.partialorder %v1461, inf
        %v1472 = vsel %vm1471, %v1461, %v1470
        %vm1473 = vcmp.eq.f32.partialorder %v1461, 0.0
        %v1474 = vand.u32 %v1461, 2147483648
        %v1475 = vsel %vm1473, %v1474, %v1472
        %v1476 = vadd.f32 %v1468, %v1456
        %v1477 = vadd.f32 %v1475, %v1457
        %v1478 = vmul.f32 %v1476, 0.5
        %v1479 = vmul.f32 %v1477, 0.5
        %v1480 = vmul.f32 %v1478, %v1478
        %v1481 = vmul.f32 %v1479, %v1479
        %v1482 = vsub.f32 1.0, %v1480
        %v1483 = vsub.f32 1.0, %v1481
        %v1484 = vlaneseq
        %v1485 = vshrl.u32 %v1484, 7
        %v1486 = vsub.s32 5, %v1485
        %v1487 = vrot.slane %v1303, %v1486
        %v1488 = vsub.f32 %v1297, %v1487
        %v1489 = vsub.f32 %v1301, %v1487
        %v1490 = vmax.f32 %v1488, -1.0
        %v1491 = vmax.f32 %v1489, -1.0
        %v1492 = vmin.f32 %v1490, 1.0
        %v1493 = vmin.f32 %v1491, 1.0
        %v1494 = vmul.f32 %v1492, %v1492
        %v1495 = vmul.f32 %v1493, %v1493
        %v1496 = vsub.f32 2.0, %v1494
        %v1497 = vsub.f32 2.0, %v1495
        %v1498 = vrsqrt.pop %v1496
        %v1499 = vmul.f32 %v1496, %v1498
        %vm1500 = vcmp.eq.f32.partialorder %v1496, inf
        %v1501 = vsel %vm1500, %v1496, %v1499
        %vm1502 = vcmp.eq.f32.partialorder %v1496, 0.0
        %v1503 = vand.u32 %v1496, 2147483648
        %v1504 = vsel %vm1502, %v1503, %v1501
        %v1505 = vrsqrt.pop %v1497
        %v1506 = vmul.f32 %v1497, %v1505
        %vm1507 = vcmp.eq.f32.partialorder %v1497, inf
        %v1508 = vsel %vm1507, %v1497, %v1506
        %vm1509 = vcmp.eq.f32.partialorder %v1497, 0.0
        %v1510 = vand.u32 %v1497, 2147483648
        %v1511 = vsel %vm1509, %v1510, %v1508
        %v1512 = vadd.f32 %v1504, %v1492
        %v1513 = vadd.f32 %v1511, %v1493
        %v1514 = vmul.f32 %v1512, 0.5
        %v1515 = vmul.f32 %v1513, 0.5
        %v1516 = vmul.f32 %v1514, %v1514
        %v1517 = vmul.f32 %v1515, %v1515
        %v1518 = vsub.f32 1.0, %v1516
        %v1519 = vsub.f32 1.0, %v1517
        %v1520 = vlaneseq
        %v1521 = vshrl.u32 %v1520, 7
        %v1522 = vadd.s32 %v1521, 8
        %v1523 = vand.u32 %v1521, 1
        %v1524 = vand.u32 %v1522, 1
        %vm1525 = vcmp.eq.s32.totalorder %v1523, 1
        %vm1526 = vcmp.eq.s32.totalorder %v1524, 1
        %v1529 = vcombine.high %v1338, %v1338
        %v1531 = vunpack.c.l.s4 1966171168
        %v1532 = vunpack.c.0.s8 %v1531
        %v1533 = vlaneseq
        %v1534 = vshrl.u32 %v1533, 7
        %v1535 = vsub.s32 %v1532, %v1534
        %v1536 = vrot.slane %v1338, %v1535
        %v1538 = vunpack.c.l.s4 1966171168
        %v1539 = vunpack.c.0.s8 %v1538
        %v1540 = vlaneseq
        %v1541 = vshrl.u32 %v1540, 7
        %v1542 = vsub.s32 %v1539, %v1541
        %v1543 = vrot.slane %v1529, %v1542
        %v1544 = vcombine.high %v1536, %v1536
        %v1545 = vcombine.high %v1543, %v1543
        %v1547 = vunpack.c.l.s4 1966171168
        %v1548 = vunpack.c.0.s8 %v1547
        %v1549 = vlaneseq
        %v1550 = vshrl.u32 %v1549, 7
        %v1551 = vsub.s32 %v1548, %v1550
        %v1552 = vrot.slane %v1536, %v1551
        %v1554 = vunpack.c.l.s4 1966171168
        %v1555 = vunpack.c.0.s8 %v1554
        %v1556 = vlaneseq
        %v1557 = vshrl.u32 %v1556, 7
        %v1558 = vsub.s32 %v1555, %v1557
        %v1559 = vrot.slane %v1543, %v1558
        %v1561 = vunpack.c.l.s4 1966171168
        %v1562 = vunpack.c.0.s8 %v1561
        %v1563 = vlaneseq
        %v1564 = vshrl.u32 %v1563, 7
        %v1565 = vsub.s32 %v1562, %v1564
        %v1566 = vrot.slane %v1544, %v1565
        %v1568 = vunpack.c.l.s4 1966171168
        %v1569 = vunpack.c.0.s8 %v1568
        %v1570 = vlaneseq
        %v1571 = vshrl.u32 %v1570, 7
        %v1572 = vsub.s32 %v1569, %v1571
        %v1573 = vrot.slane %v1545, %v1572
        %v1574 = vcombine.high %v1552, %v1552
        %v1575 = vcombine.high %v1559, %v1559
        %v1576 = vcombine.high %v1566, %v1566
        %v1577 = vcombine.high %v1573, %v1573
        %v1578 = vcombine.high %v1339, %v1339
        %v1580 = vunpack.c.l.s4 1966171168
        %v1581 = vunpack.c.0.s8 %v1580
        %v1582 = vlaneseq
        %v1583 = vshrl.u32 %v1582, 7
        %v1584 = vsub.s32 %v1581, %v1583
        %v1585 = vrot.slane %v1339, %v1584
        %v1587 = vunpack.c.l.s4 1966171168
        %v1588 = vunpack.c.0.s8 %v1587
        %v1589 = vlaneseq
        %v1590 = vshrl.u32 %v1589, 7
        %v1591 = vsub.s32 %v1588, %v1590
        %v1592 = vrot.slane %v1578, %v1591
        %v1593 = vcombine.high %v1585, %v1585
        %v1594 = vcombine.high %v1592, %v1592
        %v1596 = vunpack.c.l.s4 1966171168
        %v1597 = vunpack.c.0.s8 %v1596
        %v1598 = vlaneseq
        %v1599 = vshrl.u32 %v1598, 7
        %v1600 = vsub.s32 %v1597, %v1599
        %v1601 = vrot.slane %v1585, %v1600
        %v1603 = vunpack.c.l.s4 1966171168
        %v1604 = vunpack.c.0.s8 %v1603
        %v1605 = vlaneseq
        %v1606 = vshrl.u32 %v1605, 7
        %v1607 = vsub.s32 %v1604, %v1606
        %v1608 = vrot.slane %v1592, %v1607
        %v1610 = vunpack.c.l.s4 1966171168
        %v1611 = vunpack.c.0.s8 %v1610
        %v1612 = vlaneseq
        %v1613 = vshrl.u32 %v1612, 7
        %v1614 = vsub.s32 %v1611, %v1613
        %v1615 = vrot.slane %v1593, %v1614
        %v1617 = vunpack.c.l.s4 1966171168
        %v1618 = vunpack.c.0.s8 %v1617
        %v1619 = vlaneseq
        %v1620 = vshrl.u32 %v1619, 7
        %v1621 = vsub.s32 %v1618, %v1620
        %v1622 = vrot.slane %v1594, %v1621
        %v1623 = vcombine.high %v1601, %v1601
        %v1624 = vcombine.high %v1608, %v1608
        %v1625 = vcombine.high %v1615, %v1615
        %v1626 = vcombine.high %v1622, %v1622
        %v1629 = vcombine.high %v1336, %v1336
        %v1631 = vunpack.c.l.s4 1966171168
        %v1632 = vunpack.c.0.s8 %v1631
        %v1633 = vlaneseq
        %v1634 = vshrl.u32 %v1633, 7
        %v1635 = vsub.s32 %v1632, %v1634
        %v1636 = vrot.slane %v1336, %v1635
        %v1638 = vunpack.c.l.s4 1966171168
        %v1639 = vunpack.c.0.s8 %v1638
        %v1640 = vlaneseq
        %v1641 = vshrl.u32 %v1640, 7
        %v1642 = vsub.s32 %v1639, %v1641
        %v1643 = vrot.slane %v1629, %v1642
        %v1644 = vcombine.high %v1636, %v1636
        %v1645 = vcombine.high %v1643, %v1643
        %v1647 = vunpack.c.l.s4 1966171168
        %v1648 = vunpack.c.0.s8 %v1647
        %v1649 = vlaneseq
        %v1650 = vshrl.u32 %v1649, 7
        %v1651 = vsub.s32 %v1648, %v1650
        %v1652 = vrot.slane %v1636, %v1651
        %v1654 = vunpack.c.l.s4 1966171168
        %v1655 = vunpack.c.0.s8 %v1654
        %v1656 = vlaneseq
        %v1657 = vshrl.u32 %v1656, 7
        %v1658 = vsub.s32 %v1655, %v1657
        %v1659 = vrot.slane %v1643, %v1658
        %v1661 = vunpack.c.l.s4 1966171168
        %v1662 = vunpack.c.0.s8 %v1661
        %v1663 = vlaneseq
        %v1664 = vshrl.u32 %v1663, 7
        %v1665 = vsub.s32 %v1662, %v1664
        %v1666 = vrot.slane %v1644, %v1665
        %v1668 = vunpack.c.l.s4 1966171168
        %v1669 = vunpack.c.0.s8 %v1668
        %v1670 = vlaneseq
        %v1671 = vshrl.u32 %v1670, 7
        %v1672 = vsub.s32 %v1669, %v1671
        %v1673 = vrot.slane %v1645, %v1672
        %v1674 = vcombine.high %v1652, %v1652
        %v1675 = vcombine.high %v1659, %v1659
        %v1676 = vcombine.high %v1666, %v1666
        %v1677 = vcombine.high %v1673, %v1673
        %v1678 = vcombine.high %v1337, %v1337
        %v1680 = vunpack.c.l.s4 1966171168
        %v1681 = vunpack.c.0.s8 %v1680
        %v1682 = vlaneseq
        %v1683 = vshrl.u32 %v1682, 7
        %v1684 = vsub.s32 %v1681, %v1683
        %v1685 = vrot.slane %v1337, %v1684
        %v1687 = vunpack.c.l.s4 1966171168
        %v1688 = vunpack.c.0.s8 %v1687
        %v1689 = vlaneseq
        %v1690 = vshrl.u32 %v1689, 7
        %v1691 = vsub.s32 %v1688, %v1690
        %v1692 = vrot.slane %v1678, %v1691
        %v1693 = vcombine.high %v1685, %v1685
        %v1694 = vcombine.high %v1692, %v1692
        %v1696 = vunpack.c.l.s4 1966171168
        %v1697 = vunpack.c.0.s8 %v1696
        %v1698 = vlaneseq
        %v1699 = vshrl.u32 %v1698, 7
        %v1700 = vsub.s32 %v1697, %v1699
        %v1701 = vrot.slane %v1685, %v1700
        %v1703 = vunpack.c.l.s4 1966171168
        %v1704 = vunpack.c.0.s8 %v1703
        %v1705 = vlaneseq
        %v1706 = vshrl.u32 %v1705, 7
        %v1707 = vsub.s32 %v1704, %v1706
        %v1708 = vrot.slane %v1692, %v1707
        %v1710 = vunpack.c.l.s4 1966171168
        %v1711 = vunpack.c.0.s8 %v1710
        %v1712 = vlaneseq
        %v1713 = vshrl.u32 %v1712, 7
        %v1714 = vsub.s32 %v1711, %v1713
        %v1715 = vrot.slane %v1693, %v1714
        %v1717 = vunpack.c.l.s4 1966171168
        %v1718 = vunpack.c.0.s8 %v1717
        %v1719 = vlaneseq
        %v1720 = vshrl.u32 %v1719, 7
        %v1721 = vsub.s32 %v1718, %v1720
        %v1722 = vrot.slane %v1694, %v1721
        %v1723 = vcombine.high %v1701, %v1701
        %v1724 = vcombine.high %v1708, %v1708
        %v1725 = vcombine.high %v1715, %v1715
        %v1726 = vcombine.high %v1722, %v1722
        %v1727 = vsel %vm1525, 1, 0
        %v1728 = vsel %vm1526, 1, 0
        %vm1729 = vcmp.eq.s32.totalorder %v1727, 1
        %vm1730 = vcmp.eq.s32.totalorder %v1728, 1
        %v1731 = vlaneseq
        %v1732 = vshrl.u32 %v1731, 7
        %v1733 = vsub.s32 0, %v1732
        %v1734 = vrot.slane %v1552, %v1733
        %v1735 = vlaneseq
        %v1736 = vshrl.u32 %v1735, 7
        %v1737 = vsub.s32 0, %v1736
        %v1738 = vrot.slane %v1566, %v1737
        %v1739 = vlaneseq
        %v1740 = vshrl.u32 %v1739, 7
        %v1741 = vsub.s32 0, %v1740
        %v1742 = vrot.slane %v1574, %v1741
        %v1743 = vlaneseq
        %v1744 = vshrl.u32 %v1743, 7
        %v1745 = vsub.s32 0, %v1744
        %v1746 = vrot.slane %v1576, %v1745
        %v1747 = vlaneseq
        %v1748 = vshrl.u32 %v1747, 7
        %v1749 = vsub.s32 0, %v1748
        %v1750 = vrot.slane %v1559, %v1749
        %v1751 = vlaneseq
        %v1752 = vshrl.u32 %v1751, 7
        %v1753 = vsub.s32 0, %v1752
        %v1754 = vrot.slane %v1573, %v1753
        %v1755 = vlaneseq
        %v1756 = vshrl.u32 %v1755, 7
        %v1757 = vsub.s32 0, %v1756
        %v1758 = vrot.slane %v1575, %v1757
        %v1759 = vlaneseq
        %v1760 = vshrl.u32 %v1759, 7
        %v1761 = vsub.s32 0, %v1760
        %v1762 = vrot.slane %v1577, %v1761
        %v1763 = vlaneseq
        %v1764 = vshrl.u32 %v1763, 7
        %v1765 = vsub.s32 0, %v1764
        %v1766 = vrot.slane %v1601, %v1765
        %v1767 = vlaneseq
        %v1768 = vshrl.u32 %v1767, 7
        %v1769 = vsub.s32 0, %v1768
        %v1770 = vrot.slane %v1615, %v1769
        %v1771 = vlaneseq
        %v1772 = vshrl.u32 %v1771, 7
        %v1773 = vsub.s32 0, %v1772
        %v1774 = vrot.slane %v1623, %v1773
        %v1775 = vlaneseq
        %v1776 = vshrl.u32 %v1775, 7
        %v1777 = vsub.s32 0, %v1776
        %v1778 = vrot.slane %v1625, %v1777
        %v1779 = vlaneseq
        %v1780 = vshrl.u32 %v1779, 7
        %v1781 = vsub.s32 0, %v1780
        %v1782 = vrot.slane %v1608, %v1781
        %v1783 = vlaneseq
        %v1784 = vshrl.u32 %v1783, 7
        %v1785 = vsub.s32 0, %v1784
        %v1786 = vrot.slane %v1622, %v1785
        %v1787 = vlaneseq
        %v1788 = vshrl.u32 %v1787, 7
        %v1789 = vsub.s32 0, %v1788
        %v1790 = vrot.slane %v1624, %v1789
        %v1791 = vlaneseq
        %v1792 = vshrl.u32 %v1791, 7
        %v1793 = vsub.s32 0, %v1792
        %v1794 = vrot.slane %v1626, %v1793
        %v1811 = vlaneseq
        %v1812 = vshrl.u32 %v1811, 7
        %v1813 = vsub.s32 0, %v1812
        %v1814 = vrot.slane %v1652, %v1813
        %v1815 = vlaneseq
        %v1816 = vshrl.u32 %v1815, 7
        %v1817 = vsub.s32 0, %v1816
        %v1818 = vrot.slane %v1666, %v1817
        %v1819 = vlaneseq
        %v1820 = vshrl.u32 %v1819, 7
        %v1821 = vsub.s32 0, %v1820
        %v1822 = vrot.slane %v1674, %v1821
        %v1823 = vlaneseq
        %v1824 = vshrl.u32 %v1823, 7
        %v1825 = vsub.s32 0, %v1824
        %v1826 = vrot.slane %v1676, %v1825
        %v1827 = vlaneseq
        %v1828 = vshrl.u32 %v1827, 7
        %v1829 = vsub.s32 0, %v1828
        %v1830 = vrot.slane %v1659, %v1829
        %v1831 = vlaneseq
        %v1832 = vshrl.u32 %v1831, 7
        %v1833 = vsub.s32 0, %v1832
        %v1834 = vrot.slane %v1673, %v1833
        %v1835 = vlaneseq
        %v1836 = vshrl.u32 %v1835, 7
        %v1837 = vsub.s32 0, %v1836
        %v1838 = vrot.slane %v1675, %v1837
        %v1839 = vlaneseq
        %v1840 = vshrl.u32 %v1839, 7
        %v1841 = vsub.s32 0, %v1840
        %v1842 = vrot.slane %v1677, %v1841
        %v1843 = vlaneseq
        %v1844 = vshrl.u32 %v1843, 7
        %v1845 = vsub.s32 0, %v1844
        %v1846 = vrot.slane %v1701, %v1845
        %v1847 = vlaneseq
        %v1848 = vshrl.u32 %v1847, 7
        %v1849 = vsub.s32 0, %v1848
        %v1850 = vrot.slane %v1715, %v1849
        %v1851 = vlaneseq
        %v1852 = vshrl.u32 %v1851, 7
        %v1853 = vsub.s32 0, %v1852
        %v1854 = vrot.slane %v1723, %v1853
        %v1855 = vlaneseq
        %v1856 = vshrl.u32 %v1855, 7
        %v1857 = vsub.s32 0, %v1856
        %v1858 = vrot.slane %v1725, %v1857
        %v1859 = vlaneseq
        %v1860 = vshrl.u32 %v1859, 7
        %v1861 = vsub.s32 0, %v1860
        %v1862 = vrot.slane %v1708, %v1861
        %v1863 = vlaneseq
        %v1864 = vshrl.u32 %v1863, 7
        %v1865 = vsub.s32 0, %v1864
        %v1866 = vrot.slane %v1722, %v1865
        %v1867 = vlaneseq
        %v1868 = vshrl.u32 %v1867, 7
        %v1869 = vsub.s32 0, %v1868
        %v1870 = vrot.slane %v1724, %v1869
        %v1871 = vlaneseq
        %v1872 = vshrl.u32 %v1871, 7
        %v1873 = vsub.s32 0, %v1872
        %v1874 = vrot.slane %v1726, %v1873
        %v1891 = vsel %vm1729, %v1734, %v1814
        %v1892 = vsel %vm1730, %v1734, %v1814
        %v1893 = vsel %vm1729, %v1738, %v1818
        %v1894 = vsel %vm1730, %v1738, %v1818
        %v1895 = vsel %vm1729, %v1742, %v1822
        %v1896 = vsel %vm1730, %v1742, %v1822
        %v1897 = vsel %vm1729, %v1746, %v1826
        %v1898 = vsel %vm1730, %v1746, %v1826
        %v1899 = vsel %vm1729, %v1750, %v1830
        %v1900 = vsel %vm1730, %v1750, %v1830
        %v1901 = vsel %vm1729, %v1754, %v1834
        %v1902 = vsel %vm1730, %v1754, %v1834
        %v1903 = vsel %vm1729, %v1758, %v1838
        %v1904 = vsel %vm1730, %v1758, %v1838
        %v1905 = vsel %vm1729, %v1762, %v1842
        %v1906 = vsel %vm1730, %v1762, %v1842
        %v1907 = vsel %vm1729, %v1766, %v1846
        %v1908 = vsel %vm1730, %v1766, %v1846
        %v1909 = vsel %vm1729, %v1770, %v1850
        %v1910 = vsel %vm1730, %v1770, %v1850
        %v1911 = vsel %vm1729, %v1774, %v1854
        %v1912 = vsel %vm1730, %v1774, %v1854
        %v1913 = vsel %vm1729, %v1778, %v1858
        %v1914 = vsel %vm1730, %v1778, %v1858
        %v1915 = vsel %vm1729, %v1782, %v1862
        %v1916 = vsel %vm1730, %v1782, %v1862
        %v1917 = vsel %vm1729, %v1786, %v1866
        %v1918 = vsel %vm1730, %v1786, %v1866
        %v1919 = vsel %vm1729, %v1790, %v1870
        %v1920 = vsel %vm1730, %v1790, %v1870
        %v1921 = vsel %vm1729, %v1794, %v1874
        %v1922 = vsel %vm1730, %v1794, %v1874
        %v1923 = vshra.s32 %v1521, 1
        %v1924 = vshra.s32 %v1522, 1
        %v1925 = vand.u32 %v1923, 1
        %v1926 = vand.u32 %v1924, 1
        %vm1927 = vcmp.eq.s32.totalorder %v1925, 1
        %vm1928 = vcmp.eq.s32.totalorder %v1926, 1
        %v1931 = vcombine.high %v1374, %v1374
        %v1933 = vunpack.c.l.s4 1966171168
        %v1934 = vunpack.c.0.s8 %v1933
        %v1935 = vlaneseq
        %v1936 = vshrl.u32 %v1935, 7
        %v1937 = vsub.s32 %v1934, %v1936
        %v1938 = vrot.slane %v1374, %v1937
        %v1940 = vunpack.c.l.s4 1966171168
        %v1941 = vunpack.c.0.s8 %v1940
        %v1942 = vlaneseq
        %v1943 = vshrl.u32 %v1942, 7
        %v1944 = vsub.s32 %v1941, %v1943
        %v1945 = vrot.slane %v1931, %v1944
        %v1946 = vcombine.high %v1938, %v1938
        %v1947 = vcombine.high %v1945, %v1945
        %v1949 = vunpack.c.l.s4 1966171168
        %v1950 = vunpack.c.0.s8 %v1949
        %v1951 = vlaneseq
        %v1952 = vshrl.u32 %v1951, 7
        %v1953 = vsub.s32 %v1950, %v1952
        %v1954 = vrot.slane %v1938, %v1953
        %v1956 = vunpack.c.l.s4 1966171168
        %v1957 = vunpack.c.0.s8 %v1956
        %v1958 = vlaneseq
        %v1959 = vshrl.u32 %v1958, 7
        %v1960 = vsub.s32 %v1957, %v1959
        %v1961 = vrot.slane %v1945, %v1960
        %v1963 = vunpack.c.l.s4 1966171168
        %v1964 = vunpack.c.0.s8 %v1963
        %v1965 = vlaneseq
        %v1966 = vshrl.u32 %v1965, 7
        %v1967 = vsub.s32 %v1964, %v1966
        %v1968 = vrot.slane %v1946, %v1967
        %v1970 = vunpack.c.l.s4 1966171168
        %v1971 = vunpack.c.0.s8 %v1970
        %v1972 = vlaneseq
        %v1973 = vshrl.u32 %v1972, 7
        %v1974 = vsub.s32 %v1971, %v1973
        %v1975 = vrot.slane %v1947, %v1974
        %v1976 = vcombine.high %v1954, %v1954
        %v1977 = vcombine.high %v1961, %v1961
        %v1978 = vcombine.high %v1968, %v1968
        %v1979 = vcombine.high %v1975, %v1975
        %v1980 = vcombine.high %v1375, %v1375
        %v1982 = vunpack.c.l.s4 1966171168
        %v1983 = vunpack.c.0.s8 %v1982
        %v1984 = vlaneseq
        %v1985 = vshrl.u32 %v1984, 7
        %v1986 = vsub.s32 %v1983, %v1985
        %v1987 = vrot.slane %v1375, %v1986
        %v1989 = vunpack.c.l.s4 1966171168
        %v1990 = vunpack.c.0.s8 %v1989
        %v1991 = vlaneseq
        %v1992 = vshrl.u32 %v1991, 7
        %v1993 = vsub.s32 %v1990, %v1992
        %v1994 = vrot.slane %v1980, %v1993
        %v1995 = vcombine.high %v1987, %v1987
        %v1996 = vcombine.high %v1994, %v1994
        %v1998 = vunpack.c.l.s4 1966171168
        %v1999 = vunpack.c.0.s8 %v1998
        %v2000 = vlaneseq
        %v2001 = vshrl.u32 %v2000, 7
        %v2002 = vsub.s32 %v1999, %v2001
        %v2003 = vrot.slane %v1987, %v2002
        %v2005 = vunpack.c.l.s4 1966171168
        %v2006 = vunpack.c.0.s8 %v2005
        %v2007 = vlaneseq
        %v2008 = vshrl.u32 %v2007, 7
        %v2009 = vsub.s32 %v2006, %v2008
        %v2010 = vrot.slane %v1994, %v2009
        %v2012 = vunpack.c.l.s4 1966171168
        %v2013 = vunpack.c.0.s8 %v2012
        %v2014 = vlaneseq
        %v2015 = vshrl.u32 %v2014, 7
        %v2016 = vsub.s32 %v2013, %v2015
        %v2017 = vrot.slane %v1995, %v2016
        %v2019 = vunpack.c.l.s4 1966171168
        %v2020 = vunpack.c.0.s8 %v2019
        %v2021 = vlaneseq
        %v2022 = vshrl.u32 %v2021, 7
        %v2023 = vsub.s32 %v2020, %v2022
        %v2024 = vrot.slane %v1996, %v2023
        %v2025 = vcombine.high %v2003, %v2003
        %v2026 = vcombine.high %v2010, %v2010
        %v2027 = vcombine.high %v2017, %v2017
        %v2028 = vcombine.high %v2024, %v2024
        %v2031 = vcombine.high %v1372, %v1372
        %v2033 = vunpack.c.l.s4 1966171168
        %v2034 = vunpack.c.0.s8 %v2033
        %v2035 = vlaneseq
        %v2036 = vshrl.u32 %v2035, 7
        %v2037 = vsub.s32 %v2034, %v2036
        %v2038 = vrot.slane %v1372, %v2037
        %v2040 = vunpack.c.l.s4 1966171168
        %v2041 = vunpack.c.0.s8 %v2040
        %v2042 = vlaneseq
        %v2043 = vshrl.u32 %v2042, 7
        %v2044 = vsub.s32 %v2041, %v2043
        %v2045 = vrot.slane %v2031, %v2044
        %v2046 = vcombine.high %v2038, %v2038
        %v2047 = vcombine.high %v2045, %v2045
        %v2049 = vunpack.c.l.s4 1966171168
        %v2050 = vunpack.c.0.s8 %v2049
        %v2051 = vlaneseq
        %v2052 = vshrl.u32 %v2051, 7
        %v2053 = vsub.s32 %v2050, %v2052
        %v2054 = vrot.slane %v2038, %v2053
        %v2056 = vunpack.c.l.s4 1966171168
        %v2057 = vunpack.c.0.s8 %v2056
        %v2058 = vlaneseq
        %v2059 = vshrl.u32 %v2058, 7
        %v2060 = vsub.s32 %v2057, %v2059
        %v2061 = vrot.slane %v2045, %v2060
        %v2063 = vunpack.c.l.s4 1966171168
        %v2064 = vunpack.c.0.s8 %v2063
        %v2065 = vlaneseq
        %v2066 = vshrl.u32 %v2065, 7
        %v2067 = vsub.s32 %v2064, %v2066
        %v2068 = vrot.slane %v2046, %v2067
        %v2070 = vunpack.c.l.s4 1966171168
        %v2071 = vunpack.c.0.s8 %v2070
        %v2072 = vlaneseq
        %v2073 = vshrl.u32 %v2072, 7
        %v2074 = vsub.s32 %v2071, %v2073
        %v2075 = vrot.slane %v2047, %v2074
        %v2076 = vcombine.high %v2054, %v2054
        %v2077 = vcombine.high %v2061, %v2061
        %v2078 = vcombine.high %v2068, %v2068
        %v2079 = vcombine.high %v2075, %v2075
        %v2080 = vcombine.high %v1373, %v1373
        %v2082 = vunpack.c.l.s4 1966171168
        %v2083 = vunpack.c.0.s8 %v2082
        %v2084 = vlaneseq
        %v2085 = vshrl.u32 %v2084, 7
        %v2086 = vsub.s32 %v2083, %v2085
        %v2087 = vrot.slane %v1373, %v2086
        %v2089 = vunpack.c.l.s4 1966171168
        %v2090 = vunpack.c.0.s8 %v2089
        %v2091 = vlaneseq
        %v2092 = vshrl.u32 %v2091, 7
        %v2093 = vsub.s32 %v2090, %v2092
        %v2094 = vrot.slane %v2080, %v2093
        %v2095 = vcombine.high %v2087, %v2087
        %v2096 = vcombine.high %v2094, %v2094
        %v2098 = vunpack.c.l.s4 1966171168
        %v2099 = vunpack.c.0.s8 %v2098
        %v2100 = vlaneseq
        %v2101 = vshrl.u32 %v2100, 7
        %v2102 = vsub.s32 %v2099, %v2101
        %v2103 = vrot.slane %v2087, %v2102
        %v2105 = vunpack.c.l.s4 1966171168
        %v2106 = vunpack.c.0.s8 %v2105
        %v2107 = vlaneseq
        %v2108 = vshrl.u32 %v2107, 7
        %v2109 = vsub.s32 %v2106, %v2108
        %v2110 = vrot.slane %v2094, %v2109
        %v2112 = vunpack.c.l.s4 1966171168
        %v2113 = vunpack.c.0.s8 %v2112
        %v2114 = vlaneseq
        %v2115 = vshrl.u32 %v2114, 7
        %v2116 = vsub.s32 %v2113, %v2115
        %v2117 = vrot.slane %v2095, %v2116
        %v2119 = vunpack.c.l.s4 1966171168
        %v2120 = vunpack.c.0.s8 %v2119
        %v2121 = vlaneseq
        %v2122 = vshrl.u32 %v2121, 7
        %v2123 = vsub.s32 %v2120, %v2122
        %v2124 = vrot.slane %v2096, %v2123
        %v2125 = vcombine.high %v2103, %v2103
        %v2126 = vcombine.high %v2110, %v2110
        %v2127 = vcombine.high %v2117, %v2117
        %v2128 = vcombine.high %v2124, %v2124
        %v2129 = vsel %vm1927, 1, 0
        %v2130 = vsel %vm1928, 1, 0
        %vm2131 = vcmp.eq.s32.totalorder %v2129, 1
        %vm2132 = vcmp.eq.s32.totalorder %v2130, 1
        %v2133 = vlaneseq
        %v2134 = vshrl.u32 %v2133, 7
        %v2135 = vsub.s32 0, %v2134
        %v2136 = vrot.slane %v1954, %v2135
        %v2137 = vlaneseq
        %v2138 = vshrl.u32 %v2137, 7
        %v2139 = vsub.s32 0, %v2138
        %v2140 = vrot.slane %v1968, %v2139
        %v2141 = vlaneseq
        %v2142 = vshrl.u32 %v2141, 7
        %v2143 = vsub.s32 0, %v2142
        %v2144 = vrot.slane %v1976, %v2143
        %v2145 = vlaneseq
        %v2146 = vshrl.u32 %v2145, 7
        %v2147 = vsub.s32 0, %v2146
        %v2148 = vrot.slane %v1978, %v2147
        %v2149 = vlaneseq
        %v2150 = vshrl.u32 %v2149, 7
        %v2151 = vsub.s32 0, %v2150
        %v2152 = vrot.slane %v1961, %v2151
        %v2153 = vlaneseq
        %v2154 = vshrl.u32 %v2153, 7
        %v2155 = vsub.s32 0, %v2154
        %v2156 = vrot.slane %v1975, %v2155
        %v2157 = vlaneseq
        %v2158 = vshrl.u32 %v2157, 7
        %v2159 = vsub.s32 0, %v2158
        %v2160 = vrot.slane %v1977, %v2159
        %v2161 = vlaneseq
        %v2162 = vshrl.u32 %v2161, 7
        %v2163 = vsub.s32 0, %v2162
        %v2164 = vrot.slane %v1979, %v2163
        %v2165 = vlaneseq
        %v2166 = vshrl.u32 %v2165, 7
        %v2167 = vsub.s32 0, %v2166
        %v2168 = vrot.slane %v2003, %v2167
        %v2169 = vlaneseq
        %v2170 = vshrl.u32 %v2169, 7
        %v2171 = vsub.s32 0, %v2170
        %v2172 = vrot.slane %v2017, %v2171
        %v2173 = vlaneseq
        %v2174 = vshrl.u32 %v2173, 7
        %v2175 = vsub.s32 0, %v2174
        %v2176 = vrot.slane %v2025, %v2175
        %v2177 = vlaneseq
        %v2178 = vshrl.u32 %v2177, 7
        %v2179 = vsub.s32 0, %v2178
        %v2180 = vrot.slane %v2027, %v2179
        %v2181 = vlaneseq
        %v2182 = vshrl.u32 %v2181, 7
        %v2183 = vsub.s32 0, %v2182
        %v2184 = vrot.slane %v2010, %v2183
        %v2185 = vlaneseq
        %v2186 = vshrl.u32 %v2185, 7
        %v2187 = vsub.s32 0, %v2186
        %v2188 = vrot.slane %v2024, %v2187
        %v2189 = vlaneseq
        %v2190 = vshrl.u32 %v2189, 7
        %v2191 = vsub.s32 0, %v2190
        %v2192 = vrot.slane %v2026, %v2191
        %v2193 = vlaneseq
        %v2194 = vshrl.u32 %v2193, 7
        %v2195 = vsub.s32 0, %v2194
        %v2196 = vrot.slane %v2028, %v2195
        %v2213 = vlaneseq
        %v2214 = vshrl.u32 %v2213, 7
        %v2215 = vsub.s32 0, %v2214
        %v2216 = vrot.slane %v2054, %v2215
        %v2217 = vlaneseq
        %v2218 = vshrl.u32 %v2217, 7
        %v2219 = vsub.s32 0, %v2218
        %v2220 = vrot.slane %v2068, %v2219
        %v2221 = vlaneseq
        %v2222 = vshrl.u32 %v2221, 7
        %v2223 = vsub.s32 0, %v2222
        %v2224 = vrot.slane %v2076, %v2223
        %v2225 = vlaneseq
        %v2226 = vshrl.u32 %v2225, 7
        %v2227 = vsub.s32 0, %v2226
        %v2228 = vrot.slane %v2078, %v2227
        %v2229 = vlaneseq
        %v2230 = vshrl.u32 %v2229, 7
        %v2231 = vsub.s32 0, %v2230
        %v2232 = vrot.slane %v2061, %v2231
        %v2233 = vlaneseq
        %v2234 = vshrl.u32 %v2233, 7
        %v2235 = vsub.s32 0, %v2234
        %v2236 = vrot.slane %v2075, %v2235
        %v2237 = vlaneseq
        %v2238 = vshrl.u32 %v2237, 7
        %v2239 = vsub.s32 0, %v2238
        %v2240 = vrot.slane %v2077, %v2239
        %v2241 = vlaneseq
        %v2242 = vshrl.u32 %v2241, 7
        %v2243 = vsub.s32 0, %v2242
        %v2244 = vrot.slane %v2079, %v2243
        %v2245 = vlaneseq
        %v2246 = vshrl.u32 %v2245, 7
        %v2247 = vsub.s32 0, %v2246
        %v2248 = vrot.slane %v2103, %v2247
        %v2249 = vlaneseq
        %v2250 = vshrl.u32 %v2249, 7
        %v2251 = vsub.s32 0, %v2250
        %v2252 = vrot.slane %v2117, %v2251
        %v2253 = vlaneseq
        %v2254 = vshrl.u32 %v2253, 7
        %v2255 = vsub.s32 0, %v2254
        %v2256 = vrot.slane %v2125, %v2255
        %v2257 = vlaneseq
        %v2258 = vshrl.u32 %v2257, 7
        %v2259 = vsub.s32 0, %v2258
        %v2260 = vrot.slane %v2127, %v2259
        %v2261 = vlaneseq
        %v2262 = vshrl.u32 %v2261, 7
        %v2263 = vsub.s32 0, %v2262
        %v2264 = vrot.slane %v2110, %v2263
        %v2265 = vlaneseq
        %v2266 = vshrl.u32 %v2265, 7
        %v2267 = vsub.s32 0, %v2266
        %v2268 = vrot.slane %v2124, %v2267
        %v2269 = vlaneseq
        %v2270 = vshrl.u32 %v2269, 7
        %v2271 = vsub.s32 0, %v2270
        %v2272 = vrot.slane %v2126, %v2271
        %v2273 = vlaneseq
        %v2274 = vshrl.u32 %v2273, 7
        %v2275 = vsub.s32 0, %v2274
        %v2276 = vrot.slane %v2128, %v2275
        %v2293 = vsel %vm2131, %v2136, %v2216
        %v2294 = vsel %vm2132, %v2136, %v2216
        %v2295 = vsel %vm2131, %v2140, %v2220
        %v2296 = vsel %vm2132, %v2140, %v2220
        %v2297 = vsel %vm2131, %v2144, %v2224
        %v2298 = vsel %vm2132, %v2144, %v2224
        %v2299 = vsel %vm2131, %v2148, %v2228
        %v2300 = vsel %vm2132, %v2148, %v2228
        %v2301 = vsel %vm2131, %v2152, %v2232
        %v2302 = vsel %vm2132, %v2152, %v2232
        %v2303 = vsel %vm2131, %v2156, %v2236
        %v2304 = vsel %vm2132, %v2156, %v2236
        %v2305 = vsel %vm2131, %v2160, %v2240
        %v2306 = vsel %vm2132, %v2160, %v2240
        %v2307 = vsel %vm2131, %v2164, %v2244
        %v2308 = vsel %vm2132, %v2164, %v2244
        %v2309 = vsel %vm2131, %v2168, %v2248
        %v2310 = vsel %vm2132, %v2168, %v2248
        %v2311 = vsel %vm2131, %v2172, %v2252
        %v2312 = vsel %vm2132, %v2172, %v2252
        %v2313 = vsel %vm2131, %v2176, %v2256
        %v2314 = vsel %vm2132, %v2176, %v2256
        %v2315 = vsel %vm2131, %v2180, %v2260
        %v2316 = vsel %vm2132, %v2180, %v2260
        %v2317 = vsel %vm2131, %v2184, %v2264
        %v2318 = vsel %vm2132, %v2184, %v2264
        %v2319 = vsel %vm2131, %v2188, %v2268
        %v2320 = vsel %vm2132, %v2188, %v2268
        %v2321 = vsel %vm2131, %v2192, %v2272
        %v2322 = vsel %vm2132, %v2192, %v2272
        %v2323 = vsel %vm2131, %v2196, %v2276
        %v2324 = vsel %vm2132, %v2196, %v2276
        %v2325 = vmul.f32 %v1891, %v2293
        %v2326 = vmul.f32 %v1892, %v2294
        %v2327 = vmul.f32 %v1893, %v2295
        %v2328 = vmul.f32 %v1894, %v2296
        %v2329 = vmul.f32 %v1895, %v2297
        %v2330 = vmul.f32 %v1896, %v2298
        %v2331 = vmul.f32 %v1897, %v2299
        %v2332 = vmul.f32 %v1898, %v2300
        %v2333 = vmul.f32 %v1899, %v2301
        %v2334 = vmul.f32 %v1900, %v2302
        %v2335 = vmul.f32 %v1901, %v2303
        %v2336 = vmul.f32 %v1902, %v2304
        %v2337 = vmul.f32 %v1903, %v2305
        %v2338 = vmul.f32 %v1904, %v2306
        %v2339 = vmul.f32 %v1905, %v2307
        %v2340 = vmul.f32 %v1906, %v2308
        %v2341 = vmul.f32 %v1907, %v2309
        %v2342 = vmul.f32 %v1908, %v2310
        %v2343 = vmul.f32 %v1909, %v2311
        %v2344 = vmul.f32 %v1910, %v2312
        %v2345 = vmul.f32 %v1911, %v2313
        %v2346 = vmul.f32 %v1912, %v2314
        %v2347 = vmul.f32 %v1913, %v2315
        %v2348 = vmul.f32 %v1914, %v2316
        %v2349 = vmul.f32 %v1915, %v2317
        %v2350 = vmul.f32 %v1916, %v2318
        %v2351 = vmul.f32 %v1917, %v2319
        %v2352 = vmul.f32 %v1918, %v2320
        %v2353 = vmul.f32 %v1919, %v2321
        %v2354 = vmul.f32 %v1920, %v2322
        %v2355 = vmul.f32 %v1921, %v2323
        %v2356 = vmul.f32 %v1922, %v2324
        %v2357 = vshra.s32 %v1521, 2
        %v2358 = vshra.s32 %v1522, 2
        %v2359 = vand.u32 %v2357, 1
        %v2360 = vand.u32 %v2358, 1
        %vm2361 = vcmp.eq.s32.totalorder %v2359, 1
        %vm2362 = vcmp.eq.s32.totalorder %v2360, 1
        %v2365 = vcombine.high %v1410, %v1410
        %v2367 = vunpack.c.l.s4 1966171168
        %v2368 = vunpack.c.0.s8 %v2367
        %v2369 = vlaneseq
        %v2370 = vshrl.u32 %v2369, 7
        %v2371 = vsub.s32 %v2368, %v2370
        %v2372 = vrot.slane %v1410, %v2371
        %v2374 = vunpack.c.l.s4 1966171168
        %v2375 = vunpack.c.0.s8 %v2374
        %v2376 = vlaneseq
        %v2377 = vshrl.u32 %v2376, 7
        %v2378 = vsub.s32 %v2375, %v2377
        %v2379 = vrot.slane %v2365, %v2378
        %v2380 = vcombine.high %v2372, %v2372
        %v2381 = vcombine.high %v2379, %v2379
        %v2383 = vunpack.c.l.s4 1966171168
        %v2384 = vunpack.c.0.s8 %v2383
        %v2385 = vlaneseq
        %v2386 = vshrl.u32 %v2385, 7
        %v2387 = vsub.s32 %v2384, %v2386
        %v2388 = vrot.slane %v2372, %v2387
        %v2390 = vunpack.c.l.s4 1966171168
        %v2391 = vunpack.c.0.s8 %v2390
        %v2392 = vlaneseq
        %v2393 = vshrl.u32 %v2392, 7
        %v2394 = vsub.s32 %v2391, %v2393
        %v2395 = vrot.slane %v2379, %v2394
        %v2397 = vunpack.c.l.s4 1966171168
        %v2398 = vunpack.c.0.s8 %v2397
        %v2399 = vlaneseq
        %v2400 = vshrl.u32 %v2399, 7
        %v2401 = vsub.s32 %v2398, %v2400
        %v2402 = vrot.slane %v2380, %v2401
        %v2404 = vunpack.c.l.s4 1966171168
        %v2405 = vunpack.c.0.s8 %v2404
        %v2406 = vlaneseq
        %v2407 = vshrl.u32 %v2406, 7
        %v2408 = vsub.s32 %v2405, %v2407
        %v2409 = vrot.slane %v2381, %v2408
        %v2410 = vcombine.high %v2388, %v2388
        %v2411 = vcombine.high %v2395, %v2395
        %v2412 = vcombine.high %v2402, %v2402
        %v2413 = vcombine.high %v2409, %v2409
        %v2414 = vcombine.high %v1411, %v1411
        %v2416 = vunpack.c.l.s4 1966171168
        %v2417 = vunpack.c.0.s8 %v2416
        %v2418 = vlaneseq
        %v2419 = vshrl.u32 %v2418, 7
        %v2420 = vsub.s32 %v2417, %v2419
        %v2421 = vrot.slane %v1411, %v2420
        %v2423 = vunpack.c.l.s4 1966171168
        %v2424 = vunpack.c.0.s8 %v2423
        %v2425 = vlaneseq
        %v2426 = vshrl.u32 %v2425, 7
        %v2427 = vsub.s32 %v2424, %v2426
        %v2428 = vrot.slane %v2414, %v2427
        %v2429 = vcombine.high %v2421, %v2421
        %v2430 = vcombine.high %v2428, %v2428
        %v2432 = vunpack.c.l.s4 1966171168
        %v2433 = vunpack.c.0.s8 %v2432
        %v2434 = vlaneseq
        %v2435 = vshrl.u32 %v2434, 7
        %v2436 = vsub.s32 %v2433, %v2435
        %v2437 = vrot.slane %v2421, %v2436
        %v2439 = vunpack.c.l.s4 1966171168
        %v2440 = vunpack.c.0.s8 %v2439
        %v2441 = vlaneseq
        %v2442 = vshrl.u32 %v2441, 7
        %v2443 = vsub.s32 %v2440, %v2442
        %v2444 = vrot.slane %v2428, %v2443
        %v2446 = vunpack.c.l.s4 1966171168
        %v2447 = vunpack.c.0.s8 %v2446
        %v2448 = vlaneseq
        %v2449 = vshrl.u32 %v2448, 7
        %v2450 = vsub.s32 %v2447, %v2449
        %v2451 = vrot.slane %v2429, %v2450
        %v2453 = vunpack.c.l.s4 1966171168
        %v2454 = vunpack.c.0.s8 %v2453
        %v2455 = vlaneseq
        %v2456 = vshrl.u32 %v2455, 7
        %v2457 = vsub.s32 %v2454, %v2456
        %v2458 = vrot.slane %v2430, %v2457
        %v2459 = vcombine.high %v2437, %v2437
        %v2460 = vcombine.high %v2444, %v2444
        %v2461 = vcombine.high %v2451, %v2451
        %v2462 = vcombine.high %v2458, %v2458
        %v2465 = vcombine.high %v1408, %v1408
        %v2467 = vunpack.c.l.s4 1966171168
        %v2468 = vunpack.c.0.s8 %v2467
        %v2469 = vlaneseq
        %v2470 = vshrl.u32 %v2469, 7
        %v2471 = vsub.s32 %v2468, %v2470
        %v2472 = vrot.slane %v1408, %v2471
        %v2474 = vunpack.c.l.s4 1966171168
        %v2475 = vunpack.c.0.s8 %v2474
        %v2476 = vlaneseq
        %v2477 = vshrl.u32 %v2476, 7
        %v2478 = vsub.s32 %v2475, %v2477
        %v2479 = vrot.slane %v2465, %v2478
        %v2480 = vcombine.high %v2472, %v2472
        %v2481 = vcombine.high %v2479, %v2479
        %v2483 = vunpack.c.l.s4 1966171168
        %v2484 = vunpack.c.0.s8 %v2483
        %v2485 = vlaneseq
        %v2486 = vshrl.u32 %v2485, 7
        %v2487 = vsub.s32 %v2484, %v2486
        %v2488 = vrot.slane %v2472, %v2487
        %v2490 = vunpack.c.l.s4 1966171168
        %v2491 = vunpack.c.0.s8 %v2490
        %v2492 = vlaneseq
        %v2493 = vshrl.u32 %v2492, 7
        %v2494 = vsub.s32 %v2491, %v2493
        %v2495 = vrot.slane %v2479, %v2494
        %v2497 = vunpack.c.l.s4 1966171168
        %v2498 = vunpack.c.0.s8 %v2497
        %v2499 = vlaneseq
        %v2500 = vshrl.u32 %v2499, 7
        %v2501 = vsub.s32 %v2498, %v2500
        %v2502 = vrot.slane %v2480, %v2501
        %v2504 = vunpack.c.l.s4 1966171168
        %v2505 = vunpack.c.0.s8 %v2504
        %v2506 = vlaneseq
        %v2507 = vshrl.u32 %v2506, 7
        %v2508 = vsub.s32 %v2505, %v2507
        %v2509 = vrot.slane %v2481, %v2508
        %v2510 = vcombine.high %v2488, %v2488
        %v2511 = vcombine.high %v2495, %v2495
        %v2512 = vcombine.high %v2502, %v2502
        %v2513 = vcombine.high %v2509, %v2509
        %v2514 = vcombine.high %v1409, %v1409
        %v2516 = vunpack.c.l.s4 1966171168
        %v2517 = vunpack.c.0.s8 %v2516
        %v2518 = vlaneseq
        %v2519 = vshrl.u32 %v2518, 7
        %v2520 = vsub.s32 %v2517, %v2519
        %v2521 = vrot.slane %v1409, %v2520
        %v2523 = vunpack.c.l.s4 1966171168
        %v2524 = vunpack.c.0.s8 %v2523
        %v2525 = vlaneseq
        %v2526 = vshrl.u32 %v2525, 7
        %v2527 = vsub.s32 %v2524, %v2526
        %v2528 = vrot.slane %v2514, %v2527
        %v2529 = vcombine.high %v2521, %v2521
        %v2530 = vcombine.high %v2528, %v2528
        %v2532 = vunpack.c.l.s4 1966171168
        %v2533 = vunpack.c.0.s8 %v2532
        %v2534 = vlaneseq
        %v2535 = vshrl.u32 %v2534, 7
        %v2536 = vsub.s32 %v2533, %v2535
        %v2537 = vrot.slane %v2521, %v2536
        %v2539 = vunpack.c.l.s4 1966171168
        %v2540 = vunpack.c.0.s8 %v2539
        %v2541 = vlaneseq
        %v2542 = vshrl.u32 %v2541, 7
        %v2543 = vsub.s32 %v2540, %v2542
        %v2544 = vrot.slane %v2528, %v2543
        %v2546 = vunpack.c.l.s4 1966171168
        %v2547 = vunpack.c.0.s8 %v2546
        %v2548 = vlaneseq
        %v2549 = vshrl.u32 %v2548, 7
        %v2550 = vsub.s32 %v2547, %v2549
        %v2551 = vrot.slane %v2529, %v2550
        %v2553 = vunpack.c.l.s4 1966171168
        %v2554 = vunpack.c.0.s8 %v2553
        %v2555 = vlaneseq
        %v2556 = vshrl.u32 %v2555, 7
        %v2557 = vsub.s32 %v2554, %v2556
        %v2558 = vrot.slane %v2530, %v2557
        %v2559 = vcombine.high %v2537, %v2537
        %v2560 = vcombine.high %v2544, %v2544
        %v2561 = vcombine.high %v2551, %v2551
        %v2562 = vcombine.high %v2558, %v2558
        %v2563 = vsel %vm2361, 1, 0
        %v2564 = vsel %vm2362, 1, 0
        %vm2565 = vcmp.eq.s32.totalorder %v2563, 1
        %vm2566 = vcmp.eq.s32.totalorder %v2564, 1
        %v2567 = vlaneseq
        %v2568 = vshrl.u32 %v2567, 7
        %v2569 = vsub.s32 0, %v2568
        %v2570 = vrot.slane %v2388, %v2569
        %v2571 = vlaneseq
        %v2572 = vshrl.u32 %v2571, 7
        %v2573 = vsub.s32 0, %v2572
        %v2574 = vrot.slane %v2402, %v2573
        %v2575 = vlaneseq
        %v2576 = vshrl.u32 %v2575, 7
        %v2577 = vsub.s32 0, %v2576
        %v2578 = vrot.slane %v2410, %v2577
        %v2579 = vlaneseq
        %v2580 = vshrl.u32 %v2579, 7
        %v2581 = vsub.s32 0, %v2580
        %v2582 = vrot.slane %v2412, %v2581
        %v2583 = vlaneseq
        %v2584 = vshrl.u32 %v2583, 7
        %v2585 = vsub.s32 0, %v2584
        %v2586 = vrot.slane %v2395, %v2585
        %v2587 = vlaneseq
        %v2588 = vshrl.u32 %v2587, 7
        %v2589 = vsub.s32 0, %v2588
        %v2590 = vrot.slane %v2409, %v2589
        %v2591 = vlaneseq
        %v2592 = vshrl.u32 %v2591, 7
        %v2593 = vsub.s32 0, %v2592
        %v2594 = vrot.slane %v2411, %v2593
        %v2595 = vlaneseq
        %v2596 = vshrl.u32 %v2595, 7
        %v2597 = vsub.s32 0, %v2596
        %v2598 = vrot.slane %v2413, %v2597
        %v2599 = vlaneseq
        %v2600 = vshrl.u32 %v2599, 7
        %v2601 = vsub.s32 0, %v2600
        %v2602 = vrot.slane %v2437, %v2601
        %v2603 = vlaneseq
        %v2604 = vshrl.u32 %v2603, 7
        %v2605 = vsub.s32 0, %v2604
        %v2606 = vrot.slane %v2451, %v2605
        %v2607 = vlaneseq
        %v2608 = vshrl.u32 %v2607, 7
        %v2609 = vsub.s32 0, %v2608
        %v2610 = vrot.slane %v2459, %v2609
        %v2611 = vlaneseq
        %v2612 = vshrl.u32 %v2611, 7
        %v2613 = vsub.s32 0, %v2612
        %v2614 = vrot.slane %v2461, %v2613
        %v2615 = vlaneseq
        %v2616 = vshrl.u32 %v2615, 7
        %v2617 = vsub.s32 0, %v2616
        %v2618 = vrot.slane %v2444, %v2617
        %v2619 = vlaneseq
        %v2620 = vshrl.u32 %v2619, 7
        %v2621 = vsub.s32 0, %v2620
        %v2622 = vrot.slane %v2458, %v2621
        %v2623 = vlaneseq
        %v2624 = vshrl.u32 %v2623, 7
        %v2625 = vsub.s32 0, %v2624
        %v2626 = vrot.slane %v2460, %v2625
        %v2627 = vlaneseq
        %v2628 = vshrl.u32 %v2627, 7
        %v2629 = vsub.s32 0, %v2628
        %v2630 = vrot.slane %v2462, %v2629
        %v2647 = vlaneseq
        %v2648 = vshrl.u32 %v2647, 7
        %v2649 = vsub.s32 0, %v2648
        %v2650 = vrot.slane %v2488, %v2649
        %v2651 = vlaneseq
        %v2652 = vshrl.u32 %v2651, 7
        %v2653 = vsub.s32 0, %v2652
        %v2654 = vrot.slane %v2502, %v2653
        %v2655 = vlaneseq
        %v2656 = vshrl.u32 %v2655, 7
        %v2657 = vsub.s32 0, %v2656
        %v2658 = vrot.slane %v2510, %v2657
        %v2659 = vlaneseq
        %v2660 = vshrl.u32 %v2659, 7
        %v2661 = vsub.s32 0, %v2660
        %v2662 = vrot.slane %v2512, %v2661
        %v2663 = vlaneseq
        %v2664 = vshrl.u32 %v2663, 7
        %v2665 = vsub.s32 0, %v2664
        %v2666 = vrot.slane %v2495, %v2665
        %v2667 = vlaneseq
        %v2668 = vshrl.u32 %v2667, 7
        %v2669 = vsub.s32 0, %v2668
        %v2670 = vrot.slane %v2509, %v2669
        %v2671 = vlaneseq
        %v2672 = vshrl.u32 %v2671, 7
        %v2673 = vsub.s32 0, %v2672
        %v2674 = vrot.slane %v2511, %v2673
        %v2675 = vlaneseq
        %v2676 = vshrl.u32 %v2675, 7
        %v2677 = vsub.s32 0, %v2676
        %v2678 = vrot.slane %v2513, %v2677
        %v2679 = vlaneseq
        %v2680 = vshrl.u32 %v2679, 7
        %v2681 = vsub.s32 0, %v2680
        %v2682 = vrot.slane %v2537, %v2681
        %v2683 = vlaneseq
        %v2684 = vshrl.u32 %v2683, 7
        %v2685 = vsub.s32 0, %v2684
        %v2686 = vrot.slane %v2551, %v2685
        %v2687 = vlaneseq
        %v2688 = vshrl.u32 %v2687, 7
        %v2689 = vsub.s32 0, %v2688
        %v2690 = vrot.slane %v2559, %v2689
        %v2691 = vlaneseq
        %v2692 = vshrl.u32 %v2691, 7
        %v2693 = vsub.s32 0, %v2692
        %v2694 = vrot.slane %v2561, %v2693
        %v2695 = vlaneseq
        %v2696 = vshrl.u32 %v2695, 7
        %v2697 = vsub.s32 0, %v2696
        %v2698 = vrot.slane %v2544, %v2697
        %v2699 = vlaneseq
        %v2700 = vshrl.u32 %v2699, 7
        %v2701 = vsub.s32 0, %v2700
        %v2702 = vrot.slane %v2558, %v2701
        %v2703 = vlaneseq
        %v2704 = vshrl.u32 %v2703, 7
        %v2705 = vsub.s32 0, %v2704
        %v2706 = vrot.slane %v2560, %v2705
        %v2707 = vlaneseq
        %v2708 = vshrl.u32 %v2707, 7
        %v2709 = vsub.s32 0, %v2708
        %v2710 = vrot.slane %v2562, %v2709
        %v2727 = vsel %vm2565, %v2570, %v2650
        %v2728 = vsel %vm2566, %v2570, %v2650
        %v2729 = vsel %vm2565, %v2574, %v2654
        %v2730 = vsel %vm2566, %v2574, %v2654
        %v2731 = vsel %vm2565, %v2578, %v2658
        %v2732 = vsel %vm2566, %v2578, %v2658
        %v2733 = vsel %vm2565, %v2582, %v2662
        %v2734 = vsel %vm2566, %v2582, %v2662
        %v2735 = vsel %vm2565, %v2586, %v2666
        %v2736 = vsel %vm2566, %v2586, %v2666
        %v2737 = vsel %vm2565, %v2590, %v2670
        %v2738 = vsel %vm2566, %v2590, %v2670
        %v2739 = vsel %vm2565, %v2594, %v2674
        %v2740 = vsel %vm2566, %v2594, %v2674
        %v2741 = vsel %vm2565, %v2598, %v2678
        %v2742 = vsel %vm2566, %v2598, %v2678
        %v2743 = vsel %vm2565, %v2602, %v2682
        %v2744 = vsel %vm2566, %v2602, %v2682
        %v2745 = vsel %vm2565, %v2606, %v2686
        %v2746 = vsel %vm2566, %v2606, %v2686
        %v2747 = vsel %vm2565, %v2610, %v2690
        %v2748 = vsel %vm2566, %v2610, %v2690
        %v2749 = vsel %vm2565, %v2614, %v2694
        %v2750 = vsel %vm2566, %v2614, %v2694
        %v2751 = vsel %vm2565, %v2618, %v2698
        %v2752 = vsel %vm2566, %v2618, %v2698
        %v2753 = vsel %vm2565, %v2622, %v2702
        %v2754 = vsel %vm2566, %v2622, %v2702
        %v2755 = vsel %vm2565, %v2626, %v2706
        %v2756 = vsel %vm2566, %v2626, %v2706
        %v2757 = vsel %vm2565, %v2630, %v2710
        %v2758 = vsel %vm2566, %v2630, %v2710
        %v2759 = vmul.f32 %v2325, %v2727
        %v2760 = vmul.f32 %v2326, %v2728
        %v2761 = vmul.f32 %v2327, %v2729
        %v2762 = vmul.f32 %v2328, %v2730
        %v2763 = vmul.f32 %v2329, %v2731
        %v2764 = vmul.f32 %v2330, %v2732
        %v2765 = vmul.f32 %v2331, %v2733
        %v2766 = vmul.f32 %v2332, %v2734
        %v2767 = vmul.f32 %v2333, %v2735
        %v2768 = vmul.f32 %v2334, %v2736
        %v2769 = vmul.f32 %v2335, %v2737
        %v2770 = vmul.f32 %v2336, %v2738
        %v2771 = vmul.f32 %v2337, %v2739
        %v2772 = vmul.f32 %v2338, %v2740
        %v2773 = vmul.f32 %v2339, %v2741
        %v2774 = vmul.f32 %v2340, %v2742
        %v2775 = vmul.f32 %v2341, %v2743
        %v2776 = vmul.f32 %v2342, %v2744
        %v2777 = vmul.f32 %v2343, %v2745
        %v2778 = vmul.f32 %v2344, %v2746
        %v2779 = vmul.f32 %v2345, %v2747
        %v2780 = vmul.f32 %v2346, %v2748
        %v2781 = vmul.f32 %v2347, %v2749
        %v2782 = vmul.f32 %v2348, %v2750
        %v2783 = vmul.f32 %v2349, %v2751
        %v2784 = vmul.f32 %v2350, %v2752
        %v2785 = vmul.f32 %v2351, %v2753
        %v2786 = vmul.f32 %v2352, %v2754
        %v2787 = vmul.f32 %v2353, %v2755
        %v2788 = vmul.f32 %v2354, %v2756
        %v2789 = vmul.f32 %v2355, %v2757
        %v2790 = vmul.f32 %v2356, %v2758
        %v2791 = vshra.s32 %v1521, 3
        %v2792 = vshra.s32 %v1522, 3
        %v2793 = vand.u32 %v2791, 1
        %v2794 = vand.u32 %v2792, 1
        %vm2795 = vcmp.eq.s32.totalorder %v2793, 1
        %vm2796 = vcmp.eq.s32.totalorder %v2794, 1
        %v2799 = vcombine.high %v1446, %v1446
        %v2801 = vunpack.c.l.s4 1966171168
        %v2802 = vunpack.c.0.s8 %v2801
        %v2803 = vlaneseq
        %v2804 = vshrl.u32 %v2803, 7
        %v2805 = vsub.s32 %v2802, %v2804
        %v2806 = vrot.slane %v1446, %v2805
        %v2808 = vunpack.c.l.s4 1966171168
        %v2809 = vunpack.c.0.s8 %v2808
        %v2810 = vlaneseq
        %v2811 = vshrl.u32 %v2810, 7
        %v2812 = vsub.s32 %v2809, %v2811
        %v2813 = vrot.slane %v2799, %v2812
        %v2814 = vcombine.high %v2806, %v2806
        %v2815 = vcombine.high %v2813, %v2813
        %v2817 = vunpack.c.l.s4 1966171168
        %v2818 = vunpack.c.0.s8 %v2817
        %v2819 = vlaneseq
        %v2820 = vshrl.u32 %v2819, 7
        %v2821 = vsub.s32 %v2818, %v2820
        %v2822 = vrot.slane %v2806, %v2821
        %v2824 = vunpack.c.l.s4 1966171168
        %v2825 = vunpack.c.0.s8 %v2824
        %v2826 = vlaneseq
        %v2827 = vshrl.u32 %v2826, 7
        %v2828 = vsub.s32 %v2825, %v2827
        %v2829 = vrot.slane %v2813, %v2828
        %v2831 = vunpack.c.l.s4 1966171168
        %v2832 = vunpack.c.0.s8 %v2831
        %v2833 = vlaneseq
        %v2834 = vshrl.u32 %v2833, 7
        %v2835 = vsub.s32 %v2832, %v2834
        %v2836 = vrot.slane %v2814, %v2835
        %v2838 = vunpack.c.l.s4 1966171168
        %v2839 = vunpack.c.0.s8 %v2838
        %v2840 = vlaneseq
        %v2841 = vshrl.u32 %v2840, 7
        %v2842 = vsub.s32 %v2839, %v2841
        %v2843 = vrot.slane %v2815, %v2842
        %v2844 = vcombine.high %v2822, %v2822
        %v2845 = vcombine.high %v2829, %v2829
        %v2846 = vcombine.high %v2836, %v2836
        %v2847 = vcombine.high %v2843, %v2843
        %v2848 = vcombine.high %v1447, %v1447
        %v2850 = vunpack.c.l.s4 1966171168
        %v2851 = vunpack.c.0.s8 %v2850
        %v2852 = vlaneseq
        %v2853 = vshrl.u32 %v2852, 7
        %v2854 = vsub.s32 %v2851, %v2853
        %v2855 = vrot.slane %v1447, %v2854
        %v2857 = vunpack.c.l.s4 1966171168
        %v2858 = vunpack.c.0.s8 %v2857
        %v2859 = vlaneseq
        %v2860 = vshrl.u32 %v2859, 7
        %v2861 = vsub.s32 %v2858, %v2860
        %v2862 = vrot.slane %v2848, %v2861
        %v2863 = vcombine.high %v2855, %v2855
        %v2864 = vcombine.high %v2862, %v2862
        %v2866 = vunpack.c.l.s4 1966171168
        %v2867 = vunpack.c.0.s8 %v2866
        %v2868 = vlaneseq
        %v2869 = vshrl.u32 %v2868, 7
        %v2870 = vsub.s32 %v2867, %v2869
        %v2871 = vrot.slane %v2855, %v2870
        %v2873 = vunpack.c.l.s4 1966171168
        %v2874 = vunpack.c.0.s8 %v2873
        %v2875 = vlaneseq
        %v2876 = vshrl.u32 %v2875, 7
        %v2877 = vsub.s32 %v2874, %v2876
        %v2878 = vrot.slane %v2862, %v2877
        %v2880 = vunpack.c.l.s4 1966171168
        %v2881 = vunpack.c.0.s8 %v2880
        %v2882 = vlaneseq
        %v2883 = vshrl.u32 %v2882, 7
        %v2884 = vsub.s32 %v2881, %v2883
        %v2885 = vrot.slane %v2863, %v2884
        %v2887 = vunpack.c.l.s4 1966171168
        %v2888 = vunpack.c.0.s8 %v2887
        %v2889 = vlaneseq
        %v2890 = vshrl.u32 %v2889, 7
        %v2891 = vsub.s32 %v2888, %v2890
        %v2892 = vrot.slane %v2864, %v2891
        %v2893 = vcombine.high %v2871, %v2871
        %v2894 = vcombine.high %v2878, %v2878
        %v2895 = vcombine.high %v2885, %v2885
        %v2896 = vcombine.high %v2892, %v2892
        %v2899 = vcombine.high %v1444, %v1444
        %v2901 = vunpack.c.l.s4 1966171168
        %v2902 = vunpack.c.0.s8 %v2901
        %v2903 = vlaneseq
        %v2904 = vshrl.u32 %v2903, 7
        %v2905 = vsub.s32 %v2902, %v2904
        %v2906 = vrot.slane %v1444, %v2905
        %v2908 = vunpack.c.l.s4 1966171168
        %v2909 = vunpack.c.0.s8 %v2908
        %v2910 = vlaneseq
        %v2911 = vshrl.u32 %v2910, 7
        %v2912 = vsub.s32 %v2909, %v2911
        %v2913 = vrot.slane %v2899, %v2912
        %v2914 = vcombine.high %v2906, %v2906
        %v2915 = vcombine.high %v2913, %v2913
        %v2917 = vunpack.c.l.s4 1966171168
        %v2918 = vunpack.c.0.s8 %v2917
        %v2919 = vlaneseq
        %v2920 = vshrl.u32 %v2919, 7
        %v2921 = vsub.s32 %v2918, %v2920
        %v2922 = vrot.slane %v2906, %v2921
        %v2924 = vunpack.c.l.s4 1966171168
        %v2925 = vunpack.c.0.s8 %v2924
        %v2926 = vlaneseq
        %v2927 = vshrl.u32 %v2926, 7
        %v2928 = vsub.s32 %v2925, %v2927
        %v2929 = vrot.slane %v2913, %v2928
        %v2931 = vunpack.c.l.s4 1966171168
        %v2932 = vunpack.c.0.s8 %v2931
        %v2933 = vlaneseq
        %v2934 = vshrl.u32 %v2933, 7
        %v2935 = vsub.s32 %v2932, %v2934
        %v2936 = vrot.slane %v2914, %v2935
        %v2938 = vunpack.c.l.s4 1966171168
        %v2939 = vunpack.c.0.s8 %v2938
        %v2940 = vlaneseq
        %v2941 = vshrl.u32 %v2940, 7
        %v2942 = vsub.s32 %v2939, %v2941
        %v2943 = vrot.slane %v2915, %v2942
        %v2944 = vcombine.high %v2922, %v2922
        %v2945 = vcombine.high %v2929, %v2929
        %v2946 = vcombine.high %v2936, %v2936
        %v2947 = vcombine.high %v2943, %v2943
        %v2948 = vcombine.high %v1445, %v1445
        %v2950 = vunpack.c.l.s4 1966171168
        %v2951 = vunpack.c.0.s8 %v2950
        %v2952 = vlaneseq
        %v2953 = vshrl.u32 %v2952, 7
        %v2954 = vsub.s32 %v2951, %v2953
        %v2955 = vrot.slane %v1445, %v2954
        %v2957 = vunpack.c.l.s4 1966171168
        %v2958 = vunpack.c.0.s8 %v2957
        %v2959 = vlaneseq
        %v2960 = vshrl.u32 %v2959, 7
        %v2961 = vsub.s32 %v2958, %v2960
        %v2962 = vrot.slane %v2948, %v2961
        %v2963 = vcombine.high %v2955, %v2955
        %v2964 = vcombine.high %v2962, %v2962
        %v2966 = vunpack.c.l.s4 1966171168
        %v2967 = vunpack.c.0.s8 %v2966
        %v2968 = vlaneseq
        %v2969 = vshrl.u32 %v2968, 7
        %v2970 = vsub.s32 %v2967, %v2969
        %v2971 = vrot.slane %v2955, %v2970
        %v2973 = vunpack.c.l.s4 1966171168
        %v2974 = vunpack.c.0.s8 %v2973
        %v2975 = vlaneseq
        %v2976 = vshrl.u32 %v2975, 7
        %v2977 = vsub.s32 %v2974, %v2976
        %v2978 = vrot.slane %v2962, %v2977
        %v2980 = vunpack.c.l.s4 1966171168
        %v2981 = vunpack.c.0.s8 %v2980
        %v2982 = vlaneseq
        %v2983 = vshrl.u32 %v2982, 7
        %v2984 = vsub.s32 %v2981, %v2983
        %v2985 = vrot.slane %v2963, %v2984
        %v2987 = vunpack.c.l.s4 1966171168
        %v2988 = vunpack.c.0.s8 %v2987
        %v2989 = vlaneseq
        %v2990 = vshrl.u32 %v2989, 7
        %v2991 = vsub.s32 %v2988, %v2990
        %v2992 = vrot.slane %v2964, %v2991
        %v2993 = vcombine.high %v2971, %v2971
        %v2994 = vcombine.high %v2978, %v2978
        %v2995 = vcombine.high %v2985, %v2985
        %v2996 = vcombine.high %v2992, %v2992
        %v2997 = vsel %vm2795, 1, 0
        %v2998 = vsel %vm2796, 1, 0
        %vm2999 = vcmp.eq.s32.totalorder %v2997, 1
        %vm3000 = vcmp.eq.s32.totalorder %v2998, 1
        %v3001 = vlaneseq
        %v3002 = vshrl.u32 %v3001, 7
        %v3003 = vsub.s32 0, %v3002
        %v3004 = vrot.slane %v2822, %v3003
        %v3005 = vlaneseq
        %v3006 = vshrl.u32 %v3005, 7
        %v3007 = vsub.s32 0, %v3006
        %v3008 = vrot.slane %v2836, %v3007
        %v3009 = vlaneseq
        %v3010 = vshrl.u32 %v3009, 7
        %v3011 = vsub.s32 0, %v3010
        %v3012 = vrot.slane %v2844, %v3011
        %v3013 = vlaneseq
        %v3014 = vshrl.u32 %v3013, 7
        %v3015 = vsub.s32 0, %v3014
        %v3016 = vrot.slane %v2846, %v3015
        %v3017 = vlaneseq
        %v3018 = vshrl.u32 %v3017, 7
        %v3019 = vsub.s32 0, %v3018
        %v3020 = vrot.slane %v2829, %v3019
        %v3021 = vlaneseq
        %v3022 = vshrl.u32 %v3021, 7
        %v3023 = vsub.s32 0, %v3022
        %v3024 = vrot.slane %v2843, %v3023
        %v3025 = vlaneseq
        %v3026 = vshrl.u32 %v3025, 7
        %v3027 = vsub.s32 0, %v3026
        %v3028 = vrot.slane %v2845, %v3027
        %v3029 = vlaneseq
        %v3030 = vshrl.u32 %v3029, 7
        %v3031 = vsub.s32 0, %v3030
        %v3032 = vrot.slane %v2847, %v3031
        %v3033 = vlaneseq
        %v3034 = vshrl.u32 %v3033, 7
        %v3035 = vsub.s32 0, %v3034
        %v3036 = vrot.slane %v2871, %v3035
        %v3037 = vlaneseq
        %v3038 = vshrl.u32 %v3037, 7
        %v3039 = vsub.s32 0, %v3038
        %v3040 = vrot.slane %v2885, %v3039
        %v3041 = vlaneseq
        %v3042 = vshrl.u32 %v3041, 7
        %v3043 = vsub.s32 0, %v3042
        %v3044 = vrot.slane %v2893, %v3043
        %v3045 = vlaneseq
        %v3046 = vshrl.u32 %v3045, 7
        %v3047 = vsub.s32 0, %v3046
        %v3048 = vrot.slane %v2895, %v3047
        %v3049 = vlaneseq
        %v3050 = vshrl.u32 %v3049, 7
        %v3051 = vsub.s32 0, %v3050
        %v3052 = vrot.slane %v2878, %v3051
        %v3053 = vlaneseq
        %v3054 = vshrl.u32 %v3053, 7
        %v3055 = vsub.s32 0, %v3054
        %v3056 = vrot.slane %v2892, %v3055
        %v3057 = vlaneseq
        %v3058 = vshrl.u32 %v3057, 7
        %v3059 = vsub.s32 0, %v3058
        %v3060 = vrot.slane %v2894, %v3059
        %v3061 = vlaneseq
        %v3062 = vshrl.u32 %v3061, 7
        %v3063 = vsub.s32 0, %v3062
        %v3064 = vrot.slane %v2896, %v3063
        %v3081 = vlaneseq
        %v3082 = vshrl.u32 %v3081, 7
        %v3083 = vsub.s32 0, %v3082
        %v3084 = vrot.slane %v2922, %v3083
        %v3085 = vlaneseq
        %v3086 = vshrl.u32 %v3085, 7
        %v3087 = vsub.s32 0, %v3086
        %v3088 = vrot.slane %v2936, %v3087
        %v3089 = vlaneseq
        %v3090 = vshrl.u32 %v3089, 7
        %v3091 = vsub.s32 0, %v3090
        %v3092 = vrot.slane %v2944, %v3091
        %v3093 = vlaneseq
        %v3094 = vshrl.u32 %v3093, 7
        %v3095 = vsub.s32 0, %v3094
        %v3096 = vrot.slane %v2946, %v3095
        %v3097 = vlaneseq
        %v3098 = vshrl.u32 %v3097, 7
        %v3099 = vsub.s32 0, %v3098
        %v3100 = vrot.slane %v2929, %v3099
        %v3101 = vlaneseq
        %v3102 = vshrl.u32 %v3101, 7
        %v3103 = vsub.s32 0, %v3102
        %v3104 = vrot.slane %v2943, %v3103
        %v3105 = vlaneseq
        %v3106 = vshrl.u32 %v3105, 7
        %v3107 = vsub.s32 0, %v3106
        %v3108 = vrot.slane %v2945, %v3107
        %v3109 = vlaneseq
        %v3110 = vshrl.u32 %v3109, 7
        %v3111 = vsub.s32 0, %v3110
        %v3112 = vrot.slane %v2947, %v3111
        %v3113 = vlaneseq
        %v3114 = vshrl.u32 %v3113, 7
        %v3115 = vsub.s32 0, %v3114
        %v3116 = vrot.slane %v2971, %v3115
        %v3117 = vlaneseq
        %v3118 = vshrl.u32 %v3117, 7
        %v3119 = vsub.s32 0, %v3118
        %v3120 = vrot.slane %v2985, %v3119
        %v3121 = vlaneseq
        %v3122 = vshrl.u32 %v3121, 7
        %v3123 = vsub.s32 0, %v3122
        %v3124 = vrot.slane %v2993, %v3123
        %v3125 = vlaneseq
        %v3126 = vshrl.u32 %v3125, 7
        %v3127 = vsub.s32 0, %v3126
        %v3128 = vrot.slane %v2995, %v3127
        %v3129 = vlaneseq
        %v3130 = vshrl.u32 %v3129, 7
        %v3131 = vsub.s32 0, %v3130
        %v3132 = vrot.slane %v2978, %v3131
        %v3133 = vlaneseq
        %v3134 = vshrl.u32 %v3133, 7
        %v3135 = vsub.s32 0, %v3134
        %v3136 = vrot.slane %v2992, %v3135
        %v3137 = vlaneseq
        %v3138 = vshrl.u32 %v3137, 7
        %v3139 = vsub.s32 0, %v3138
        %v3140 = vrot.slane %v2994, %v3139
        %v3141 = vlaneseq
        %v3142 = vshrl.u32 %v3141, 7
        %v3143 = vsub.s32 0, %v3142
        %v3144 = vrot.slane %v2996, %v3143
        %v3161 = vsel %vm2999, %v3004, %v3084
        %v3162 = vsel %vm3000, %v3004, %v3084
        %v3163 = vsel %vm2999, %v3008, %v3088
        %v3164 = vsel %vm3000, %v3008, %v3088
        %v3165 = vsel %vm2999, %v3012, %v3092
        %v3166 = vsel %vm3000, %v3012, %v3092
        %v3167 = vsel %vm2999, %v3016, %v3096
        %v3168 = vsel %vm3000, %v3016, %v3096
        %v3169 = vsel %vm2999, %v3020, %v3100
        %v3170 = vsel %vm3000, %v3020, %v3100
        %v3171 = vsel %vm2999, %v3024, %v3104
        %v3172 = vsel %vm3000, %v3024, %v3104
        %v3173 = vsel %vm2999, %v3028, %v3108
        %v3174 = vsel %vm3000, %v3028, %v3108
        %v3175 = vsel %vm2999, %v3032, %v3112
        %v3176 = vsel %vm3000, %v3032, %v3112
        %v3177 = vsel %vm2999, %v3036, %v3116
        %v3178 = vsel %vm3000, %v3036, %v3116
        %v3179 = vsel %vm2999, %v3040, %v3120
        %v3180 = vsel %vm3000, %v3040, %v3120
        %v3181 = vsel %vm2999, %v3044, %v3124
        %v3182 = vsel %vm3000, %v3044, %v3124
        %v3183 = vsel %vm2999, %v3048, %v3128
        %v3184 = vsel %vm3000, %v3048, %v3128
        %v3185 = vsel %vm2999, %v3052, %v3132
        %v3186 = vsel %vm3000, %v3052, %v3132
        %v3187 = vsel %vm2999, %v3056, %v3136
        %v3188 = vsel %vm3000, %v3056, %v3136
        %v3189 = vsel %vm2999, %v3060, %v3140
        %v3190 = vsel %vm3000, %v3060, %v3140
        %v3191 = vsel %vm2999, %v3064, %v3144
        %v3192 = vsel %vm3000, %v3064, %v3144
        %v3193 = vmul.f32 %v2759, %v3161
        %v3194 = vmul.f32 %v2760, %v3162
        %v3195 = vmul.f32 %v2761, %v3163
        %v3196 = vmul.f32 %v2762, %v3164
        %v3197 = vmul.f32 %v2763, %v3165
        %v3198 = vmul.f32 %v2764, %v3166
        %v3199 = vmul.f32 %v2765, %v3167
        %v3200 = vmul.f32 %v2766, %v3168
        %v3201 = vmul.f32 %v2767, %v3169
        %v3202 = vmul.f32 %v2768, %v3170
        %v3203 = vmul.f32 %v2769, %v3171
        %v3204 = vmul.f32 %v2770, %v3172
        %v3205 = vmul.f32 %v2771, %v3173
        %v3206 = vmul.f32 %v2772, %v3174
        %v3207 = vmul.f32 %v2773, %v3175
        %v3208 = vmul.f32 %v2774, %v3176
        %v3209 = vmul.f32 %v2775, %v3177
        %v3210 = vmul.f32 %v2776, %v3178
        %v3211 = vmul.f32 %v2777, %v3179
        %v3212 = vmul.f32 %v2778, %v3180
        %v3213 = vmul.f32 %v2779, %v3181
        %v3214 = vmul.f32 %v2780, %v3182
        %v3215 = vmul.f32 %v2781, %v3183
        %v3216 = vmul.f32 %v2782, %v3184
        %v3217 = vmul.f32 %v2783, %v3185
        %v3218 = vmul.f32 %v2784, %v3186
        %v3219 = vmul.f32 %v2785, %v3187
        %v3220 = vmul.f32 %v2786, %v3188
        %v3221 = vmul.f32 %v2787, %v3189
        %v3222 = vmul.f32 %v2788, %v3190
        %v3223 = vmul.f32 %v2789, %v3191
        %v3224 = vmul.f32 %v2790, %v3192
        %v3225 = vmul.f32 %v1480, %v1516
        %v3226 = vmul.f32 %v1481, %v1517
        %v3227 = vmul.f32 %v1482, %v1516
        %v3228 = vmul.f32 %v1483, %v1517
        %v3229 = vmul.f32 %v1480, %v1518
        %v3230 = vmul.f32 %v1481, %v1519
        %v3231 = vmul.f32 %v1482, %v1518
        %v3232 = vmul.f32 %v1483, %v1519
        %v3233 = vld [vmem:[%s335] sm:$0xf]
        %v3234 = vld [vmem:[%s335 + $0x4] sm:$0xf]
        %v3235 = vunpack.c.l.bf16 %v3233
        %v3236 = vunpack.c.l.bf16 %v3234
        %v3237 = vmul.f32 %v3193, %v3235
        %v3238 = vmul.f32 %v3194, %v3236
        %v3239 = vmul.f32 %v3195, %v3235
        %v3240 = vmul.f32 %v3196, %v3236
        %v3241 = vmul.f32 %v3197, %v3235
        %v3242 = vmul.f32 %v3198, %v3236
        %v3243 = vmul.f32 %v3199, %v3235
        %v3244 = vmul.f32 %v3200, %v3236
        %v3245 = vmul.f32 %v3201, %v3235
        %v3246 = vmul.f32 %v3202, %v3236
        %v3247 = vmul.f32 %v3203, %v3235
        %v3248 = vmul.f32 %v3204, %v3236
        %v3249 = vmul.f32 %v3205, %v3235
        %v3250 = vmul.f32 %v3206, %v3236
        %v3251 = vmul.f32 %v3207, %v3235
        %v3252 = vmul.f32 %v3208, %v3236
        %v3253 = vmul.f32 %v3209, %v3235
        %v3254 = vmul.f32 %v3210, %v3236
        %v3255 = vmul.f32 %v3211, %v3235
        %v3256 = vmul.f32 %v3212, %v3236
        %v3257 = vmul.f32 %v3213, %v3235
        %v3258 = vmul.f32 %v3214, %v3236
        %v3259 = vmul.f32 %v3215, %v3235
        %v3260 = vmul.f32 %v3216, %v3236
        %v3261 = vmul.f32 %v3217, %v3235
        %v3262 = vmul.f32 %v3218, %v3236
        %v3263 = vmul.f32 %v3219, %v3235
        %v3264 = vmul.f32 %v3220, %v3236
        %v3265 = vmul.f32 %v3221, %v3235
        %v3266 = vmul.f32 %v3222, %v3236
        %v3267 = vmul.f32 %v3223, %v3235
        %v3268 = vmul.f32 %v3224, %v3236
        %v3269 = vadd.f32 %v3237, %v3238
        %v3270 = vrot.slane %v3269, 4
        %v3271 = vadd.f32 %v3269, %v3270
        %v3272 = vrot.slane %v3271, 2
        %v3273 = vadd.f32 %v3271, %v3272
        %v3274 = vrot.slane %v3273, 1
        %v3275 = vadd.f32 %v3273, %v3274
        %v3276 = vadd.f32 %v3239, %v3240
        %v3277 = vrot.slane %v3276, 4
        %v3278 = vadd.f32 %v3276, %v3277
        %v3279 = vrot.slane %v3278, 2
        %v3280 = vadd.f32 %v3278, %v3279
        %v3281 = vrot.slane %v3280, 1
        %v3282 = vadd.f32 %v3280, %v3281
        %v3283 = vadd.f32 %v3241, %v3242
        %v3284 = vrot.slane %v3283, 4
        %v3285 = vadd.f32 %v3283, %v3284
        %v3286 = vrot.slane %v3285, 2
        %v3287 = vadd.f32 %v3285, %v3286
        %v3288 = vrot.slane %v3287, 1
        %v3289 = vadd.f32 %v3287, %v3288
        %v3290 = vadd.f32 %v3243, %v3244
        %v3291 = vrot.slane %v3290, 4
        %v3292 = vadd.f32 %v3290, %v3291
        %v3293 = vrot.slane %v3292, 2
        %v3294 = vadd.f32 %v3292, %v3293
        %v3295 = vrot.slane %v3294, 1
        %v3296 = vadd.f32 %v3294, %v3295
        %v3297 = vadd.f32 %v3245, %v3246
        %v3298 = vrot.slane %v3297, 4
        %v3299 = vadd.f32 %v3297, %v3298
        %v3300 = vrot.slane %v3299, 2
        %v3301 = vadd.f32 %v3299, %v3300
        %v3302 = vrot.slane %v3301, 1
        %v3303 = vadd.f32 %v3301, %v3302
        %v3304 = vadd.f32 %v3247, %v3248
        %v3305 = vrot.slane %v3304, 4
        %v3306 = vadd.f32 %v3304, %v3305
        %v3307 = vrot.slane %v3306, 2
        %v3308 = vadd.f32 %v3306, %v3307
        %v3309 = vrot.slane %v3308, 1
        %v3310 = vadd.f32 %v3308, %v3309
        %v3311 = vadd.f32 %v3249, %v3250
        %v3312 = vrot.slane %v3311, 4
        %v3313 = vadd.f32 %v3311, %v3312
        %v3314 = vrot.slane %v3313, 2
        %v3315 = vadd.f32 %v3313, %v3314
        %v3316 = vrot.slane %v3315, 1
        %v3317 = vadd.f32 %v3315, %v3316
        %v3318 = vadd.f32 %v3251, %v3252
        %v3319 = vrot.slane %v3318, 4
        %v3320 = vadd.f32 %v3318, %v3319
        %v3321 = vrot.slane %v3320, 2
        %v3322 = vadd.f32 %v3320, %v3321
        %v3323 = vrot.slane %v3322, 1
        %v3324 = vadd.f32 %v3322, %v3323
        %v3325 = vadd.f32 %v3253, %v3254
        %v3326 = vrot.slane %v3325, 4
        %v3327 = vadd.f32 %v3325, %v3326
        %v3328 = vrot.slane %v3327, 2
        %v3329 = vadd.f32 %v3327, %v3328
        %v3330 = vrot.slane %v3329, 1
        %v3331 = vadd.f32 %v3329, %v3330
        %v3332 = vadd.f32 %v3255, %v3256
        %v3333 = vrot.slane %v3332, 4
        %v3334 = vadd.f32 %v3332, %v3333
        %v3335 = vrot.slane %v3334, 2
        %v3336 = vadd.f32 %v3334, %v3335
        %v3337 = vrot.slane %v3336, 1
        %v3338 = vadd.f32 %v3336, %v3337
        %v3339 = vadd.f32 %v3257, %v3258
        %v3340 = vrot.slane %v3339, 4
        %v3341 = vadd.f32 %v3339, %v3340
        %v3342 = vrot.slane %v3341, 2
        %v3343 = vadd.f32 %v3341, %v3342
        %v3344 = vrot.slane %v3343, 1
        %v3345 = vadd.f32 %v3343, %v3344
        %v3346 = vadd.f32 %v3259, %v3260
        %v3347 = vrot.slane %v3346, 4
        %v3348 = vadd.f32 %v3346, %v3347
        %v3349 = vrot.slane %v3348, 2
        %v3350 = vadd.f32 %v3348, %v3349
        %v3351 = vrot.slane %v3350, 1
        %v3352 = vadd.f32 %v3350, %v3351
        %v3353 = vadd.f32 %v3261, %v3262
        %v3354 = vrot.slane %v3353, 4
        %v3355 = vadd.f32 %v3353, %v3354
        %v3356 = vrot.slane %v3355, 2
        %v3357 = vadd.f32 %v3355, %v3356
        %v3358 = vrot.slane %v3357, 1
        %v3359 = vadd.f32 %v3357, %v3358
        %v3360 = vadd.f32 %v3263, %v3264
        %v3361 = vrot.slane %v3360, 4
        %v3362 = vadd.f32 %v3360, %v3361
        %v3363 = vrot.slane %v3362, 2
        %v3364 = vadd.f32 %v3362, %v3363
        %v3365 = vrot.slane %v3364, 1
        %v3366 = vadd.f32 %v3364, %v3365
        %v3367 = vadd.f32 %v3265, %v3266
        %v3368 = vrot.slane %v3367, 4
        %v3369 = vadd.f32 %v3367, %v3368
        %v3370 = vrot.slane %v3369, 2
        %v3371 = vadd.f32 %v3369, %v3370
        %v3372 = vrot.slane %v3371, 1
        %v3373 = vadd.f32 %v3371, %v3372
        %v3374 = vadd.f32 %v3267, %v3268
        %v3375 = vrot.slane %v3374, 4
        %v3376 = vadd.f32 %v3374, %v3375
        %v3377 = vrot.slane %v3376, 2
        %v3378 = vadd.f32 %v3376, %v3377
        %v3379 = vrot.slane %v3378, 1
        %v3380 = vadd.f32 %v3378, %v3379
        %vm3397 = vcmask 1041409
        %v3398 = vsel %vm3397, %v3282, %v3275
        %vm3399 = vcmask 1042434
        %v3400 = vsel %vm3399, %v3289, %v3398
        %vm3401 = vcmask 1043459
        %v3402 = vsel %vm3401, %v3296, %v3400
        %vm3403 = vcmask 1044484
        %v3404 = vsel %vm3403, %v3303, %v3402
        %vm3405 = vcmask 1045509
        %v3406 = vsel %vm3405, %v3310, %v3404
        %vm3407 = vcmask 1046534
        %v3408 = vsel %vm3407, %v3317, %v3406
        %vm3409 = vcmask 1047559
        %v3410 = vsel %vm3409, %v3324, %v3408
        %v3411 = vsel %vm3397, %v3338, %v3331
        %v3412 = vsel %vm3399, %v3345, %v3411
        %v3413 = vsel %vm3401, %v3352, %v3412
        %v3414 = vsel %vm3403, %v3359, %v3413
        %v3415 = vsel %vm3405, %v3366, %v3414
        %v3416 = vsel %vm3407, %v3373, %v3415
        %v3417 = vsel %vm3409, %v3380, %v3416
        %v3420 = vmul.f32 %v3225, %v3410
        %v3421 = vmul.f32 %v3226, %v3417
        %v3422 = vadd.f32 %v3420, 0.0
        %v3423 = vadd.f32 %v3421, 0.0
        %v3424 = vld [vmem:[%s335 + $0x8] sm:$0xf]
        %v3425 = vld [vmem:[%s335 + $0xc] sm:$0xf]
        %v3426 = vunpack.c.l.bf16 %v3424
        %v3427 = vunpack.c.l.bf16 %v3425
        %v3428 = vmul.f32 %v3193, %v3426
        %v3429 = vmul.f32 %v3194, %v3427
        %v3430 = vmul.f32 %v3195, %v3426
        %v3431 = vmul.f32 %v3196, %v3427
        %v3432 = vmul.f32 %v3197, %v3426
        %v3433 = vmul.f32 %v3198, %v3427
        %v3434 = vmul.f32 %v3199, %v3426
        %v3435 = vmul.f32 %v3200, %v3427
        %v3436 = vmul.f32 %v3201, %v3426
        %v3437 = vmul.f32 %v3202, %v3427
        %v3438 = vmul.f32 %v3203, %v3426
        %v3439 = vmul.f32 %v3204, %v3427
        %v3440 = vmul.f32 %v3205, %v3426
        %v3441 = vmul.f32 %v3206, %v3427
        %v3442 = vmul.f32 %v3207, %v3426
        %v3443 = vmul.f32 %v3208, %v3427
        %v3444 = vmul.f32 %v3209, %v3426
        %v3445 = vmul.f32 %v3210, %v3427
        %v3446 = vmul.f32 %v3211, %v3426
        %v3447 = vmul.f32 %v3212, %v3427
        %v3448 = vmul.f32 %v3213, %v3426
        %v3449 = vmul.f32 %v3214, %v3427
        %v3450 = vmul.f32 %v3215, %v3426
        %v3451 = vmul.f32 %v3216, %v3427
        %v3452 = vmul.f32 %v3217, %v3426
        %v3453 = vmul.f32 %v3218, %v3427
        %v3454 = vmul.f32 %v3219, %v3426
        %v3455 = vmul.f32 %v3220, %v3427
        %v3456 = vmul.f32 %v3221, %v3426
        %v3457 = vmul.f32 %v3222, %v3427
        %v3458 = vmul.f32 %v3223, %v3426
        %v3459 = vmul.f32 %v3224, %v3427
        %v3460 = vadd.f32 %v3428, %v3429
        %v3461 = vrot.slane %v3460, 4
        %v3462 = vadd.f32 %v3460, %v3461
        %v3463 = vrot.slane %v3462, 2
        %v3464 = vadd.f32 %v3462, %v3463
        %v3465 = vrot.slane %v3464, 1
        %v3466 = vadd.f32 %v3464, %v3465
        %v3467 = vadd.f32 %v3430, %v3431
        %v3468 = vrot.slane %v3467, 4
        %v3469 = vadd.f32 %v3467, %v3468
        %v3470 = vrot.slane %v3469, 2
        %v3471 = vadd.f32 %v3469, %v3470
        %v3472 = vrot.slane %v3471, 1
        %v3473 = vadd.f32 %v3471, %v3472
        %v3474 = vadd.f32 %v3432, %v3433
        %v3475 = vrot.slane %v3474, 4
        %v3476 = vadd.f32 %v3474, %v3475
        %v3477 = vrot.slane %v3476, 2
        %v3478 = vadd.f32 %v3476, %v3477
        %v3479 = vrot.slane %v3478, 1
        %v3480 = vadd.f32 %v3478, %v3479
        %v3481 = vadd.f32 %v3434, %v3435
        %v3482 = vrot.slane %v3481, 4
        %v3483 = vadd.f32 %v3481, %v3482
        %v3484 = vrot.slane %v3483, 2
        %v3485 = vadd.f32 %v3483, %v3484
        %v3486 = vrot.slane %v3485, 1
        %v3487 = vadd.f32 %v3485, %v3486
        %v3488 = vadd.f32 %v3436, %v3437
        %v3489 = vrot.slane %v3488, 4
        %v3490 = vadd.f32 %v3488, %v3489
        %v3491 = vrot.slane %v3490, 2
        %v3492 = vadd.f32 %v3490, %v3491
        %v3493 = vrot.slane %v3492, 1
        %v3494 = vadd.f32 %v3492, %v3493
        %v3495 = vadd.f32 %v3438, %v3439
        %v3496 = vrot.slane %v3495, 4
        %v3497 = vadd.f32 %v3495, %v3496
        %v3498 = vrot.slane %v3497, 2
        %v3499 = vadd.f32 %v3497, %v3498
        %v3500 = vrot.slane %v3499, 1
        %v3501 = vadd.f32 %v3499, %v3500
        %v3502 = vadd.f32 %v3440, %v3441
        %v3503 = vrot.slane %v3502, 4
        %v3504 = vadd.f32 %v3502, %v3503
        %v3505 = vrot.slane %v3504, 2
        %v3506 = vadd.f32 %v3504, %v3505
        %v3507 = vrot.slane %v3506, 1
        %v3508 = vadd.f32 %v3506, %v3507
        %v3509 = vadd.f32 %v3442, %v3443
        %v3510 = vrot.slane %v3509, 4
        %v3511 = vadd.f32 %v3509, %v3510
        %v3512 = vrot.slane %v3511, 2
        %v3513 = vadd.f32 %v3511, %v3512
        %v3514 = vrot.slane %v3513, 1
        %v3515 = vadd.f32 %v3513, %v3514
        %v3516 = vadd.f32 %v3444, %v3445
        %v3517 = vrot.slane %v3516, 4
        %v3518 = vadd.f32 %v3516, %v3517
        %v3519 = vrot.slane %v3518, 2
        %v3520 = vadd.f32 %v3518, %v3519
        %v3521 = vrot.slane %v3520, 1
        %v3522 = vadd.f32 %v3520, %v3521
        %v3523 = vadd.f32 %v3446, %v3447
        %v3524 = vrot.slane %v3523, 4
        %v3525 = vadd.f32 %v3523, %v3524
        %v3526 = vrot.slane %v3525, 2
        %v3527 = vadd.f32 %v3525, %v3526
        %v3528 = vrot.slane %v3527, 1
        %v3529 = vadd.f32 %v3527, %v3528
        %v3530 = vadd.f32 %v3448, %v3449
        %v3531 = vrot.slane %v3530, 4
        %v3532 = vadd.f32 %v3530, %v3531
        %v3533 = vrot.slane %v3532, 2
        %v3534 = vadd.f32 %v3532, %v3533
        %v3535 = vrot.slane %v3534, 1
        %v3536 = vadd.f32 %v3534, %v3535
        %v3537 = vadd.f32 %v3450, %v3451
        %v3538 = vrot.slane %v3537, 4
        %v3539 = vadd.f32 %v3537, %v3538
        %v3540 = vrot.slane %v3539, 2
        %v3541 = vadd.f32 %v3539, %v3540
        %v3542 = vrot.slane %v3541, 1
        %v3543 = vadd.f32 %v3541, %v3542
        %v3544 = vadd.f32 %v3452, %v3453
        %v3545 = vrot.slane %v3544, 4
        %v3546 = vadd.f32 %v3544, %v3545
        %v3547 = vrot.slane %v3546, 2
        %v3548 = vadd.f32 %v3546, %v3547
        %v3549 = vrot.slane %v3548, 1
        %v3550 = vadd.f32 %v3548, %v3549
        %v3551 = vadd.f32 %v3454, %v3455
        %v3552 = vrot.slane %v3551, 4
        %v3553 = vadd.f32 %v3551, %v3552
        %v3554 = vrot.slane %v3553, 2
        %v3555 = vadd.f32 %v3553, %v3554
        %v3556 = vrot.slane %v3555, 1
        %v3557 = vadd.f32 %v3555, %v3556
        %v3558 = vadd.f32 %v3456, %v3457
        %v3559 = vrot.slane %v3558, 4
        %v3560 = vadd.f32 %v3558, %v3559
        %v3561 = vrot.slane %v3560, 2
        %v3562 = vadd.f32 %v3560, %v3561
        %v3563 = vrot.slane %v3562, 1
        %v3564 = vadd.f32 %v3562, %v3563
        %v3565 = vadd.f32 %v3458, %v3459
        %v3566 = vrot.slane %v3565, 4
        %v3567 = vadd.f32 %v3565, %v3566
        %v3568 = vrot.slane %v3567, 2
        %v3569 = vadd.f32 %v3567, %v3568
        %v3570 = vrot.slane %v3569, 1
        %v3571 = vadd.f32 %v3569, %v3570
        %v3588 = vsel %vm3397, %v3473, %v3466
        %v3589 = vsel %vm3399, %v3480, %v3588
        %v3590 = vsel %vm3401, %v3487, %v3589
        %v3591 = vsel %vm3403, %v3494, %v3590
        %v3592 = vsel %vm3405, %v3501, %v3591
        %v3593 = vsel %vm3407, %v3508, %v3592
        %v3594 = vsel %vm3409, %v3515, %v3593
        %v3595 = vsel %vm3397, %v3529, %v3522
        %v3596 = vsel %vm3399, %v3536, %v3595
        %v3597 = vsel %vm3401, %v3543, %v3596
        %v3598 = vsel %vm3403, %v3550, %v3597
        %v3599 = vsel %vm3405, %v3557, %v3598
        %v3600 = vsel %vm3407, %v3564, %v3599
        %v3601 = vsel %vm3409, %v3571, %v3600
        %v3604 = vmul.f32 %v3227, %v3594
        %v3605 = vmul.f32 %v3228, %v3601
        %v3606 = vadd.f32 %v3422, %v3604
        %v3607 = vadd.f32 %v3423, %v3605
        %v3608 = vld [vmem:[%s335 + $0x10] sm:$0xf]
        %v3609 = vld [vmem:[%s335 + $0x14] sm:$0xf]
        %v3610 = vunpack.c.l.bf16 %v3608
        %v3611 = vunpack.c.l.bf16 %v3609
        %v3612 = vmul.f32 %v3193, %v3610
        %v3613 = vmul.f32 %v3194, %v3611
        %v3614 = vmul.f32 %v3195, %v3610
        %v3615 = vmul.f32 %v3196, %v3611
        %v3616 = vmul.f32 %v3197, %v3610
        %v3617 = vmul.f32 %v3198, %v3611
        %v3618 = vmul.f32 %v3199, %v3610
        %v3619 = vmul.f32 %v3200, %v3611
        %v3620 = vmul.f32 %v3201, %v3610
        %v3621 = vmul.f32 %v3202, %v3611
        %v3622 = vmul.f32 %v3203, %v3610
        %v3623 = vmul.f32 %v3204, %v3611
        %v3624 = vmul.f32 %v3205, %v3610
        %v3625 = vmul.f32 %v3206, %v3611
        %v3626 = vmul.f32 %v3207, %v3610
        %v3627 = vmul.f32 %v3208, %v3611
        %v3628 = vmul.f32 %v3209, %v3610
        %v3629 = vmul.f32 %v3210, %v3611
        %v3630 = vmul.f32 %v3211, %v3610
        %v3631 = vmul.f32 %v3212, %v3611
        %v3632 = vmul.f32 %v3213, %v3610
        %v3633 = vmul.f32 %v3214, %v3611
        %v3634 = vmul.f32 %v3215, %v3610
        %v3635 = vmul.f32 %v3216, %v3611
        %v3636 = vmul.f32 %v3217, %v3610
        %v3637 = vmul.f32 %v3218, %v3611
        %v3638 = vmul.f32 %v3219, %v3610
        %v3639 = vmul.f32 %v3220, %v3611
        %v3640 = vmul.f32 %v3221, %v3610
        %v3641 = vmul.f32 %v3222, %v3611
        %v3642 = vmul.f32 %v3223, %v3610
        %v3643 = vmul.f32 %v3224, %v3611
        %v3644 = vadd.f32 %v3612, %v3613
        %v3645 = vrot.slane %v3644, 4
        %v3646 = vadd.f32 %v3644, %v3645
        %v3647 = vrot.slane %v3646, 2
        %v3648 = vadd.f32 %v3646, %v3647
        %v3649 = vrot.slane %v3648, 1
        %v3650 = vadd.f32 %v3648, %v3649
        %v3651 = vadd.f32 %v3614, %v3615
        %v3652 = vrot.slane %v3651, 4
        %v3653 = vadd.f32 %v3651, %v3652
        %v3654 = vrot.slane %v3653, 2
        %v3655 = vadd.f32 %v3653, %v3654
        %v3656 = vrot.slane %v3655, 1
        %v3657 = vadd.f32 %v3655, %v3656
        %v3658 = vadd.f32 %v3616, %v3617
        %v3659 = vrot.slane %v3658, 4
        %v3660 = vadd.f32 %v3658, %v3659
        %v3661 = vrot.slane %v3660, 2
        %v3662 = vadd.f32 %v3660, %v3661
        %v3663 = vrot.slane %v3662, 1
        %v3664 = vadd.f32 %v3662, %v3663
        %v3665 = vadd.f32 %v3618, %v3619
        %v3666 = vrot.slane %v3665, 4
        %v3667 = vadd.f32 %v3665, %v3666
        %v3668 = vrot.slane %v3667, 2
        %v3669 = vadd.f32 %v3667, %v3668
        %v3670 = vrot.slane %v3669, 1
        %v3671 = vadd.f32 %v3669, %v3670
        %v3672 = vadd.f32 %v3620, %v3621
        %v3673 = vrot.slane %v3672, 4
        %v3674 = vadd.f32 %v3672, %v3673
        %v3675 = vrot.slane %v3674, 2
        %v3676 = vadd.f32 %v3674, %v3675
        %v3677 = vrot.slane %v3676, 1
        %v3678 = vadd.f32 %v3676, %v3677
        %v3679 = vadd.f32 %v3622, %v3623
        %v3680 = vrot.slane %v3679, 4
        %v3681 = vadd.f32 %v3679, %v3680
        %v3682 = vrot.slane %v3681, 2
        %v3683 = vadd.f32 %v3681, %v3682
        %v3684 = vrot.slane %v3683, 1
        %v3685 = vadd.f32 %v3683, %v3684
        %v3686 = vadd.f32 %v3624, %v3625
        %v3687 = vrot.slane %v3686, 4
        %v3688 = vadd.f32 %v3686, %v3687
        %v3689 = vrot.slane %v3688, 2
        %v3690 = vadd.f32 %v3688, %v3689
        %v3691 = vrot.slane %v3690, 1
        %v3692 = vadd.f32 %v3690, %v3691
        %v3693 = vadd.f32 %v3626, %v3627
        %v3694 = vrot.slane %v3693, 4
        %v3695 = vadd.f32 %v3693, %v3694
        %v3696 = vrot.slane %v3695, 2
        %v3697 = vadd.f32 %v3695, %v3696
        %v3698 = vrot.slane %v3697, 1
        %v3699 = vadd.f32 %v3697, %v3698
        %v3700 = vadd.f32 %v3628, %v3629
        %v3701 = vrot.slane %v3700, 4
        %v3702 = vadd.f32 %v3700, %v3701
        %v3703 = vrot.slane %v3702, 2
        %v3704 = vadd.f32 %v3702, %v3703
        %v3705 = vrot.slane %v3704, 1
        %v3706 = vadd.f32 %v3704, %v3705
        %v3707 = vadd.f32 %v3630, %v3631
        %v3708 = vrot.slane %v3707, 4
        %v3709 = vadd.f32 %v3707, %v3708
        %v3710 = vrot.slane %v3709, 2
        %v3711 = vadd.f32 %v3709, %v3710
        %v3712 = vrot.slane %v3711, 1
        %v3713 = vadd.f32 %v3711, %v3712
        %v3714 = vadd.f32 %v3632, %v3633
        %v3715 = vrot.slane %v3714, 4
        %v3716 = vadd.f32 %v3714, %v3715
        %v3717 = vrot.slane %v3716, 2
        %v3718 = vadd.f32 %v3716, %v3717
        %v3719 = vrot.slane %v3718, 1
        %v3720 = vadd.f32 %v3718, %v3719
        %v3721 = vadd.f32 %v3634, %v3635
        %v3722 = vrot.slane %v3721, 4
        %v3723 = vadd.f32 %v3721, %v3722
        %v3724 = vrot.slane %v3723, 2
        %v3725 = vadd.f32 %v3723, %v3724
        %v3726 = vrot.slane %v3725, 1
        %v3727 = vadd.f32 %v3725, %v3726
        %v3728 = vadd.f32 %v3636, %v3637
        %v3729 = vrot.slane %v3728, 4
        %v3730 = vadd.f32 %v3728, %v3729
        %v3731 = vrot.slane %v3730, 2
        %v3732 = vadd.f32 %v3730, %v3731
        %v3733 = vrot.slane %v3732, 1
        %v3734 = vadd.f32 %v3732, %v3733
        %v3735 = vadd.f32 %v3638, %v3639
        %v3736 = vrot.slane %v3735, 4
        %v3737 = vadd.f32 %v3735, %v3736
        %v3738 = vrot.slane %v3737, 2
        %v3739 = vadd.f32 %v3737, %v3738
        %v3740 = vrot.slane %v3739, 1
        %v3741 = vadd.f32 %v3739, %v3740
        %v3742 = vadd.f32 %v3640, %v3641
        %v3743 = vrot.slane %v3742, 4
        %v3744 = vadd.f32 %v3742, %v3743
        %v3745 = vrot.slane %v3744, 2
        %v3746 = vadd.f32 %v3744, %v3745
        %v3747 = vrot.slane %v3746, 1
        %v3748 = vadd.f32 %v3746, %v3747
        %v3749 = vadd.f32 %v3642, %v3643
        %v3750 = vrot.slane %v3749, 4
        %v3751 = vadd.f32 %v3749, %v3750
        %v3752 = vrot.slane %v3751, 2
        %v3753 = vadd.f32 %v3751, %v3752
        %v3754 = vrot.slane %v3753, 1
        %v3755 = vadd.f32 %v3753, %v3754
        %v3772 = vsel %vm3397, %v3657, %v3650
        %v3773 = vsel %vm3399, %v3664, %v3772
        %v3774 = vsel %vm3401, %v3671, %v3773
        %v3775 = vsel %vm3403, %v3678, %v3774
        %v3776 = vsel %vm3405, %v3685, %v3775
        %v3777 = vsel %vm3407, %v3692, %v3776
        %v3778 = vsel %vm3409, %v3699, %v3777
        %v3779 = vsel %vm3397, %v3713, %v3706
        %v3780 = vsel %vm3399, %v3720, %v3779
        %v3781 = vsel %vm3401, %v3727, %v3780
        %v3782 = vsel %vm3403, %v3734, %v3781
        %v3783 = vsel %vm3405, %v3741, %v3782
        %v3784 = vsel %vm3407, %v3748, %v3783
        %v3785 = vsel %vm3409, %v3755, %v3784
        %v3788 = vmul.f32 %v3229, %v3778
        %v3789 = vmul.f32 %v3230, %v3785
        %v3790 = vadd.f32 %v3606, %v3788
        %v3791 = vadd.f32 %v3607, %v3789
        %v3792 = vld [vmem:[%s335 + $0x18] sm:$0xf]
        %v3793 = vld [vmem:[%s335 + $0x1c] sm:$0xf]
        %v3794 = vunpack.c.l.bf16 %v3792
        %v3795 = vunpack.c.l.bf16 %v3793
        %v3796 = vmul.f32 %v3193, %v3794
        %v3797 = vmul.f32 %v3194, %v3795
        %v3798 = vmul.f32 %v3195, %v3794
        %v3799 = vmul.f32 %v3196, %v3795
        %v3800 = vmul.f32 %v3197, %v3794
        %v3801 = vmul.f32 %v3198, %v3795
        %v3802 = vmul.f32 %v3199, %v3794
        %v3803 = vmul.f32 %v3200, %v3795
        %v3804 = vmul.f32 %v3201, %v3794
        %v3805 = vmul.f32 %v3202, %v3795
        %v3806 = vmul.f32 %v3203, %v3794
        %v3807 = vmul.f32 %v3204, %v3795
        %v3808 = vmul.f32 %v3205, %v3794
        %v3809 = vmul.f32 %v3206, %v3795
        %v3810 = vmul.f32 %v3207, %v3794
        %v3811 = vmul.f32 %v3208, %v3795
        %v3812 = vmul.f32 %v3209, %v3794
        %v3813 = vmul.f32 %v3210, %v3795
        %v3814 = vmul.f32 %v3211, %v3794
        %v3815 = vmul.f32 %v3212, %v3795
        %v3816 = vmul.f32 %v3213, %v3794
        %v3817 = vmul.f32 %v3214, %v3795
        %v3818 = vmul.f32 %v3215, %v3794
        %v3819 = vmul.f32 %v3216, %v3795
        %v3820 = vmul.f32 %v3217, %v3794
        %v3821 = vmul.f32 %v3218, %v3795
        %v3822 = vmul.f32 %v3219, %v3794
        %v3823 = vmul.f32 %v3220, %v3795
        %v3824 = vmul.f32 %v3221, %v3794
        %v3825 = vmul.f32 %v3222, %v3795
        %v3826 = vmul.f32 %v3223, %v3794
        %v3827 = vmul.f32 %v3224, %v3795
        %v3828 = vadd.f32 %v3796, %v3797
        %v3829 = vrot.slane %v3828, 4
        %v3830 = vadd.f32 %v3828, %v3829
        %v3831 = vrot.slane %v3830, 2
        %v3832 = vadd.f32 %v3830, %v3831
        %v3833 = vrot.slane %v3832, 1
        %v3834 = vadd.f32 %v3832, %v3833
        %v3835 = vadd.f32 %v3798, %v3799
        %v3836 = vrot.slane %v3835, 4
        %v3837 = vadd.f32 %v3835, %v3836
        %v3838 = vrot.slane %v3837, 2
        %v3839 = vadd.f32 %v3837, %v3838
        %v3840 = vrot.slane %v3839, 1
        %v3841 = vadd.f32 %v3839, %v3840
        %v3842 = vadd.f32 %v3800, %v3801
        %v3843 = vrot.slane %v3842, 4
        %v3844 = vadd.f32 %v3842, %v3843
        %v3845 = vrot.slane %v3844, 2
        %v3846 = vadd.f32 %v3844, %v3845
        %v3847 = vrot.slane %v3846, 1
        %v3848 = vadd.f32 %v3846, %v3847
        %v3849 = vadd.f32 %v3802, %v3803
        %v3850 = vrot.slane %v3849, 4
        %v3851 = vadd.f32 %v3849, %v3850
        %v3852 = vrot.slane %v3851, 2
        %v3853 = vadd.f32 %v3851, %v3852
        %v3854 = vrot.slane %v3853, 1
        %v3855 = vadd.f32 %v3853, %v3854
        %v3856 = vadd.f32 %v3804, %v3805
        %v3857 = vrot.slane %v3856, 4
        %v3858 = vadd.f32 %v3856, %v3857
        %v3859 = vrot.slane %v3858, 2
        %v3860 = vadd.f32 %v3858, %v3859
        %v3861 = vrot.slane %v3860, 1
        %v3862 = vadd.f32 %v3860, %v3861
        %v3863 = vadd.f32 %v3806, %v3807
        %v3864 = vrot.slane %v3863, 4
        %v3865 = vadd.f32 %v3863, %v3864
        %v3866 = vrot.slane %v3865, 2
        %v3867 = vadd.f32 %v3865, %v3866
        %v3868 = vrot.slane %v3867, 1
        %v3869 = vadd.f32 %v3867, %v3868
        %v3870 = vadd.f32 %v3808, %v3809
        %v3871 = vrot.slane %v3870, 4
        %v3872 = vadd.f32 %v3870, %v3871
        %v3873 = vrot.slane %v3872, 2
        %v3874 = vadd.f32 %v3872, %v3873
        %v3875 = vrot.slane %v3874, 1
        %v3876 = vadd.f32 %v3874, %v3875
        %v3877 = vadd.f32 %v3810, %v3811
        %v3878 = vrot.slane %v3877, 4
        %v3879 = vadd.f32 %v3877, %v3878
        %v3880 = vrot.slane %v3879, 2
        %v3881 = vadd.f32 %v3879, %v3880
        %v3882 = vrot.slane %v3881, 1
        %v3883 = vadd.f32 %v3881, %v3882
        %v3884 = vadd.f32 %v3812, %v3813
        %v3885 = vrot.slane %v3884, 4
        %v3886 = vadd.f32 %v3884, %v3885
        %v3887 = vrot.slane %v3886, 2
        %v3888 = vadd.f32 %v3886, %v3887
        %v3889 = vrot.slane %v3888, 1
        %v3890 = vadd.f32 %v3888, %v3889
        %v3891 = vadd.f32 %v3814, %v3815
        %v3892 = vrot.slane %v3891, 4
        %v3893 = vadd.f32 %v3891, %v3892
        %v3894 = vrot.slane %v3893, 2
        %v3895 = vadd.f32 %v3893, %v3894
        %v3896 = vrot.slane %v3895, 1
        %v3897 = vadd.f32 %v3895, %v3896
        %v3898 = vadd.f32 %v3816, %v3817
        %v3899 = vrot.slane %v3898, 4
        %v3900 = vadd.f32 %v3898, %v3899
        %v3901 = vrot.slane %v3900, 2
        %v3902 = vadd.f32 %v3900, %v3901
        %v3903 = vrot.slane %v3902, 1
        %v3904 = vadd.f32 %v3902, %v3903
        %v3905 = vadd.f32 %v3818, %v3819
        %v3906 = vrot.slane %v3905, 4
        %v3907 = vadd.f32 %v3905, %v3906
        %v3908 = vrot.slane %v3907, 2
        %v3909 = vadd.f32 %v3907, %v3908
        %v3910 = vrot.slane %v3909, 1
        %v3911 = vadd.f32 %v3909, %v3910
        %v3912 = vadd.f32 %v3820, %v3821
        %v3913 = vrot.slane %v3912, 4
        %v3914 = vadd.f32 %v3912, %v3913
        %v3915 = vrot.slane %v3914, 2
        %v3916 = vadd.f32 %v3914, %v3915
        %v3917 = vrot.slane %v3916, 1
        %v3918 = vadd.f32 %v3916, %v3917
        %v3919 = vadd.f32 %v3822, %v3823
        %v3920 = vrot.slane %v3919, 4
        %v3921 = vadd.f32 %v3919, %v3920
        %v3922 = vrot.slane %v3921, 2
        %v3923 = vadd.f32 %v3921, %v3922
        %v3924 = vrot.slane %v3923, 1
        %v3925 = vadd.f32 %v3923, %v3924
        %v3926 = vadd.f32 %v3824, %v3825
        %v3927 = vrot.slane %v3926, 4
        %v3928 = vadd.f32 %v3926, %v3927
        %v3929 = vrot.slane %v3928, 2
        %v3930 = vadd.f32 %v3928, %v3929
        %v3931 = vrot.slane %v3930, 1
        %v3932 = vadd.f32 %v3930, %v3931
        %v3933 = vadd.f32 %v3826, %v3827
        %v3934 = vrot.slane %v3933, 4
        %v3935 = vadd.f32 %v3933, %v3934
        %v3936 = vrot.slane %v3935, 2
        %v3937 = vadd.f32 %v3935, %v3936
        %v3938 = vrot.slane %v3937, 1
        %v3939 = vadd.f32 %v3937, %v3938
        %v3956 = vsel %vm3397, %v3841, %v3834
        %v3957 = vsel %vm3399, %v3848, %v3956
        %v3958 = vsel %vm3401, %v3855, %v3957
        %v3959 = vsel %vm3403, %v3862, %v3958
        %v3960 = vsel %vm3405, %v3869, %v3959
        %v3961 = vsel %vm3407, %v3876, %v3960
        %v3962 = vsel %vm3409, %v3883, %v3961
        %v3963 = vsel %vm3397, %v3897, %v3890
        %v3964 = vsel %vm3399, %v3904, %v3963
        %v3965 = vsel %vm3401, %v3911, %v3964
        %v3966 = vsel %vm3403, %v3918, %v3965
        %v3967 = vsel %vm3405, %v3925, %v3966
        %v3968 = vsel %vm3407, %v3932, %v3967
        %v3969 = vsel %vm3409, %v3939, %v3968
        %v3972 = vmul.f32 %v3231, %v3962
        %v3973 = vmul.f32 %v3232, %v3969
        %v3974 = vadd.f32 %v3790, %v3972
        %v3975 = vadd.f32 %v3791, %v3973
        // Predicated region
        $region57: #{regression_differential_tree_forward.1} parent=39 // pred_check
          %p3976 = pneg %p414
        $region58: #{regression_differential_tree_forward.1} parent=39 // pred_check_branch
          %3978 = sbr.rel (%p3976) target = $region60
        $region59: #{regression_differential_tree_forward.1} parent=39 // pred_region
          %3979 = vst [vmem:[%s411] sm:$0xff] %v3974
          %3980 = vst [vmem:[%s411 + $0x8] sm:$0xff] %v3975
        $region60: #{regression_differential_tree_forward.1} parent=39 // pred_fallthru
          _
        %p3981 = scmp.gt.s32.totalorder %s29, 0
        // Predicated region
        $region61: #{regression_differential_tree_forward.1} parent=39 // pred_check
          %p3982 = pneg %p3981
        $region62: #{regression_differential_tree_forward.1} parent=39 // pred_check_branch
          %3984 = sbr.rel (%p3982) target = $region64
        $region63: #{regression_differential_tree_forward.1} parent=39 // pred_region
          %v3985 = vld [vmem:[%s411] sm:$0xff]
          %v3986 = vld [vmem:[%s411 + $0x8] sm:$0xff]
          %v3987 = vadd.f32 %v3985, %v3974
          %v3988 = vadd.f32 %v3986, %v3975
          %3989 = vst [vmem:[%s411] sm:$0xff] %v3987
          %3990 = vst [vmem:[%s411 + $0x8] sm:$0xff] %v3988
        $region64: #{regression_differential_tree_forward.1} parent=39 // pred_fallthru
          _
        %p3991 = scmp.lt.s32.totalorder %s29, 1
        // Predicated region
        $region65: #{regression_differential_tree_forward.1} parent=39 // pred_check
          %p3992 = pneg %p3991
        $region66: #{regression_differential_tree_forward.1} parent=39 // pred_check_branch
          %3994 = sbr.rel (%p3992) target = $region68
        $region67: #{regression_differential_tree_forward.1} parent=39 // pred_region
          %s3995 = scalar_lea.vmem %s335, 32 [#allocation7]
          %v3996 = vld [vmem:[%s3995] sm:$0xf]
          %v3997 = vld [vmem:[%s3995 + $0x4] sm:$0xf]
          %v3998 = vunpack.c.l.bf16 %v3996
          %v3999 = vunpack.c.l.bf16 %v3997
          %v4000 = vmul.f32 %v3193, %v3998
          %v4001 = vmul.f32 %v3194, %v3999
          %v4002 = vmul.f32 %v3195, %v3998
          %v4003 = vmul.f32 %v3196, %v3999
          %v4004 = vmul.f32 %v3197, %v3998
          %v4005 = vmul.f32 %v3198, %v3999
          %v4006 = vmul.f32 %v3199, %v3998
          %v4007 = vmul.f32 %v3200, %v3999
          %v4008 = vmul.f32 %v3201, %v3998
          %v4009 = vmul.f32 %v3202, %v3999
          %v4010 = vmul.f32 %v3203, %v3998
          %v4011 = vmul.f32 %v3204, %v3999
          %v4012 = vmul.f32 %v3205, %v3998
          %v4013 = vmul.f32 %v3206, %v3999
          %v4014 = vmul.f32 %v3207, %v3998
          %v4015 = vmul.f32 %v3208, %v3999
          %v4016 = vmul.f32 %v3209, %v3998
          %v4017 = vmul.f32 %v3210, %v3999
          %v4018 = vmul.f32 %v3211, %v3998
          %v4019 = vmul.f32 %v3212, %v3999
          %v4020 = vmul.f32 %v3213, %v3998
          %v4021 = vmul.f32 %v3214, %v3999
          %v4022 = vmul.f32 %v3215, %v3998
          %v4023 = vmul.f32 %v3216, %v3999
          %v4024 = vmul.f32 %v3217, %v3998
          %v4025 = vmul.f32 %v3218, %v3999
          %v4026 = vmul.f32 %v3219, %v3998
          %v4027 = vmul.f32 %v3220, %v3999
          %v4028 = vmul.f32 %v3221, %v3998
          %v4029 = vmul.f32 %v3222, %v3999
          %v4030 = vmul.f32 %v3223, %v3998
          %v4031 = vmul.f32 %v3224, %v3999
          %v4032 = vadd.f32 %v4000, %v4001
          %v4033 = vrot.slane %v4032, 4
          %v4034 = vadd.f32 %v4032, %v4033
          %v4035 = vrot.slane %v4034, 2
          %v4036 = vadd.f32 %v4034, %v4035
          %v4037 = vrot.slane %v4036, 1
          %v4038 = vadd.f32 %v4036, %v4037
          %v4039 = vadd.f32 %v4002, %v4003
          %v4040 = vrot.slane %v4039, 4
          %v4041 = vadd.f32 %v4039, %v4040
          %v4042 = vrot.slane %v4041, 2
          %v4043 = vadd.f32 %v4041, %v4042
          %v4044 = vrot.slane %v4043, 1
          %v4045 = vadd.f32 %v4043, %v4044
          %v4046 = vadd.f32 %v4004, %v4005
          %v4047 = vrot.slane %v4046, 4
          %v4048 = vadd.f32 %v4046, %v4047
          %v4049 = vrot.slane %v4048, 2
          %v4050 = vadd.f32 %v4048, %v4049
          %v4051 = vrot.slane %v4050, 1
          %v4052 = vadd.f32 %v4050, %v4051
          %v4053 = vadd.f32 %v4006, %v4007
          %v4054 = vrot.slane %v4053, 4
          %v4055 = vadd.f32 %v4053, %v4054
          %v4056 = vrot.slane %v4055, 2
          %v4057 = vadd.f32 %v4055, %v4056
          %v4058 = vrot.slane %v4057, 1
          %v4059 = vadd.f32 %v4057, %v4058
          %v4060 = vadd.f32 %v4008, %v4009
          %v4061 = vrot.slane %v4060, 4
          %v4062 = vadd.f32 %v4060, %v4061
          %v4063 = vrot.slane %v4062, 2
          %v4064 = vadd.f32 %v4062, %v4063
          %v4065 = vrot.slane %v4064, 1
          %v4066 = vadd.f32 %v4064, %v4065
          %v4067 = vadd.f32 %v4010, %v4011
          %v4068 = vrot.slane %v4067, 4
          %v4069 = vadd.f32 %v4067, %v4068
          %v4070 = vrot.slane %v4069, 2
          %v4071 = vadd.f32 %v4069, %v4070
          %v4072 = vrot.slane %v4071, 1
          %v4073 = vadd.f32 %v4071, %v4072
          %v4074 = vadd.f32 %v4012, %v4013
          %v4075 = vrot.slane %v4074, 4
          %v4076 = vadd.f32 %v4074, %v4075
          %v4077 = vrot.slane %v4076, 2
          %v4078 = vadd.f32 %v4076, %v4077
          %v4079 = vrot.slane %v4078, 1
          %v4080 = vadd.f32 %v4078, %v4079
          %v4081 = vadd.f32 %v4014, %v4015
          %v4082 = vrot.slane %v4081, 4
          %v4083 = vadd.f32 %v4081, %v4082
          %v4084 = vrot.slane %v4083, 2
          %v4085 = vadd.f32 %v4083, %v4084
          %v4086 = vrot.slane %v4085, 1
          %v4087 = vadd.f32 %v4085, %v4086
          %v4088 = vadd.f32 %v4016, %v4017
          %v4089 = vrot.slane %v4088, 4
          %v4090 = vadd.f32 %v4088, %v4089
          %v4091 = vrot.slane %v4090, 2
          %v4092 = vadd.f32 %v4090, %v4091
          %v4093 = vrot.slane %v4092, 1
          %v4094 = vadd.f32 %v4092, %v4093
          %v4095 = vadd.f32 %v4018, %v4019
          %v4096 = vrot.slane %v4095, 4
          %v4097 = vadd.f32 %v4095, %v4096
          %v4098 = vrot.slane %v4097, 2
          %v4099 = vadd.f32 %v4097, %v4098
          %v4100 = vrot.slane %v4099, 1
          %v4101 = vadd.f32 %v4099, %v4100
          %v4102 = vadd.f32 %v4020, %v4021
          %v4103 = vrot.slane %v4102, 4
          %v4104 = vadd.f32 %v4102, %v4103
          %v4105 = vrot.slane %v4104, 2
          %v4106 = vadd.f32 %v4104, %v4105
          %v4107 = vrot.slane %v4106, 1
          %v4108 = vadd.f32 %v4106, %v4107
          %v4109 = vadd.f32 %v4022, %v4023
          %v4110 = vrot.slane %v4109, 4
          %v4111 = vadd.f32 %v4109, %v4110
          %v4112 = vrot.slane %v4111, 2
          %v4113 = vadd.f32 %v4111, %v4112
          %v4114 = vrot.slane %v4113, 1
          %v4115 = vadd.f32 %v4113, %v4114
          %v4116 = vadd.f32 %v4024, %v4025
          %v4117 = vrot.slane %v4116, 4
          %v4118 = vadd.f32 %v4116, %v4117
          %v4119 = vrot.slane %v4118, 2
          %v4120 = vadd.f32 %v4118, %v4119
          %v4121 = vrot.slane %v4120, 1
          %v4122 = vadd.f32 %v4120, %v4121
          %v4123 = vadd.f32 %v4026, %v4027
          %v4124 = vrot.slane %v4123, 4
          %v4125 = vadd.f32 %v4123, %v4124
          %v4126 = vrot.slane %v4125, 2
          %v4127 = vadd.f32 %v4125, %v4126
          %v4128 = vrot.slane %v4127, 1
          %v4129 = vadd.f32 %v4127, %v4128
          %v4130 = vadd.f32 %v4028, %v4029
          %v4131 = vrot.slane %v4130, 4
          %v4132 = vadd.f32 %v4130, %v4131
          %v4133 = vrot.slane %v4132, 2
          %v4134 = vadd.f32 %v4132, %v4133
          %v4135 = vrot.slane %v4134, 1
          %v4136 = vadd.f32 %v4134, %v4135
          %v4137 = vadd.f32 %v4030, %v4031
          %v4138 = vrot.slane %v4137, 4
          %v4139 = vadd.f32 %v4137, %v4138
          %v4140 = vrot.slane %v4139, 2
          %v4141 = vadd.f32 %v4139, %v4140
          %v4142 = vrot.slane %v4141, 1
          %v4143 = vadd.f32 %v4141, %v4142
          %v4160 = vsel %vm3397, %v4045, %v4038
          %v4161 = vsel %vm3399, %v4052, %v4160
          %v4162 = vsel %vm3401, %v4059, %v4161
          %v4163 = vsel %vm3403, %v4066, %v4162
          %v4164 = vsel %vm3405, %v4073, %v4163
          %v4165 = vsel %vm3407, %v4080, %v4164
          %v4166 = vsel %vm3409, %v4087, %v4165
          %v4167 = vsel %vm3397, %v4101, %v4094
          %v4168 = vsel %vm3399, %v4108, %v4167
          %v4169 = vsel %vm3401, %v4115, %v4168
          %v4170 = vsel %vm3403, %v4122, %v4169
          %v4171 = vsel %vm3405, %v4129, %v4170
          %v4172 = vsel %vm3407, %v4136, %v4171
          %v4173 = vsel %vm3409, %v4143, %v4172
          %v4176 = vmul.f32 %v3225, %v4166
          %v4177 = vmul.f32 %v3226, %v4173
          %v4178 = vadd.f32 %v4176, 0.0
          %v4179 = vadd.f32 %v4177, 0.0
          %v4180 = vld [vmem:[%s3995 + $0x8] sm:$0xf]
          %v4181 = vld [vmem:[%s3995 + $0xc] sm:$0xf]
          %v4182 = vunpack.c.l.bf16 %v4180
          %v4183 = vunpack.c.l.bf16 %v4181
          %v4184 = vmul.f32 %v3193, %v4182
          %v4185 = vmul.f32 %v3194, %v4183
          %v4186 = vmul.f32 %v3195, %v4182
          %v4187 = vmul.f32 %v3196, %v4183
          %v4188 = vmul.f32 %v3197, %v4182
          %v4189 = vmul.f32 %v3198, %v4183
          %v4190 = vmul.f32 %v3199, %v4182
          %v4191 = vmul.f32 %v3200, %v4183
          %v4192 = vmul.f32 %v3201, %v4182
          %v4193 = vmul.f32 %v3202, %v4183
          %v4194 = vmul.f32 %v3203, %v4182
          %v4195 = vmul.f32 %v3204, %v4183
          %v4196 = vmul.f32 %v3205, %v4182
          %v4197 = vmul.f32 %v3206, %v4183
          %v4198 = vmul.f32 %v3207, %v4182
          %v4199 = vmul.f32 %v3208, %v4183
          %v4200 = vmul.f32 %v3209, %v4182
          %v4201 = vmul.f32 %v3210, %v4183
          %v4202 = vmul.f32 %v3211, %v4182
          %v4203 = vmul.f32 %v3212, %v4183
          %v4204 = vmul.f32 %v3213, %v4182
          %v4205 = vmul.f32 %v3214, %v4183
          %v4206 = vmul.f32 %v3215, %v4182
          %v4207 = vmul.f32 %v3216, %v4183
          %v4208 = vmul.f32 %v3217, %v4182
          %v4209 = vmul.f32 %v3218, %v4183
          %v4210 = vmul.f32 %v3219, %v4182
          %v4211 = vmul.f32 %v3220, %v4183
          %v4212 = vmul.f32 %v3221, %v4182
          %v4213 = vmul.f32 %v3222, %v4183
          %v4214 = vmul.f32 %v3223, %v4182
          %v4215 = vmul.f32 %v3224, %v4183
          %v4216 = vadd.f32 %v4184, %v4185
          %v4217 = vrot.slane %v4216, 4
          %v4218 = vadd.f32 %v4216, %v4217
          %v4219 = vrot.slane %v4218, 2
          %v4220 = vadd.f32 %v4218, %v4219
          %v4221 = vrot.slane %v4220, 1
          %v4222 = vadd.f32 %v4220, %v4221
          %v4223 = vadd.f32 %v4186, %v4187
          %v4224 = vrot.slane %v4223, 4
          %v4225 = vadd.f32 %v4223, %v4224
          %v4226 = vrot.slane %v4225, 2
          %v4227 = vadd.f32 %v4225, %v4226
          %v4228 = vrot.slane %v4227, 1
          %v4229 = vadd.f32 %v4227, %v4228
          %v4230 = vadd.f32 %v4188, %v4189
          %v4231 = vrot.slane %v4230, 4
          %v4232 = vadd.f32 %v4230, %v4231
          %v4233 = vrot.slane %v4232, 2
          %v4234 = vadd.f32 %v4232, %v4233
          %v4235 = vrot.slane %v4234, 1
          %v4236 = vadd.f32 %v4234, %v4235
          %v4237 = vadd.f32 %v4190, %v4191
          %v4238 = vrot.slane %v4237, 4
          %v4239 = vadd.f32 %v4237, %v4238
          %v4240 = vrot.slane %v4239, 2
          %v4241 = vadd.f32 %v4239, %v4240
          %v4242 = vrot.slane %v4241, 1
          %v4243 = vadd.f32 %v4241, %v4242
          %v4244 = vadd.f32 %v4192, %v4193
          %v4245 = vrot.slane %v4244, 4
          %v4246 = vadd.f32 %v4244, %v4245
          %v4247 = vrot.slane %v4246, 2
          %v4248 = vadd.f32 %v4246, %v4247
          %v4249 = vrot.slane %v4248, 1
          %v4250 = vadd.f32 %v4248, %v4249
          %v4251 = vadd.f32 %v4194, %v4195
          %v4252 = vrot.slane %v4251, 4
          %v4253 = vadd.f32 %v4251, %v4252
          %v4254 = vrot.slane %v4253, 2
          %v4255 = vadd.f32 %v4253, %v4254
          %v4256 = vrot.slane %v4255, 1
          %v4257 = vadd.f32 %v4255, %v4256
          %v4258 = vadd.f32 %v4196, %v4197
          %v4259 = vrot.slane %v4258, 4
          %v4260 = vadd.f32 %v4258, %v4259
          %v4261 = vrot.slane %v4260, 2
          %v4262 = vadd.f32 %v4260, %v4261
          %v4263 = vrot.slane %v4262, 1
          %v4264 = vadd.f32 %v4262, %v4263
          %v4265 = vadd.f32 %v4198, %v4199
          %v4266 = vrot.slane %v4265, 4
          %v4267 = vadd.f32 %v4265, %v4266
          %v4268 = vrot.slane %v4267, 2
          %v4269 = vadd.f32 %v4267, %v4268
          %v4270 = vrot.slane %v4269, 1
          %v4271 = vadd.f32 %v4269, %v4270
          %v4272 = vadd.f32 %v4200, %v4201
          %v4273 = vrot.slane %v4272, 4
          %v4274 = vadd.f32 %v4272, %v4273
          %v4275 = vrot.slane %v4274, 2
          %v4276 = vadd.f32 %v4274, %v4275
          %v4277 = vrot.slane %v4276, 1
          %v4278 = vadd.f32 %v4276, %v4277
          %v4279 = vadd.f32 %v4202, %v4203
          %v4280 = vrot.slane %v4279, 4
          %v4281 = vadd.f32 %v4279, %v4280
          %v4282 = vrot.slane %v4281, 2
          %v4283 = vadd.f32 %v4281, %v4282
          %v4284 = vrot.slane %v4283, 1
          %v4285 = vadd.f32 %v4283, %v4284
          %v4286 = vadd.f32 %v4204, %v4205
          %v4287 = vrot.slane %v4286, 4
          %v4288 = vadd.f32 %v4286, %v4287
          %v4289 = vrot.slane %v4288, 2
          %v4290 = vadd.f32 %v4288, %v4289
          %v4291 = vrot.slane %v4290, 1
          %v4292 = vadd.f32 %v4290, %v4291
          %v4293 = vadd.f32 %v4206, %v4207
          %v4294 = vrot.slane %v4293, 4
          %v4295 = vadd.f32 %v4293, %v4294
          %v4296 = vrot.slane %v4295, 2
          %v4297 = vadd.f32 %v4295, %v4296
          %v4298 = vrot.slane %v4297, 1
          %v4299 = vadd.f32 %v4297, %v4298
          %v4300 = vadd.f32 %v4208, %v4209
          %v4301 = vrot.slane %v4300, 4
          %v4302 = vadd.f32 %v4300, %v4301
          %v4303 = vrot.slane %v4302, 2
          %v4304 = vadd.f32 %v4302, %v4303
          %v4305 = vrot.slane %v4304, 1
          %v4306 = vadd.f32 %v4304, %v4305
          %v4307 = vadd.f32 %v4210, %v4211
          %v4308 = vrot.slane %v4307, 4
          %v4309 = vadd.f32 %v4307, %v4308
          %v4310 = vrot.slane %v4309, 2
          %v4311 = vadd.f32 %v4309, %v4310
          %v4312 = vrot.slane %v4311, 1
          %v4313 = vadd.f32 %v4311, %v4312
          %v4314 = vadd.f32 %v4212, %v4213
          %v4315 = vrot.slane %v4314, 4
          %v4316 = vadd.f32 %v4314, %v4315
          %v4317 = vrot.slane %v4316, 2
          %v4318 = vadd.f32 %v4316, %v4317
          %v4319 = vrot.slane %v4318, 1
          %v4320 = vadd.f32 %v4318, %v4319
          %v4321 = vadd.f32 %v4214, %v4215
          %v4322 = vrot.slane %v4321, 4
          %v4323 = vadd.f32 %v4321, %v4322
          %v4324 = vrot.slane %v4323, 2
          %v4325 = vadd.f32 %v4323, %v4324
          %v4326 = vrot.slane %v4325, 1
          %v4327 = vadd.f32 %v4325, %v4326
          %v4344 = vsel %vm3397, %v4229, %v4222
          %v4345 = vsel %vm3399, %v4236, %v4344
          %v4346 = vsel %vm3401, %v4243, %v4345
          %v4347 = vsel %vm3403, %v4250, %v4346
          %v4348 = vsel %vm3405, %v4257, %v4347
          %v4349 = vsel %vm3407, %v4264, %v4348
          %v4350 = vsel %vm3409, %v4271, %v4349
          %v4351 = vsel %vm3397, %v4285, %v4278
          %v4352 = vsel %vm3399, %v4292, %v4351
          %v4353 = vsel %vm3401, %v4299, %v4352
          %v4354 = vsel %vm3403, %v4306, %v4353
          %v4355 = vsel %vm3405, %v4313, %v4354
          %v4356 = vsel %vm3407, %v4320, %v4355
          %v4357 = vsel %vm3409, %v4327, %v4356
          %v4360 = vmul.f32 %v3227, %v4350
          %v4361 = vmul.f32 %v3228, %v4357
          %v4362 = vadd.f32 %v4178, %v4360
          %v4363 = vadd.f32 %v4179, %v4361
          %v4364 = vld [vmem:[%s3995 + $0x10] sm:$0xf]
          %v4365 = vld [vmem:[%s3995 + $0x14] sm:$0xf]
          %v4366 = vunpack.c.l.bf16 %v4364
          %v4367 = vunpack.c.l.bf16 %v4365
          %v4368 = vmul.f32 %v3193, %v4366
          %v4369 = vmul.f32 %v3194, %v4367
          %v4370 = vmul.f32 %v3195, %v4366
          %v4371 = vmul.f32 %v3196, %v4367
          %v4372 = vmul.f32 %v3197, %v4366
          %v4373 = vmul.f32 %v3198, %v4367
          %v4374 = vmul.f32 %v3199, %v4366
          %v4375 = vmul.f32 %v3200, %v4367
          %v4376 = vmul.f32 %v3201, %v4366
          %v4377 = vmul.f32 %v3202, %v4367
          %v4378 = vmul.f32 %v3203, %v4366
          %v4379 = vmul.f32 %v3204, %v4367
          %v4380 = vmul.f32 %v3205, %v4366
          %v4381 = vmul.f32 %v3206, %v4367
          %v4382 = vmul.f32 %v3207, %v4366
          %v4383 = vmul.f32 %v3208, %v4367
          %v4384 = vmul.f32 %v3209, %v4366
          %v4385 = vmul.f32 %v3210, %v4367
          %v4386 = vmul.f32 %v3211, %v4366
          %v4387 = vmul.f32 %v3212, %v4367
          %v4388 = vmul.f32 %v3213, %v4366
          %v4389 = vmul.f32 %v3214, %v4367
          %v4390 = vmul.f32 %v3215, %v4366
          %v4391 = vmul.f32 %v3216, %v4367
          %v4392 = vmul.f32 %v3217, %v4366
          %v4393 = vmul.f32 %v3218, %v4367
          %v4394 = vmul.f32 %v3219, %v4366
          %v4395 = vmul.f32 %v3220, %v4367
          %v4396 = vmul.f32 %v3221, %v4366
          %v4397 = vmul.f32 %v3222, %v4367
          %v4398 = vmul.f32 %v3223, %v4366
          %v4399 = vmul.f32 %v3224, %v4367
          %v4400 = vadd.f32 %v4368, %v4369
          %v4401 = vrot.slane %v4400, 4
          %v4402 = vadd.f32 %v4400, %v4401
          %v4403 = vrot.slane %v4402, 2
          %v4404 = vadd.f32 %v4402, %v4403
          %v4405 = vrot.slane %v4404, 1
          %v4406 = vadd.f32 %v4404, %v4405
          %v4407 = vadd.f32 %v4370, %v4371
          %v4408 = vrot.slane %v4407, 4
          %v4409 = vadd.f32 %v4407, %v4408
          %v4410 = vrot.slane %v4409, 2
          %v4411 = vadd.f32 %v4409, %v4410
          %v4412 = vrot.slane %v4411, 1
          %v4413 = vadd.f32 %v4411, %v4412
          %v4414 = vadd.f32 %v4372, %v4373
          %v4415 = vrot.slane %v4414, 4
          %v4416 = vadd.f32 %v4414, %v4415
          %v4417 = vrot.slane %v4416, 2
          %v4418 = vadd.f32 %v4416, %v4417
          %v4419 = vrot.slane %v4418, 1
          %v4420 = vadd.f32 %v4418, %v4419
          %v4421 = vadd.f32 %v4374, %v4375
          %v4422 = vrot.slane %v4421, 4
          %v4423 = vadd.f32 %v4421, %v4422
          %v4424 = vrot.slane %v4423, 2
          %v4425 = vadd.f32 %v4423, %v4424
          %v4426 = vrot.slane %v4425, 1
          %v4427 = vadd.f32 %v4425, %v4426
          %v4428 = vadd.f32 %v4376, %v4377
          %v4429 = vrot.slane %v4428, 4
          %v4430 = vadd.f32 %v4428, %v4429
          %v4431 = vrot.slane %v4430, 2
          %v4432 = vadd.f32 %v4430, %v4431
          %v4433 = vrot.slane %v4432, 1
          %v4434 = vadd.f32 %v4432, %v4433
          %v4435 = vadd.f32 %v4378, %v4379
          %v4436 = vrot.slane %v4435, 4
          %v4437 = vadd.f32 %v4435, %v4436
          %v4438 = vrot.slane %v4437, 2
          %v4439 = vadd.f32 %v4437, %v4438
          %v4440 = vrot.slane %v4439, 1
          %v4441 = vadd.f32 %v4439, %v4440
          %v4442 = vadd.f32 %v4380, %v4381
          %v4443 = vrot.slane %v4442, 4
          %v4444 = vadd.f32 %v4442, %v4443
          %v4445 = vrot.slane %v4444, 2
          %v4446 = vadd.f32 %v4444, %v4445
          %v4447 = vrot.slane %v4446, 1
          %v4448 = vadd.f32 %v4446, %v4447
          %v4449 = vadd.f32 %v4382, %v4383
          %v4450 = vrot.slane %v4449, 4
          %v4451 = vadd.f32 %v4449, %v4450
          %v4452 = vrot.slane %v4451, 2
          %v4453 = vadd.f32 %v4451, %v4452
          %v4454 = vrot.slane %v4453, 1
          %v4455 = vadd.f32 %v4453, %v4454
          %v4456 = vadd.f32 %v4384, %v4385
          %v4457 = vrot.slane %v4456, 4
          %v4458 = vadd.f32 %v4456, %v4457
          %v4459 = vrot.slane %v4458, 2
          %v4460 = vadd.f32 %v4458, %v4459
          %v4461 = vrot.slane %v4460, 1
          %v4462 = vadd.f32 %v4460, %v4461
          %v4463 = vadd.f32 %v4386, %v4387
          %v4464 = vrot.slane %v4463, 4
          %v4465 = vadd.f32 %v4463, %v4464
          %v4466 = vrot.slane %v4465, 2
          %v4467 = vadd.f32 %v4465, %v4466
          %v4468 = vrot.slane %v4467, 1
          %v4469 = vadd.f32 %v4467, %v4468
          %v4470 = vadd.f32 %v4388, %v4389
          %v4471 = vrot.slane %v4470, 4
          %v4472 = vadd.f32 %v4470, %v4471
          %v4473 = vrot.slane %v4472, 2
          %v4474 = vadd.f32 %v4472, %v4473
          %v4475 = vrot.slane %v4474, 1
          %v4476 = vadd.f32 %v4474, %v4475
          %v4477 = vadd.f32 %v4390, %v4391
          %v4478 = vrot.slane %v4477, 4
          %v4479 = vadd.f32 %v4477, %v4478
          %v4480 = vrot.slane %v4479, 2
          %v4481 = vadd.f32 %v4479, %v4480
          %v4482 = vrot.slane %v4481, 1
          %v4483 = vadd.f32 %v4481, %v4482
          %v4484 = vadd.f32 %v4392, %v4393
          %v4485 = vrot.slane %v4484, 4
          %v4486 = vadd.f32 %v4484, %v4485
          %v4487 = vrot.slane %v4486, 2
          %v4488 = vadd.f32 %v4486, %v4487
          %v4489 = vrot.slane %v4488, 1
          %v4490 = vadd.f32 %v4488, %v4489
          %v4491 = vadd.f32 %v4394, %v4395
          %v4492 = vrot.slane %v4491, 4
          %v4493 = vadd.f32 %v4491, %v4492
          %v4494 = vrot.slane %v4493, 2
          %v4495 = vadd.f32 %v4493, %v4494
          %v4496 = vrot.slane %v4495, 1
          %v4497 = vadd.f32 %v4495, %v4496
          %v4498 = vadd.f32 %v4396, %v4397
          %v4499 = vrot.slane %v4498, 4
          %v4500 = vadd.f32 %v4498, %v4499
          %v4501 = vrot.slane %v4500, 2
          %v4502 = vadd.f32 %v4500, %v4501
          %v4503 = vrot.slane %v4502, 1
          %v4504 = vadd.f32 %v4502, %v4503
          %v4505 = vadd.f32 %v4398, %v4399
          %v4506 = vrot.slane %v4505, 4
          %v4507 = vadd.f32 %v4505, %v4506
          %v4508 = vrot.slane %v4507, 2
          %v4509 = vadd.f32 %v4507, %v4508
          %v4510 = vrot.slane %v4509, 1
          %v4511 = vadd.f32 %v4509, %v4510
          %v4528 = vsel %vm3397, %v4413, %v4406
          %v4529 = vsel %vm3399, %v4420, %v4528
          %v4530 = vsel %vm3401, %v4427, %v4529
          %v4531 = vsel %vm3403, %v4434, %v4530
          %v4532 = vsel %vm3405, %v4441, %v4531
          %v4533 = vsel %vm3407, %v4448, %v4532
          %v4534 = vsel %vm3409, %v4455, %v4533
          %v4535 = vsel %vm3397, %v4469, %v4462
          %v4536 = vsel %vm3399, %v4476, %v4535
          %v4537 = vsel %vm3401, %v4483, %v4536
          %v4538 = vsel %vm3403, %v4490, %v4537
          %v4539 = vsel %vm3405, %v4497, %v4538
          %v4540 = vsel %vm3407, %v4504, %v4539
          %v4541 = vsel %vm3409, %v4511, %v4540
          %v4544 = vmul.f32 %v3229, %v4534
          %v4545 = vmul.f32 %v3230, %v4541
          %v4546 = vadd.f32 %v4362, %v4544
          %v4547 = vadd.f32 %v4363, %v4545
          %v4548 = vld [vmem:[%s3995 + $0x18] sm:$0xf]
          %v4549 = vld [vmem:[%s3995 + $0x1c] sm:$0xf]
          %v4550 = vunpack.c.l.bf16 %v4548
          %v4551 = vunpack.c.l.bf16 %v4549
          %v4552 = vmul.f32 %v3193, %v4550
          %v4553 = vmul.f32 %v3194, %v4551
          %v4554 = vmul.f32 %v3195, %v4550
          %v4555 = vmul.f32 %v3196, %v4551
          %v4556 = vmul.f32 %v3197, %v4550
          %v4557 = vmul.f32 %v3198, %v4551
          %v4558 = vmul.f32 %v3199, %v4550
          %v4559 = vmul.f32 %v3200, %v4551
          %v4560 = vmul.f32 %v3201, %v4550
          %v4561 = vmul.f32 %v3202, %v4551
          %v4562 = vmul.f32 %v3203, %v4550
          %v4563 = vmul.f32 %v3204, %v4551
          %v4564 = vmul.f32 %v3205, %v4550
          %v4565 = vmul.f32 %v3206, %v4551
          %v4566 = vmul.f32 %v3207, %v4550
          %v4567 = vmul.f32 %v3208, %v4551
          %v4568 = vmul.f32 %v3209, %v4550
          %v4569 = vmul.f32 %v3210, %v4551
          %v4570 = vmul.f32 %v3211, %v4550
          %v4571 = vmul.f32 %v3212, %v4551
          %v4572 = vmul.f32 %v3213, %v4550
          %v4573 = vmul.f32 %v3214, %v4551
          %v4574 = vmul.f32 %v3215, %v4550
          %v4575 = vmul.f32 %v3216, %v4551
          %v4576 = vmul.f32 %v3217, %v4550
          %v4577 = vmul.f32 %v3218, %v4551
          %v4578 = vmul.f32 %v3219, %v4550
          %v4579 = vmul.f32 %v3220, %v4551
          %v4580 = vmul.f32 %v3221, %v4550
          %v4581 = vmul.f32 %v3222, %v4551
          %v4582 = vmul.f32 %v3223, %v4550
          %v4583 = vmul.f32 %v3224, %v4551
          %v4584 = vadd.f32 %v4552, %v4553
          %v4585 = vrot.slane %v4584, 4
          %v4586 = vadd.f32 %v4584, %v4585
          %v4587 = vrot.slane %v4586, 2
          %v4588 = vadd.f32 %v4586, %v4587
          %v4589 = vrot.slane %v4588, 1
          %v4590 = vadd.f32 %v4588, %v4589
          %v4591 = vadd.f32 %v4554, %v4555
          %v4592 = vrot.slane %v4591, 4
          %v4593 = vadd.f32 %v4591, %v4592
          %v4594 = vrot.slane %v4593, 2
          %v4595 = vadd.f32 %v4593, %v4594
          %v4596 = vrot.slane %v4595, 1
          %v4597 = vadd.f32 %v4595, %v4596
          %v4598 = vadd.f32 %v4556, %v4557
          %v4599 = vrot.slane %v4598, 4
          %v4600 = vadd.f32 %v4598, %v4599
          %v4601 = vrot.slane %v4600, 2
          %v4602 = vadd.f32 %v4600, %v4601
          %v4603 = vrot.slane %v4602, 1
          %v4604 = vadd.f32 %v4602, %v4603
          %v4605 = vadd.f32 %v4558, %v4559
          %v4606 = vrot.slane %v4605, 4
          %v4607 = vadd.f32 %v4605, %v4606
          %v4608 = vrot.slane %v4607, 2
          %v4609 = vadd.f32 %v4607, %v4608
          %v4610 = vrot.slane %v4609, 1
          %v4611 = vadd.f32 %v4609, %v4610
          %v4612 = vadd.f32 %v4560, %v4561
          %v4613 = vrot.slane %v4612, 4
          %v4614 = vadd.f32 %v4612, %v4613
          %v4615 = vrot.slane %v4614, 2
          %v4616 = vadd.f32 %v4614, %v4615
          %v4617 = vrot.slane %v4616, 1
          %v4618 = vadd.f32 %v4616, %v4617
          %v4619 = vadd.f32 %v4562, %v4563
          %v4620 = vrot.slane %v4619, 4
          %v4621 = vadd.f32 %v4619, %v4620
          %v4622 = vrot.slane %v4621, 2
          %v4623 = vadd.f32 %v4621, %v4622
          %v4624 = vrot.slane %v4623, 1
          %v4625 = vadd.f32 %v4623, %v4624
          %v4626 = vadd.f32 %v4564, %v4565
          %v4627 = vrot.slane %v4626, 4
          %v4628 = vadd.f32 %v4626, %v4627
          %v4629 = vrot.slane %v4628, 2
          %v4630 = vadd.f32 %v4628, %v4629
          %v4631 = vrot.slane %v4630, 1
          %v4632 = vadd.f32 %v4630, %v4631
          %v4633 = vadd.f32 %v4566, %v4567
          %v4634 = vrot.slane %v4633, 4
          %v4635 = vadd.f32 %v4633, %v4634
          %v4636 = vrot.slane %v4635, 2
          %v4637 = vadd.f32 %v4635, %v4636
          %v4638 = vrot.slane %v4637, 1
          %v4639 = vadd.f32 %v4637, %v4638
          %v4640 = vadd.f32 %v4568, %v4569
          %v4641 = vrot.slane %v4640, 4
          %v4642 = vadd.f32 %v4640, %v4641
          %v4643 = vrot.slane %v4642, 2
          %v4644 = vadd.f32 %v4642, %v4643
          %v4645 = vrot.slane %v4644, 1
          %v4646 = vadd.f32 %v4644, %v4645
          %v4647 = vadd.f32 %v4570, %v4571
          %v4648 = vrot.slane %v4647, 4
          %v4649 = vadd.f32 %v4647, %v4648
          %v4650 = vrot.slane %v4649, 2
          %v4651 = vadd.f32 %v4649, %v4650
          %v4652 = vrot.slane %v4651, 1
          %v4653 = vadd.f32 %v4651, %v4652
          %v4654 = vadd.f32 %v4572, %v4573
          %v4655 = vrot.slane %v4654, 4
          %v4656 = vadd.f32 %v4654, %v4655
          %v4657 = vrot.slane %v4656, 2
          %v4658 = vadd.f32 %v4656, %v4657
          %v4659 = vrot.slane %v4658, 1
          %v4660 = vadd.f32 %v4658, %v4659
          %v4661 = vadd.f32 %v4574, %v4575
          %v4662 = vrot.slane %v4661, 4
          %v4663 = vadd.f32 %v4661, %v4662
          %v4664 = vrot.slane %v4663, 2
          %v4665 = vadd.f32 %v4663, %v4664
          %v4666 = vrot.slane %v4665, 1
          %v4667 = vadd.f32 %v4665, %v4666
          %v4668 = vadd.f32 %v4576, %v4577
          %v4669 = vrot.slane %v4668, 4
          %v4670 = vadd.f32 %v4668, %v4669
          %v4671 = vrot.slane %v4670, 2
          %v4672 = vadd.f32 %v4670, %v4671
          %v4673 = vrot.slane %v4672, 1
          %v4674 = vadd.f32 %v4672, %v4673
          %v4675 = vadd.f32 %v4578, %v4579
          %v4676 = vrot.slane %v4675, 4
          %v4677 = vadd.f32 %v4675, %v4676
          %v4678 = vrot.slane %v4677, 2
          %v4679 = vadd.f32 %v4677, %v4678
          %v4680 = vrot.slane %v4679, 1
          %v4681 = vadd.f32 %v4679, %v4680
          %v4682 = vadd.f32 %v4580, %v4581
          %v4683 = vrot.slane %v4682, 4
          %v4684 = vadd.f32 %v4682, %v4683
          %v4685 = vrot.slane %v4684, 2
          %v4686 = vadd.f32 %v4684, %v4685
          %v4687 = vrot.slane %v4686, 1
          %v4688 = vadd.f32 %v4686, %v4687
          %v4689 = vadd.f32 %v4582, %v4583
          %v4690 = vrot.slane %v4689, 4
          %v4691 = vadd.f32 %v4689, %v4690
          %v4692 = vrot.slane %v4691, 2
          %v4693 = vadd.f32 %v4691, %v4692
          %v4694 = vrot.slane %v4693, 1
          %v4695 = vadd.f32 %v4693, %v4694
          %v4712 = vsel %vm3397, %v4597, %v4590
          %v4713 = vsel %vm3399, %v4604, %v4712
          %v4714 = vsel %vm3401, %v4611, %v4713
          %v4715 = vsel %vm3403, %v4618, %v4714
          %v4716 = vsel %vm3405, %v4625, %v4715
          %v4717 = vsel %vm3407, %v4632, %v4716
          %v4718 = vsel %vm3409, %v4639, %v4717
          %v4719 = vsel %vm3397, %v4653, %v4646
          %v4720 = vsel %vm3399, %v4660, %v4719
          %v4721 = vsel %vm3401, %v4667, %v4720
          %v4722 = vsel %vm3403, %v4674, %v4721
          %v4723 = vsel %vm3405, %v4681, %v4722
          %v4724 = vsel %vm3407, %v4688, %v4723
          %v4725 = vsel %vm3409, %v4695, %v4724
          %v4728 = vmul.f32 %v3231, %v4718
          %v4729 = vmul.f32 %v3232, %v4725
          %v4730 = vadd.f32 %v4546, %v4728
          %v4731 = vadd.f32 %v4547, %v4729
          %v4732 = vpack.c.bf16 %v3975, %v3974
          %4733 = vst [vmem:[#allocation2] sm:$0xff] %v4732
          %v4734 = vpack.c.bf16 %v4731, %v4730
          %4735 = vst [vmem:[#allocation2 + $0x8] sm:$0xff] %v4734
        $region68: #{regression_differential_tree_forward.1} parent=39 // pred_fallthru
          _
        %s4736 = smul.u32 2, %s28
        %p4737 = scmp.lt.s32.totalorder %s27, 4
        %s4738 = scalar_select %p4737, %s27, 4
        %p4739 = scmp.lt.s32.totalorder %s4736, 1
        %s4740 = scalar_select %p4739, %s4736, 1
        %s4741 = smul.addr %s4738, 2
        %s4742 = sadd.s32 %s4740, %s4741
        %s4743 = smul.addr %s4742, 8
        %s4744 = scalar_lea.vmem %s5, %s4743
        // Predicated region
        $region69: #{regression_differential_tree_forward.1} parent=39 // pred_check
          %p4745 = pneg %p197
        $region70: #{regression_differential_tree_forward.1} parent=39 // pred_check_branch
          %4747 = sbr.rel (%p4745) target = $region72
        $region71: #{regression_differential_tree_forward.1} parent=39 // pred_region
          %s4748 = smul.u32 2, %s28
        $region72: #{regression_differential_tree_forward.1} parent=39 // pred_fallthru
          _
      $region40: #{regression_differential_tree_forward.1} parent=5 // pred_fallthru
        _
      %p4749 = scmp.le.s32.totalorder 2, %s17
      // Predicated region
      $region73: #{regression_differential_tree_forward.1} parent=5 // pred_check
        %p4750 = pneg %p4749
      $region74: #{regression_differential_tree_forward.1} parent=5 // pred_check_branch
        %4752 = sbr.rel (%p4750) target = $region76
      $region75: #{regression_differential_tree_forward.1} parent=5 // pred_region
        %s4753 = ssub.s32 %s17, 2
        // Predicated region
        $region77: #{regression_differential_tree_forward.1} parent=75 // pred_check
          %p4754 = pneg %p203
        $region78: #{regression_differential_tree_forward.1} parent=75 // pred_check_branch
          %4756 = sbr.rel (%p4754) target = $region80
        $region79: #{regression_differential_tree_forward.1} parent=75 // pred_region
          %s4757 = smul.u32 2, %s31
          %p4758 = scmp.lt.s32.totalorder %s30, 4
          %s4759 = scalar_select %p4758, %s30, 4
          %p4760 = scmp.lt.s32.totalorder %s4757, 1
          %s4761 = scalar_select %p4760, %s4757, 1
          %s4762 = smul.addr %s4759, 2
          %s4763 = sadd.s32 %s4761, %s4762
          %s4764 = smul.addr %s4763, 8
          %s4765 = scalar_lea.vmem %s5, %s4764
        $region80: #{regression_differential_tree_forward.1} parent=75 // pred_fallthru
          _
      $region76: #{regression_differential_tree_forward.1} parent=5 // pred_fallthru
        _
    $region6: #{regression_differential_tree_forward.1} parent=1 // loop_footer
      %s21 = sadd.s32 1, %s17
    $region7: #{regression_differential_tree_forward.1} parent=1 // loop_footer_branch
      %16 = sbr.rel target = $region3
    $region8: #{regression_differential_tree_forward.1} parent=1 // loop_exit
      _
    %4766 = vsyncpa [#allocation4], 1
    %s4767 = scalar_lea.sflag [#allocation4], 1
    %4768 = vsyncpa %s4767, 1
    %4769 = vsyncpa [#allocation6], 1
    %s4770 = scalar_lea.sflag [#allocation6], 1
    %4771 = vsyncpa %s4770, 1

</llo_original>
